<compile_context>
chip_gen: v7x
topology: tpu7x:2x2x1
jax: 0.10.0
libtpu: 0.0.40
codegen_flags: <defaults>
</compile_context>

<pallas_src>
import jax
import jax.numpy as jnp
from jax import lax
from jax.experimental import pallas as pl
from jax.experimental.pallas import tpu as pltpu


def _round_up(x, m):
    return (x + m - 1) // m * m


# --------------------------- parameter preparation ---------------------------
def _pad_gate_mat(w, h, hp, kp):
    """w: (3h, k) PyTorch layout [W_r; W_z; W_n] -> (kp, 3*hp) transposed,
    each gate block zero-padded to hp lanes, input dim padded to kp."""
    k = w.shape[1]
    wt = jnp.transpose(w)                                    # (k, 3h)
    blocks = []
    for g in range(3):
        blk = wt[:, g * h:(g + 1) * h]                       # (k, h)
        blk = jnp.pad(blk, ((0, kp - k), (0, hp - h)))       # (kp, hp)
        blocks.append(blk)
    return jnp.concatenate(blocks, axis=1)                   # (kp, 3*hp)


def _pad_gate_vec(b, h, hp):
    """b: (3h,) -> (3*hp,), each gate segment zero-padded to hp."""
    return jnp.concatenate(
        [jnp.pad(b[g * h:(g + 1) * h], (0, hp - h)) for g in range(3)])


# ------------------------------ sizing helpers --------------------------------
def _physical_vmem_bytes():
    try:
        info = pltpu.get_tpu_info()
        for attr in ("vmem_capacity_bytes", "vmem_size_bytes", "vmem_bytes"):
            v = getattr(info, attr, None)
            if v is not None:
                v = int(v)
                if v > 0:
                    return v
    except Exception:
        pass
    return 64 * 1024 * 1024          # conservative (v7x); v5e/v6e have 128 MiB


def _proj_chunk(S, Bt):
    """Time-chunk for the hoisted input projection (~2048 MXU rows per call)."""
    return min(S, max(1, 2048 // Bt))


def _vmem_estimate(S, Bt, Dp, Hp, Op, L, TC):
    """Rough per-grid-step VMEM footprint (inputs/outputs double-buffered)."""
    G3 = 3 * Hp
    bf, f4 = 2, 4
    weights = (Dp * G3 * bf + (L - 1) * Hp * G3 * bf + L * Hp * G3 * bf
               + L * G3 * f4 + L * Hp * f4 + Hp * Op * bf + Op * f4)
    io = S * Bt * Dp * bf + Bt * Op * f4 + L * Bt * Hp * f4
    scratch = S * Bt * G3 * bf + (S * Bt * Hp * bf if L > 1 else 0)
    temps = TC * Bt * G3 * f4 + 8 * Bt * G3 * f4       # proj f32 temp + step regs
    return 2 * (weights + io) + scratch + temps


# ------------------------------- fused kernel --------------------------------
def _make_fused_gru_kernel(S, Bt, Dp, Hp, L, TC):
    G3 = 3 * Hp
    time_unroll = True if S <= 16 else 8
    f32 = jnp.float32
    bf16 = jnp.bfloat16

    def kernel(*refs):
        if L > 1:
            (x_ref, wih0_ref, wihr_ref, whh_ref, bih_ref, bhhn_ref,
             wfc_ref, bfc_ref, out_ref, hn_ref, gi_scr, seq_scr) = refs
        else:
            (x_ref, wih0_ref, whh_ref, bih_ref, bhhn_ref,
             wfc_ref, bfc_ref, out_ref, hn_ref, gi_scr) = refs
            wihr_ref = None
            seq_scr = None

        # ---- hoisted per-layer input projection, time-chunked; gi stored bf16 ----
        def project(load_rows, w, b):
            for c0 in range(0, S, TC):
                tc = min(TC, S - c0)
                rows = load_rows(c0, tc)                              # (tc*Bt, K) bf16
                g = jnp.dot(rows, w, preferred_element_type=f32) + b  # f32 acc
                gi_scr[pl.ds(c0, tc)] = g.astype(gi_scr.dtype).reshape(tc, Bt, G3)

        project(lambda c0, tc: x_ref[pl.ds(c0, tc)].reshape(tc * Bt, Dp),
                wih0_ref[...], bih_ref[0])

        h_last_mm = jnp.zeros((Bt, Hp), bf16)
        for l in range(L):                                            # static unroll
            # hoist the b_hn broadcast out of the time loop (no CSE in-loop)
            bhh_n = jnp.broadcast_to(bhhn_ref[l], (Bt, Hp))           # f32

            def step(t, carry, _l=l, _bhh_n=bhh_n):
                h, h_mm = carry                                       # f32 / bf16 copy
                gi = gi_scr[t].astype(f32)                            # (Bt, 3Hp)
                gh = jnp.dot(h_mm, whh_ref[_l],
                             preferred_element_type=f32)              # (Bt, 3Hp)
                # gate slices are 128-lane aligned -> free vreg views
                i_r, i_z, i_n = gi[:, :Hp], gi[:, Hp:2 * Hp], gi[:, 2 * Hp:]
                h_r, h_z, h_n = gh[:, :Hp], gh[:, Hp:2 * Hp], gh[:, 2 * Hp:]
                r = jax.nn.sigmoid(i_r + h_r)
                z = jax.nn.sigmoid(i_z + h_z)
                n = jnp.tanh(i_n + r * (h_n + _bhh_n))
                h_new = n + z * (h - n)                               # (1-z)*n + z*h
                h_new_mm = h_new.astype(bf16)                         # single cast/step
                if _l < L - 1:
                    seq_scr[t] = h_new_mm
                return (h_new, h_new_mm)

            h_last, h_last_mm = lax.fori_loop(
                0, S, step,
                (jnp.zeros((Bt, Hp), f32), jnp.zeros((Bt, Hp), bf16)),
                unroll=time_unroll)
            hn_ref[l] = h_last.astype(hn_ref.dtype)

            if l < L - 1:
                # next layer's input projection over the just-written sequence
                project(lambda c0, tc: seq_scr[pl.ds(c0, tc)].reshape(tc * Bt, Hp),
                        wihr_ref[l], bih_ref[l + 1])

        # ---- fused final Linear on h_T of the last layer (== out[:, -1, :]) ----
        out_ref[...] = (jnp.dot(h_last_mm, wfc_ref[...],
                                preferred_element_type=f32)
                        + bfc_ref[...]).astype(out_ref.dtype)

    return kernel


# ------------------------------- public forward ------------------------------
def gru_forward(params, x, *, block_b=None):
    """x: (B, S, input_size), batch_first like the PyTorch module.
    Returns (out, hn): out (B, output_size), hn (num_layers, B, hidden)."""
    B, S, Din = x.shape
    L = len(params["gru"])
    H = params["gru"][0]["w_hh"].shape[1]
    O = params["fc"]["w"].shape[0]

    Dp = _round_up(Din, 128)
    Hp = _round_up(H, 128)
    Op = _round_up(O, 128)
    G3 = 3 * Hp

    vmem_cap = _physical_vmem_bytes()
    budget = int(vmem_cap * 0.70)

    # ---- batch tile: whole padded batch if it fits, capped at MXU M (256) ----
    if block_b is None:
        Bt = min(_round_up(B, 8), 256)
        while Bt > 8 and _vmem_estimate(S, Bt, Dp, Hp, Op, L,
                                        _proj_chunk(S, Bt)) > budget:
            Bt = max(8, _round_up(Bt // 2, 8))
    else:
        Bt = _round_up(block_b, 8)
    nb = pl.cdiv(B, Bt)
    Bp = nb * Bt
    TC = _proj_chunk(S, Bt)

    est = _vmem_estimate(S, Bt, Dp, Hp, Op, L, TC)
    vmem_limit = int(min(vmem_cap * 0.90, max(2 * est, 48 * 1024 * 1024)))

    f32 = jnp.float32
    mm_dtype = jnp.bfloat16      # MXU operand dtype; accumulation stays f32

    # ---- weights: transpose, gate-pad to 128 lanes, cast to bf16 ----
    wih0 = _pad_gate_mat(params["gru"][0]["w_ih"], H, Hp, Dp).astype(mm_dtype)
    if L > 1:
        wihr = jnp.stack([_pad_gate_mat(params["gru"][l]["w_ih"], H, Hp, Hp)
                          for l in range(1, L)]).astype(mm_dtype)
    else:
        wihr = None
    whh = jnp.stack([_pad_gate_mat(params["gru"][l]["w_hh"], H, Hp, Hp)
                     for l in range(L)]).astype(mm_dtype)

    # ---- biases: fold b_hr/b_hz into the input bias; keep b_hn separate ----
    bih_list, bhhn_list = [], []
    for l in range(L):
        b_ih = params["gru"][l]["b_ih"].astype(f32)
        b_hh = params["gru"][l]["b_hh"].astype(f32)
        b_eff = jnp.concatenate([b_ih[:H] + b_hh[:H],
                                 b_ih[H:2 * H] + b_hh[H:2 * H],
                                 b_ih[2 * H:]])
        bih_list.append(_pad_gate_vec(b_eff, H, Hp))
        bhhn_list.append(jnp.pad(b_hh[2 * H:], (0, Hp - H)))
    bih = jnp.stack(bih_list).reshape(L, 1, G3)
    bhhn = jnp.stack(bhhn_list).reshape(L, 1, Hp)

    wfc = jnp.pad(jnp.transpose(params["fc"]["w"]),
                  ((0, Hp - H), (0, Op - O))).astype(mm_dtype)
    bfc = jnp.pad(params["fc"]["b"].astype(f32), (0, Op - O)).reshape(1, Op)

    # ---- input: batch_first -> time-major, pad batch/feature, bf16 ----
    x_tm = jnp.transpose(x, (1, 0, 2))
    x_tm = jnp.pad(x_tm, ((0, 0), (0, Bp - B), (0, Dp - Din))).astype(mm_dtype)

    kernel = _make_fused_gru_kernel(S, Bt, Dp, Hp, L, TC)

    # ---- specs / operands (wihr + seq scratch only when L > 1) ----
    in_specs = [pl.BlockSpec((S, Bt, Dp), lambda i: (0, i, 0)),   # x (time-major)
                pl.BlockSpec((Dp, G3), lambda i: (0, 0))]         # W_ih^T layer 0
    operands = [x_tm, wih0]
    if L > 1:
        in_specs.append(pl.BlockSpec((L - 1, Hp, G3), lambda i: (0, 0, 0)))
        operands.append(wihr)
    in_specs += [pl.BlockSpec((L, Hp, G3), lambda i: (0, 0, 0)),  # W_hh^T all layers
                 pl.BlockSpec((L, 1, G3), lambda i: (0, 0, 0)),   # fused input bias
                 pl.BlockSpec((L, 1, Hp), lambda i: (0, 0, 0)),   # b_hn
                 pl.BlockSpec((Hp, Op), lambda i: (0, 0)),        # W_fc^T
                 pl.BlockSpec((1, Op), lambda i: (0, 0))]         # b_fc
    operands += [whh, bih, bhhn, wfc, bfc]

    scratch = [pltpu.VMEM((S, Bt, G3), mm_dtype)]                 # gi (bf16)
    if L > 1:
        scratch.append(pltpu.VMEM((S, Bt, Hp), mm_dtype))         # layer output seq

    # ---- advisory cost estimate so XLA schedules around a long kernel ----
    flops = (2 * S * B * Din * 3 * H
             + 2 * (L - 1) * S * B * H * 3 * H
             + 2 * L * S * B * H * 3 * H
             + 2 * B * H * O
             + 12 * L * S * B * H)
    transc = 3 * L * S * B * H
    bytes_acc = (x_tm.size * 2 + wih0.size * 2 + whh.size * 2
                 + (wihr.size * 2 if L > 1 else 0)
                 + bih.size * 4 + bhhn.size * 4 + wfc.size * 2 + bfc.size * 4
                 + Bp * Op * 4 + L * Bp * Hp * 4)
    cost = pl.CostEstimate(flops=int(flops), transcendentals=int(transc),
                           bytes_accessed=int(bytes_acc))

    out_p, hn_p = pl.pallas_call(
        kernel,
        out_shape=(jax.ShapeDtypeStruct((Bp, Op), f32),
                   jax.ShapeDtypeStruct((L, Bp, Hp), f32)),
        grid_spec=pltpu.PrefetchScalarGridSpec(
            num_scalar_prefetch=0,
            grid=(nb,),                                           # batch tiles
            in_specs=in_specs,
            out_specs=[pl.BlockSpec((Bt, Op), lambda i: (i, 0)),  # fc(out[:, -1, :])
                       pl.BlockSpec((L, Bt, Hp), lambda i: (0, i, 0))],  # hn
            scratch_shapes=scratch),
        compiler_params=pltpu.CompilerParams(
            dimension_semantics=("parallel",),   # batch tiles shard across TCs (v7x)
            vmem_limit_bytes=vmem_limit),
        cost_estimate=cost,
    )(*operands)

    return out_p[:B, :O], hn_p[:, :B, :H]


# ----------------------------- parameter init --------------------------------
def init_params(key, input_size, hidden_size, num_layers, output_size):
    """Matches PyTorch's default U(-1/sqrt(H), 1/sqrt(H)) init."""
    bound = hidden_size ** -0.5
    layers = []
    for layer in range(num_layers):
        d_in = input_size if layer == 0 else hidden_size
        key, k1, k2, k3, k4 = jax.random.split(key, 5)
        layers.append(dict(
            w_ih=jax.random.uniform(k1, (3 * hidden_size, d_in),
                                    jnp.float32, -bound, bound),
            w_hh=jax.random.uniform(k2, (3 * hidden_size, hidden_size),
                                    jnp.float32, -bound, bound),
            b_ih=jax.random.uniform(k3, (3 * hidden_size,),
                                    jnp.float32, -bound, bound),
            b_hh=jax.random.uniform(k4, (3 * hidden_size,),
                                    jnp.float32, -bound, bound),
        ))
    key, k1, k2 = jax.random.split(key, 3)
    fc = dict(
        w=jax.random.uniform(k1, (output_size, hidden_size),
                             jnp.float32, -bound, bound),
        b=jax.random.uniform(k2, (output_size,), jnp.float32, -bound, bound),
    )
    return dict(gru=layers, fc=fc)


if __name__ == "__main__":
    INPUT_SIZE, HIDDEN_SIZE, NUM_LAYERS, OUTPUT_SIZE = 16, 32, 2, 8
    BATCH, SEQ = 2, 8

    key = jax.random.PRNGKey(0)
    kx, kp = jax.random.split(key)
    x = jax.random.normal(kx, (BATCH, SEQ, INPUT_SIZE), jnp.float32)
    params = init_params(kp, INPUT_SIZE, HIDDEN_SIZE, NUM_LAYERS, OUTPUT_SIZE)

    fwd = jax.jit(gru_forward)
    out, hn = fwd(params, x)
    jax.block_until_ready((out, hn))
    assert out.shape == (BATCH, OUTPUT_SIZE)
    assert hn.shape == (NUM_LAYERS, BATCH, HIDDEN_SIZE)
    print("KERNEL_OK")
</pallas_src>

<mosaic_0001>
module attributes {stable_mosaic.version = 11 : i64} {
  func.func @kernel(%arg0: i32, %arg1: memref<8x8x128xbf16, #tpu.memory_space<vmem>>, %arg2: memref<128x384xbf16, #tpu.memory_space<vmem>>, %arg3: memref<1x128x384xbf16, #tpu.memory_space<vmem>>, %arg4: memref<2x128x384xbf16, #tpu.memory_space<vmem>>, %arg5: memref<2x1x384xf32, #tpu.memory_space<vmem>>, %arg6: memref<2x1x128xf32, #tpu.memory_space<vmem>>, %arg7: memref<128x128xbf16, #tpu.memory_space<vmem>>, %arg8: memref<1x128xf32, #tpu.memory_space<vmem>>, %arg9: memref<8x128xf32, #tpu.memory_space<vmem>>, %arg10: memref<2x8x128xf32, #tpu.memory_space<vmem>>, %arg11: memref<8x8x384xbf16, #tpu.memory_space<vmem>>, %arg12: memref<8x8x128xbf16, #tpu.memory_space<vmem>>) attributes {dimension_semantics = [#tpu.dimension_semantics<parallel>], iteration_bounds = array<i64: 1>, scalar_prefetch = 0 : i64, scratch_operands = 2 : i64, tpu.core_type = #tpu.core_type<tc>, window_params = [{transform_indices = @transform_0, window_bounds = array<i64: 8, 8, 128>}, {pipeline_mode = #tpu.pipeline_mode<synchronous>, transform_indices = @transform_1, window_bounds = array<i64: 128, 384>}, {pipeline_mode = #tpu.pipeline_mode<synchronous>, transform_indices = @transform_2, window_bounds = array<i64: 1, 128, 384>}, {pipeline_mode = #tpu.pipeline_mode<synchronous>, transform_indices = @transform_3, window_bounds = array<i64: 2, 128, 384>}, {pipeline_mode = #tpu.pipeline_mode<synchronous>, transform_indices = @transform_4, window_bounds = array<i64: 2, 1, 384>}, {pipeline_mode = #tpu.pipeline_mode<synchronous>, transform_indices = @transform_5, window_bounds = array<i64: 2, 1, 128>}, {pipeline_mode = #tpu.pipeline_mode<synchronous>, transform_indices = @transform_6, window_bounds = array<i64: 128, 128>}, {pipeline_mode = #tpu.pipeline_mode<synchronous>, transform_indices = @transform_7, window_bounds = array<i64: 1, 128>}, {transform_indices = @transform_8, window_bounds = array<i64: 8, 128>}, {transform_indices = @transform_9, window_bounds = array<i64: 2, 8, 128>}]} {
    %c0 = arith.constant 0 : index
    %c0_0 = arith.constant 0 : index
    %0 = vector.load %arg2[%c0, %c0_0] : memref<128x384xbf16, #tpu.memory_space<vmem>>, vector<128x384xbf16>
    %c0_1 = arith.constant 0 : index
    %c0_2 = arith.constant 0 : index
    %c0_3 = arith.constant 0 : index
    %1 = vector.load %arg5[%c0_1, %c0_2, %c0_3] : memref<2x1x384xf32, #tpu.memory_space<vmem>>, vector<1x1x384xf32>
    %2 = vector.shape_cast %1 : vector<1x1x384xf32> to vector<1x384xf32>
    %c0_4 = arith.constant 0 : index
    %c0_5 = arith.constant 0 : index
    %c0_6 = arith.constant 0 : index
    %3 = vector.load %arg1[%c0_4, %c0_5, %c0_6] : memref<8x8x128xbf16, #tpu.memory_space<vmem>>, vector<8x8x128xbf16>
    %4 = vector.shape_cast %3 : vector<8x8x128xbf16> to vector<64x128xbf16>
    %cst = arith.constant dense<0.000000e+00> : vector<64x384xf32>
    %5 = tpu.matmul %4, %0, %cst {dimension_numbers = #tpu.dot_dimension_numbers<[1], [0], [0], [1], [0, 0, 1, 1], [], []>} : vector<64x128xbf16>, vector<128x384xbf16>, vector<64x384xf32> -> vector<64x384xf32>
    %6 = vector.broadcast %2 : vector<1x384xf32> to vector<64x384xf32>
    %7 = arith.addf %5, %6 : vector<64x384xf32>
    %8 = arith.truncf %7 : vector<64x384xf32> to vector<64x384xbf16>
    %9 = vector.shape_cast %8 : vector<64x384xbf16> to vector<8x8x384xbf16>
    %c0_7 = arith.constant 0 : index
    %c0_8 = arith.constant 0 : index
    %c0_9 = arith.constant 0 : index
    %10 = vector.load %arg11[%c0_7, %c0_8, %c0_9] : memref<8x8x384xbf16, #tpu.memory_space<vmem>>, vector<8x8x384xbf16>
    tpu.vector_store %arg11[%c0_7, %c0_8, %c0_9], %9 {strides = array<i32>} : memref<8x8x384xbf16, #tpu.memory_space<vmem>>, vector<8x8x384xbf16>,
    %c0_10 = arith.constant 0 : index
    %c0_11 = arith.constant 0 : index
    %c0_12 = arith.constant 0 : index
    %11 = vector.load %arg6[%c0_10, %c0_11, %c0_12] : memref<2x1x128xf32, #tpu.memory_space<vmem>>, vector<1x1x128xf32>
    %12 = vector.shape_cast %11 : vector<1x1x128xf32> to vector<1x128xf32>
    %13 = vector.shape_cast %12 : vector<1x128xf32> to vector<1x128xf32>
    %14 = vector.broadcast %13 : vector<1x128xf32> to vector<8x128xf32>
    %cst_13 = arith.constant 0.000000e+00 : f32
    %15 = vector.broadcast %cst_13 : f32 to vector<8x128xf32>
    %cst_14 = arith.constant 0.000000e+00 : bf16
    %16 = vector.broadcast %cst_14 : bf16 to vector<8x128xbf16>
    %c0_i32 = arith.constant 0 : i32
    %17 = arith.index_cast %c0_i32 : i32 to index
    %c0_15 = arith.constant 0 : index
    %c0_16 = arith.constant 0 : index
    %18 = vector.load %arg11[%17, %c0_15, %c0_16] : memref<8x8x384xbf16, #tpu.memory_space<vmem>>, vector<1x8x384xbf16>
    %19 = vector.shape_cast %18 : vector<1x8x384xbf16> to vector<8x384xbf16>
    %20 = arith.extf %19 : vector<8x384xbf16> to vector<8x384xf32>
    %c0_17 = arith.constant 0 : index
    %c0_18 = arith.constant 0 : index
    %c0_19 = arith.constant 0 : index
    %21 = vector.load %arg4[%c0_17, %c0_18, %c0_19] : memref<2x128x384xbf16, #tpu.memory_space<vmem>>, vector<1x128x384xbf16>
    %22 = vector.shape_cast %21 : vector<1x128x384xbf16> to vector<128x384xbf16>
    %cst_20 = arith.constant dense<0.000000e+00> : vector<8x384xf32>
    %23 = tpu.matmul %16, %22, %cst_20 {dimension_numbers = #tpu.dot_dimension_numbers<[1], [0], [0], [1], [0, 0, 1, 1], [], []>} : vector<8x128xbf16>, vector<128x384xbf16>, vector<8x384xf32> -> vector<8x384xf32>
    %24 = vector.extract_strided_slice %20 {offsets = [0, 0], sizes = [8, 128], strides = [1, 1]} : vector<8x384xf32> to vector<8x128xf32>
    %25 = vector.extract_strided_slice %20 {offsets = [0, 128], sizes = [8, 128], strides = [1, 1]} : vector<8x384xf32> to vector<8x128xf32>
    %26 = vector.extract_strided_slice %20 {offsets = [0, 256], sizes = [8, 128], strides = [1, 1]} : vector<8x384xf32> to vector<8x128xf32>
    %27 = vector.extract_strided_slice %23 {offsets = [0, 0], sizes = [8, 128], strides = [1, 1]} : vector<8x384xf32> to vector<8x128xf32>
    %28 = vector.extract_strided_slice %23 {offsets = [0, 128], sizes = [8, 128], strides = [1, 1]} : vector<8x384xf32> to vector<8x128xf32>
    %29 = vector.extract_strided_slice %23 {offsets = [0, 256], sizes = [8, 128], strides = [1, 1]} : vector<8x384xf32> to vector<8x128xf32>
    %30 = arith.addf %24, %27 : vector<8x128xf32>
    %31 = arith.negf %30 : vector<8x128xf32>
    %32 = math.exp %31 : vector<8x128xf32>
    %cst_21 = arith.constant 1.000000e+00 : f32
    %33 = vector.broadcast %cst_21 : f32 to vector<8x128xf32>
    %34 = arith.addf %33, %32 : vector<8x128xf32>
    %35 = arith.divf %33, %34 : vector<8x128xf32>
    %36 = arith.addf %25, %28 : vector<8x128xf32>
    %37 = arith.negf %36 : vector<8x128xf32>
    %38 = math.exp %37 : vector<8x128xf32>
    %cst_22 = arith.constant 1.000000e+00 : f32
    %39 = vector.broadcast %cst_22 : f32 to vector<8x128xf32>
    %40 = arith.addf %39, %38 : vector<8x128xf32>
    %41 = arith.divf %39, %40 : vector<8x128xf32>
    %42 = arith.addf %29, %14 : vector<8x128xf32>
    %43 = arith.mulf %35, %42 : vector<8x128xf32>
    %44 = arith.addf %26, %43 : vector<8x128xf32>
    %45 = math.tanh %44 : vector<8x128xf32>
    %46 = arith.subf %15, %45 : vector<8x128xf32>
    %47 = arith.mulf %41, %46 : vector<8x128xf32>
    %48 = arith.addf %45, %47 : vector<8x128xf32>
    %49 = arith.truncf %48 : vector<8x128xf32> to vector<8x128xbf16>
    %50 = arith.index_cast %c0_i32 : i32 to index
    %c0_23 = arith.constant 0 : index
    %c0_24 = arith.constant 0 : index
    %51 = vector.load %arg12[%50, %c0_23, %c0_24] : memref<8x8x128xbf16, #tpu.memory_space<vmem>>, vector<1x8x128xbf16>
    %52 = vector.shape_cast %51 : vector<1x8x128xbf16> to vector<8x128xbf16>
    %53 = vector.shape_cast %49 : vector<8x128xbf16> to vector<1x8x128xbf16>
    tpu.vector_store %arg12[%50, %c0_23, %c0_24], %53 {strides = array<i32>} : memref<8x8x128xbf16, #tpu.memory_space<vmem>>, vector<1x8x128xbf16>,
    %c1_i32 = arith.constant 1 : i32
    %54 = arith.index_cast %c1_i32 : i32 to index
    %c0_25 = arith.constant 0 : index
    %c0_26 = arith.constant 0 : index
    %55 = vector.load %arg11[%54, %c0_25, %c0_26] : memref<8x8x384xbf16, #tpu.memory_space<vmem>>, vector<1x8x384xbf16>
    %56 = vector.shape_cast %55 : vector<1x8x384xbf16> to vector<8x384xbf16>
    %57 = arith.extf %56 : vector<8x384xbf16> to vector<8x384xf32>
    %c0_27 = arith.constant 0 : index
    %c0_28 = arith.constant 0 : index
    %c0_29 = arith.constant 0 : index
    %58 = vector.load %arg4[%c0_27, %c0_28, %c0_29] : memref<2x128x384xbf16, #tpu.memory_space<vmem>>, vector<1x128x384xbf16>
    %59 = vector.shape_cast %58 : vector<1x128x384xbf16> to vector<128x384xbf16>
    %cst_30 = arith.constant dense<0.000000e+00> : vector<8x384xf32>
    %60 = tpu.matmul %49, %59, %cst_30 {dimension_numbers = #tpu.dot_dimension_numbers<[1], [0], [0], [1], [0, 0, 1, 1], [], []>} : vector<8x128xbf16>, vector<128x384xbf16>, vector<8x384xf32> -> vector<8x384xf32>
    %61 = vector.extract_strided_slice %57 {offsets = [0, 0], sizes = [8, 128], strides = [1, 1]} : vector<8x384xf32> to vector<8x128xf32>
    %62 = vector.extract_strided_slice %57 {offsets = [0, 128], sizes = [8, 128], strides = [1, 1]} : vector<8x384xf32> to vector<8x128xf32>
    %63 = vector.extract_strided_slice %57 {offsets = [0, 256], sizes = [8, 128], strides = [1, 1]} : vector<8x384xf32> to vector<8x128xf32>
    %64 = vector.extract_strided_slice %60 {offsets = [0, 0], sizes = [8, 128], strides = [1, 1]} : vector<8x384xf32> to vector<8x128xf32>
    %65 = vector.extract_strided_slice %60 {offsets = [0, 128], sizes = [8, 128], strides = [1, 1]} : vector<8x384xf32> to vector<8x128xf32>
    %66 = vector.extract_strided_slice %60 {offsets = [0, 256], sizes = [8, 128], strides = [1, 1]} : vector<8x384xf32> to vector<8x128xf32>
    %67 = arith.addf %61, %64 : vector<8x128xf32>
    %68 = arith.negf %67 : vector<8x128xf32>
    %69 = math.exp %68 : vector<8x128xf32>
    %cst_31 = arith.constant 1.000000e+00 : f32
    %70 = vector.broadcast %cst_31 : f32 to vector<8x128xf32>
    %71 = arith.addf %70, %69 : vector<8x128xf32>
    %72 = arith.divf %70, %71 : vector<8x128xf32>
    %73 = arith.addf %62, %65 : vector<8x128xf32>
    %74 = arith.negf %73 : vector<8x128xf32>
    %75 = math.exp %74 : vector<8x128xf32>
    %cst_32 = arith.constant 1.000000e+00 : f32
    %76 = vector.broadcast %cst_32 : f32 to vector<8x128xf32>
    %77 = arith.addf %76, %75 : vector<8x128xf32>
    %78 = arith.divf %76, %77 : vector<8x128xf32>
    %79 = arith.addf %66, %14 : vector<8x128xf32>
    %80 = arith.mulf %72, %79 : vector<8x128xf32>
    %81 = arith.addf %63, %80 : vector<8x128xf32>
    %82 = math.tanh %81 : vector<8x128xf32>
    %83 = arith.subf %48, %82 : vector<8x128xf32>
    %84 = arith.mulf %78, %83 : vector<8x128xf32>
    %85 = arith.addf %82, %84 : vector<8x128xf32>
    %86 = arith.truncf %85 : vector<8x128xf32> to vector<8x128xbf16>
    %87 = arith.index_cast %c1_i32 : i32 to index
    %c0_33 = arith.constant 0 : index
    %c0_34 = arith.constant 0 : index
    %88 = vector.load %arg12[%87, %c0_33, %c0_34] : memref<8x8x128xbf16, #tpu.memory_space<vmem>>, vector<1x8x128xbf16>
    %89 = vector.shape_cast %88 : vector<1x8x128xbf16> to vector<8x128xbf16>
    %90 = vector.shape_cast %86 : vector<8x128xbf16> to vector<1x8x128xbf16>
    tpu.vector_store %arg12[%87, %c0_33, %c0_34], %90 {strides = array<i32>} : memref<8x8x128xbf16, #tpu.memory_space<vmem>>, vector<1x8x128xbf16>,
    %c2_i32 = arith.constant 2 : i32
    %91 = arith.index_cast %c2_i32 : i32 to index
    %c0_35 = arith.constant 0 : index
    %c0_36 = arith.constant 0 : index
    %92 = vector.load %arg11[%91, %c0_35, %c0_36] : memref<8x8x384xbf16, #tpu.memory_space<vmem>>, vector<1x8x384xbf16>
    %93 = vector.shape_cast %92 : vector<1x8x384xbf16> to vector<8x384xbf16>
    %94 = arith.extf %93 : vector<8x384xbf16> to vector<8x384xf32>
    %c0_37 = arith.constant 0 : index
    %c0_38 = arith.constant 0 : index
    %c0_39 = arith.constant 0 : index
    %95 = vector.load %arg4[%c0_37, %c0_38, %c0_39] : memref<2x128x384xbf16, #tpu.memory_space<vmem>>, vector<1x128x384xbf16>
    %96 = vector.shape_cast %95 : vector<1x128x384xbf16> to vector<128x384xbf16>
    %cst_40 = arith.constant dense<0.000000e+00> : vector<8x384xf32>
    %97 = tpu.matmul %86, %96, %cst_40 {dimension_numbers = #tpu.dot_dimension_numbers<[1], [0], [0], [1], [0, 0, 1, 1], [], []>} : vector<8x128xbf16>, vector<128x384xbf16>, vector<8x384xf32> -> vector<8x384xf32>
    %98 = vector.extract_strided_slice %94 {offsets = [0, 0], sizes = [8, 128], strides = [1, 1]} : vector<8x384xf32> to vector<8x128xf32>
    %99 = vector.extract_strided_slice %94 {offsets = [0, 128], sizes = [8, 128], strides = [1, 1]} : vector<8x384xf32> to vector<8x128xf32>
    %100 = vector.extract_strided_slice %94 {offsets = [0, 256], sizes = [8, 128], strides = [1, 1]} : vector<8x384xf32> to vector<8x128xf32>
    %101 = vector.extract_strided_slice %97 {offsets = [0, 0], sizes = [8, 128], strides = [1, 1]} : vector<8x384xf32> to vector<8x128xf32>
    %102 = vector.extract_strided_slice %97 {offsets = [0, 128], sizes = [8, 128], strides = [1, 1]} : vector<8x384xf32> to vector<8x128xf32>
    %103 = vector.extract_strided_slice %97 {offsets = [0, 256], sizes = [8, 128], strides = [1, 1]} : vector<8x384xf32> to vector<8x128xf32>
    %104 = arith.addf %98, %101 : vector<8x128xf32>
    %105 = arith.negf %104 : vector<8x128xf32>
    %106 = math.exp %105 : vector<8x128xf32>
    %cst_41 = arith.constant 1.000000e+00 : f32
    %107 = vector.broadcast %cst_41 : f32 to vector<8x128xf32>
    %108 = arith.addf %107, %106 : vector<8x128xf32>
    %109 = arith.divf %107, %108 : vector<8x128xf32>
    %110 = arith.addf %99, %102 : vector<8x128xf32>
    %111 = arith.negf %110 : vector<8x128xf32>
    %112 = math.exp %111 : vector<8x128xf32>
    %cst_42 = arith.constant 1.000000e+00 : f32
    %113 = vector.broadcast %cst_42 : f32 to vector<8x128xf32>
    %114 = arith.addf %113, %112 : vector<8x128xf32>
    %115 = arith.divf %113, %114 : vector<8x128xf32>
    %116 = arith.addf %103, %14 : vector<8x128xf32>
    %117 = arith.mulf %109, %116 : vector<8x128xf32>
    %118 = arith.addf %100, %117 : vector<8x128xf32>
    %119 = math.tanh %118 : vector<8x128xf32>
    %120 = arith.subf %85, %119 : vector<8x128xf32>
    %121 = arith.mulf %115, %120 : vector<8x128xf32>
    %122 = arith.addf %119, %121 : vector<8x128xf32>
    %123 = arith.truncf %122 : vector<8x128xf32> to vector<8x128xbf16>
    %124 = arith.index_cast %c2_i32 : i32 to index
    %c0_43 = arith.constant 0 : index
    %c0_44 = arith.constant 0 : index
    %125 = vector.load %arg12[%124, %c0_43, %c0_44] : memref<8x8x128xbf16, #tpu.memory_space<vmem>>, vector<1x8x128xbf16>
    %126 = vector.shape_cast %125 : vector<1x8x128xbf16> to vector<8x128xbf16>
    %127 = vector.shape_cast %123 : vector<8x128xbf16> to vector<1x8x128xbf16>
    tpu.vector_store %arg12[%124, %c0_43, %c0_44], %127 {strides = array<i32>} : memref<8x8x128xbf16, #tpu.memory_space<vmem>>, vector<1x8x128xbf16>,
    %c3_i32 = arith.constant 3 : i32
    %128 = arith.index_cast %c3_i32 : i32 to index
    %c0_45 = arith.constant 0 : index
    %c0_46 = arith.constant 0 : index
    %129 = vector.load %arg11[%128, %c0_45, %c0_46] : memref<8x8x384xbf16, #tpu.memory_space<vmem>>, vector<1x8x384xbf16>
    %130 = vector.shape_cast %129 : vector<1x8x384xbf16> to vector<8x384xbf16>
    %131 = arith.extf %130 : vector<8x384xbf16> to vector<8x384xf32>
    %c0_47 = arith.constant 0 : index
    %c0_48 = arith.constant 0 : index
    %c0_49 = arith.constant 0 : index
    %132 = vector.load %arg4[%c0_47, %c0_48, %c0_49] : memref<2x128x384xbf16, #tpu.memory_space<vmem>>, vector<1x128x384xbf16>
    %133 = vector.shape_cast %132 : vector<1x128x384xbf16> to vector<128x384xbf16>
    %cst_50 = arith.constant dense<0.000000e+00> : vector<8x384xf32>
    %134 = tpu.matmul %123, %133, %cst_50 {dimension_numbers = #tpu.dot_dimension_numbers<[1], [0], [0], [1], [0, 0, 1, 1], [], []>} : vector<8x128xbf16>, vector<128x384xbf16>, vector<8x384xf32> -> vector<8x384xf32>
    %135 = vector.extract_strided_slice %131 {offsets = [0, 0], sizes = [8, 128], strides = [1, 1]} : vector<8x384xf32> to vector<8x128xf32>
    %136 = vector.extract_strided_slice %131 {offsets = [0, 128], sizes = [8, 128], strides = [1, 1]} : vector<8x384xf32> to vector<8x128xf32>
    %137 = vector.extract_strided_slice %131 {offsets = [0, 256], sizes = [8, 128], strides = [1, 1]} : vector<8x384xf32> to vector<8x128xf32>
    %138 = vector.extract_strided_slice %134 {offsets = [0, 0], sizes = [8, 128], strides = [1, 1]} : vector<8x384xf32> to vector<8x128xf32>
    %139 = vector.extract_strided_slice %134 {offsets = [0, 128], sizes = [8, 128], strides = [1, 1]} : vector<8x384xf32> to vector<8x128xf32>
    %140 = vector.extract_strided_slice %134 {offsets = [0, 256], sizes = [8, 128], strides = [1, 1]} : vector<8x384xf32> to vector<8x128xf32>
    %141 = arith.addf %135, %138 : vector<8x128xf32>
    %142 = arith.negf %141 : vector<8x128xf32>
    %143 = math.exp %142 : vector<8x128xf32>
    %cst_51 = arith.constant 1.000000e+00 : f32
    %144 = vector.broadcast %cst_51 : f32 to vector<8x128xf32>
    %145 = arith.addf %144, %143 : vector<8x128xf32>
    %146 = arith.divf %144, %145 : vector<8x128xf32>
    %147 = arith.addf %136, %139 : vector<8x128xf32>
    %148 = arith.negf %147 : vector<8x128xf32>
    %149 = math.exp %148 : vector<8x128xf32>
    %cst_52 = arith.constant 1.000000e+00 : f32
    %150 = vector.broadcast %cst_52 : f32 to vector<8x128xf32>
    %151 = arith.addf %150, %149 : vector<8x128xf32>
    %152 = arith.divf %150, %151 : vector<8x128xf32>
    %153 = arith.addf %140, %14 : vector<8x128xf32>
    %154 = arith.mulf %146, %153 : vector<8x128xf32>
    %155 = arith.addf %137, %154 : vector<8x128xf32>
    %156 = math.tanh %155 : vector<8x128xf32>
    %157 = arith.subf %122, %156 : vector<8x128xf32>
    %158 = arith.mulf %152, %157 : vector<8x128xf32>
    %159 = arith.addf %156, %158 : vector<8x128xf32>
    %160 = arith.truncf %159 : vector<8x128xf32> to vector<8x128xbf16>
    %161 = arith.index_cast %c3_i32 : i32 to index
    %c0_53 = arith.constant 0 : index
    %c0_54 = arith.constant 0 : index
    %162 = vector.load %arg12[%161, %c0_53, %c0_54] : memref<8x8x128xbf16, #tpu.memory_space<vmem>>, vector<1x8x128xbf16>
    %163 = vector.shape_cast %162 : vector<1x8x128xbf16> to vector<8x128xbf16>
    %164 = vector.shape_cast %160 : vector<8x128xbf16> to vector<1x8x128xbf16>
    tpu.vector_store %arg12[%161, %c0_53, %c0_54], %164 {strides = array<i32>} : memref<8x8x128xbf16, #tpu.memory_space<vmem>>, vector<1x8x128xbf16>,
    %c4_i32 = arith.constant 4 : i32
    %165 = arith.index_cast %c4_i32 : i32 to index
    %c0_55 = arith.constant 0 : index
    %c0_56 = arith.constant 0 : index
    %166 = vector.load %arg11[%165, %c0_55, %c0_56] : memref<8x8x384xbf16, #tpu.memory_space<vmem>>, vector<1x8x384xbf16>
    %167 = vector.shape_cast %166 : vector<1x8x384xbf16> to vector<8x384xbf16>
    %168 = arith.extf %167 : vector<8x384xbf16> to vector<8x384xf32>
    %c0_57 = arith.constant 0 : index
    %c0_58 = arith.constant 0 : index
    %c0_59 = arith.constant 0 : index
    %169 = vector.load %arg4[%c0_57, %c0_58, %c0_59] : memref<2x128x384xbf16, #tpu.memory_space<vmem>>, vector<1x128x384xbf16>
    %170 = vector.shape_cast %169 : vector<1x128x384xbf16> to vector<128x384xbf16>
    %cst_60 = arith.constant dense<0.000000e+00> : vector<8x384xf32>
    %171 = tpu.matmul %160, %170, %cst_60 {dimension_numbers = #tpu.dot_dimension_numbers<[1], [0], [0], [1], [0, 0, 1, 1], [], []>} : vector<8x128xbf16>, vector<128x384xbf16>, vector<8x384xf32> -> vector<8x384xf32>
    %172 = vector.extract_strided_slice %168 {offsets = [0, 0], sizes = [8, 128], strides = [1, 1]} : vector<8x384xf32> to vector<8x128xf32>
    %173 = vector.extract_strided_slice %168 {offsets = [0, 128], sizes = [8, 128], strides = [1, 1]} : vector<8x384xf32> to vector<8x128xf32>
    %174 = vector.extract_strided_slice %168 {offsets = [0, 256], sizes = [8, 128], strides = [1, 1]} : vector<8x384xf32> to vector<8x128xf32>
    %175 = vector.extract_strided_slice %171 {offsets = [0, 0], sizes = [8, 128], strides = [1, 1]} : vector<8x384xf32> to vector<8x128xf32>
    %176 = vector.extract_strided_slice %171 {offsets = [0, 128], sizes = [8, 128], strides = [1, 1]} : vector<8x384xf32> to vector<8x128xf32>
    %177 = vector.extract_strided_slice %171 {offsets = [0, 256], sizes = [8, 128], strides = [1, 1]} : vector<8x384xf32> to vector<8x128xf32>
    %178 = arith.addf %172, %175 : vector<8x128xf32>
    %179 = arith.negf %178 : vector<8x128xf32>
    %180 = math.exp %179 : vector<8x128xf32>
    %cst_61 = arith.constant 1.000000e+00 : f32
    %181 = vector.broadcast %cst_61 : f32 to vector<8x128xf32>
    %182 = arith.addf %181, %180 : vector<8x128xf32>
    %183 = arith.divf %181, %182 : vector<8x128xf32>
    %184 = arith.addf %173, %176 : vector<8x128xf32>
    %185 = arith.negf %184 : vector<8x128xf32>
    %186 = math.exp %185 : vector<8x128xf32>
    %cst_62 = arith.constant 1.000000e+00 : f32
    %187 = vector.broadcast %cst_62 : f32 to vector<8x128xf32>
    %188 = arith.addf %187, %186 : vector<8x128xf32>
    %189 = arith.divf %187, %188 : vector<8x128xf32>
    %190 = arith.addf %177, %14 : vector<8x128xf32>
    %191 = arith.mulf %183, %190 : vector<8x128xf32>
    %192 = arith.addf %174, %191 : vector<8x128xf32>
    %193 = math.tanh %192 : vector<8x128xf32>
    %194 = arith.subf %159, %193 : vector<8x128xf32>
    %195 = arith.mulf %189, %194 : vector<8x128xf32>
    %196 = arith.addf %193, %195 : vector<8x128xf32>
    %197 = arith.truncf %196 : vector<8x128xf32> to vector<8x128xbf16>
    %198 = arith.index_cast %c4_i32 : i32 to index
    %c0_63 = arith.constant 0 : index
    %c0_64 = arith.constant 0 : index
    %199 = vector.load %arg12[%198, %c0_63, %c0_64] : memref<8x8x128xbf16, #tpu.memory_space<vmem>>, vector<1x8x128xbf16>
    %200 = vector.shape_cast %199 : vector<1x8x128xbf16> to vector<8x128xbf16>
    %201 = vector.shape_cast %197 : vector<8x128xbf16> to vector<1x8x128xbf16>
    tpu.vector_store %arg12[%198, %c0_63, %c0_64], %201 {strides = array<i32>} : memref<8x8x128xbf16, #tpu.memory_space<vmem>>, vector<1x8x128xbf16>,
    %c5_i32 = arith.constant 5 : i32
    %202 = arith.index_cast %c5_i32 : i32 to index
    %c0_65 = arith.constant 0 : index
    %c0_66 = arith.constant 0 : index
    %203 = vector.load %arg11[%202, %c0_65, %c0_66] : memref<8x8x384xbf16, #tpu.memory_space<vmem>>, vector<1x8x384xbf16>
    %204 = vector.shape_cast %203 : vector<1x8x384xbf16> to vector<8x384xbf16>
    %205 = arith.extf %204 : vector<8x384xbf16> to vector<8x384xf32>
    %c0_67 = arith.constant 0 : index
    %c0_68 = arith.constant 0 : index
    %c0_69 = arith.constant 0 : index
    %206 = vector.load %arg4[%c0_67, %c0_68, %c0_69] : memref<2x128x384xbf16, #tpu.memory_space<vmem>>, vector<1x128x384xbf16>
    %207 = vector.shape_cast %206 : vector<1x128x384xbf16> to vector<128x384xbf16>
    %cst_70 = arith.constant dense<0.000000e+00> : vector<8x384xf32>
    %208 = tpu.matmul %197, %207, %cst_70 {dimension_numbers = #tpu.dot_dimension_numbers<[1], [0], [0], [1], [0, 0, 1, 1], [], []>} : vector<8x128xbf16>, vector<128x384xbf16>, vector<8x384xf32> -> vector<8x384xf32>
    %209 = vector.extract_strided_slice %205 {offsets = [0, 0], sizes = [8, 128], strides = [1, 1]} : vector<8x384xf32> to vector<8x128xf32>
    %210 = vector.extract_strided_slice %205 {offsets = [0, 128], sizes = [8, 128], strides = [1, 1]} : vector<8x384xf32> to vector<8x128xf32>
    %211 = vector.extract_strided_slice %205 {offsets = [0, 256], sizes = [8, 128], strides = [1, 1]} : vector<8x384xf32> to vector<8x128xf32>
    %212 = vector.extract_strided_slice %208 {offsets = [0, 0], sizes = [8, 128], strides = [1, 1]} : vector<8x384xf32> to vector<8x128xf32>
    %213 = vector.extract_strided_slice %208 {offsets = [0, 128], sizes = [8, 128], strides = [1, 1]} : vector<8x384xf32> to vector<8x128xf32>
    %214 = vector.extract_strided_slice %208 {offsets = [0, 256], sizes = [8, 128], strides = [1, 1]} : vector<8x384xf32> to vector<8x128xf32>
    %215 = arith.addf %209, %212 : vector<8x128xf32>
    %216 = arith.negf %215 : vector<8x128xf32>
    %217 = math.exp %216 : vector<8x128xf32>
    %cst_71 = arith.constant 1.000000e+00 : f32
    %218 = vector.broadcast %cst_71 : f32 to vector<8x128xf32>
    %219 = arith.addf %218, %217 : vector<8x128xf32>
    %220 = arith.divf %218, %219 : vector<8x128xf32>
    %221 = arith.addf %210, %213 : vector<8x128xf32>
    %222 = arith.negf %221 : vector<8x128xf32>
    %223 = math.exp %222 : vector<8x128xf32>
    %cst_72 = arith.constant 1.000000e+00 : f32
    %224 = vector.broadcast %cst_72 : f32 to vector<8x128xf32>
    %225 = arith.addf %224, %223 : vector<8x128xf32>
    %226 = arith.divf %224, %225 : vector<8x128xf32>
    %227 = arith.addf %214, %14 : vector<8x128xf32>
    %228 = arith.mulf %220, %227 : vector<8x128xf32>
    %229 = arith.addf %211, %228 : vector<8x128xf32>
    %230 = math.tanh %229 : vector<8x128xf32>
    %231 = arith.subf %196, %230 : vector<8x128xf32>
    %232 = arith.mulf %226, %231 : vector<8x128xf32>
    %233 = arith.addf %230, %232 : vector<8x128xf32>
    %234 = arith.truncf %233 : vector<8x128xf32> to vector<8x128xbf16>
    %235 = arith.index_cast %c5_i32 : i32 to index
    %c0_73 = arith.constant 0 : index
    %c0_74 = arith.constant 0 : index
    %236 = vector.load %arg12[%235, %c0_73, %c0_74] : memref<8x8x128xbf16, #tpu.memory_space<vmem>>, vector<1x8x128xbf16>
    %237 = vector.shape_cast %236 : vector<1x8x128xbf16> to vector<8x128xbf16>
    %238 = vector.shape_cast %234 : vector<8x128xbf16> to vector<1x8x128xbf16>
    tpu.vector_store %arg12[%235, %c0_73, %c0_74], %238 {strides = array<i32>} : memref<8x8x128xbf16, #tpu.memory_space<vmem>>, vector<1x8x128xbf16>,
    %c6_i32 = arith.constant 6 : i32
    %239 = arith.index_cast %c6_i32 : i32 to index
    %c0_75 = arith.constant 0 : index
    %c0_76 = arith.constant 0 : index
    %240 = vector.load %arg11[%239, %c0_75, %c0_76] : memref<8x8x384xbf16, #tpu.memory_space<vmem>>, vector<1x8x384xbf16>
    %241 = vector.shape_cast %240 : vector<1x8x384xbf16> to vector<8x384xbf16>
    %242 = arith.extf %241 : vector<8x384xbf16> to vector<8x384xf32>
    %c0_77 = arith.constant 0 : index
    %c0_78 = arith.constant 0 : index
    %c0_79 = arith.constant 0 : index
    %243 = vector.load %arg4[%c0_77, %c0_78, %c0_79] : memref<2x128x384xbf16, #tpu.memory_space<vmem>>, vector<1x128x384xbf16>
    %244 = vector.shape_cast %243 : vector<1x128x384xbf16> to vector<128x384xbf16>
    %cst_80 = arith.constant dense<0.000000e+00> : vector<8x384xf32>
    %245 = tpu.matmul %234, %244, %cst_80 {dimension_numbers = #tpu.dot_dimension_numbers<[1], [0], [0], [1], [0, 0, 1, 1], [], []>} : vector<8x128xbf16>, vector<128x384xbf16>, vector<8x384xf32> -> vector<8x384xf32>
    %246 = vector.extract_strided_slice %242 {offsets = [0, 0], sizes = [8, 128], strides = [1, 1]} : vector<8x384xf32> to vector<8x128xf32>
    %247 = vector.extract_strided_slice %242 {offsets = [0, 128], sizes = [8, 128], strides = [1, 1]} : vector<8x384xf32> to vector<8x128xf32>
    %248 = vector.extract_strided_slice %242 {offsets = [0, 256], sizes = [8, 128], strides = [1, 1]} : vector<8x384xf32> to vector<8x128xf32>
    %249 = vector.extract_strided_slice %245 {offsets = [0, 0], sizes = [8, 128], strides = [1, 1]} : vector<8x384xf32> to vector<8x128xf32>
    %250 = vector.extract_strided_slice %245 {offsets = [0, 128], sizes = [8, 128], strides = [1, 1]} : vector<8x384xf32> to vector<8x128xf32>
    %251 = vector.extract_strided_slice %245 {offsets = [0, 256], sizes = [8, 128], strides = [1, 1]} : vector<8x384xf32> to vector<8x128xf32>
    %252 = arith.addf %246, %249 : vector<8x128xf32>
    %253 = arith.negf %252 : vector<8x128xf32>
    %254 = math.exp %253 : vector<8x128xf32>
    %cst_81 = arith.constant 1.000000e+00 : f32
    %255 = vector.broadcast %cst_81 : f32 to vector<8x128xf32>
    %256 = arith.addf %255, %254 : vector<8x128xf32>
    %257 = arith.divf %255, %256 : vector<8x128xf32>
    %258 = arith.addf %247, %250 : vector<8x128xf32>
    %259 = arith.negf %258 : vector<8x128xf32>
    %260 = math.exp %259 : vector<8x128xf32>
    %cst_82 = arith.constant 1.000000e+00 : f32
    %261 = vector.broadcast %cst_82 : f32 to vector<8x128xf32>
    %262 = arith.addf %261, %260 : vector<8x128xf32>
    %263 = arith.divf %261, %262 : vector<8x128xf32>
    %264 = arith.addf %251, %14 : vector<8x128xf32>
    %265 = arith.mulf %257, %264 : vector<8x128xf32>
    %266 = arith.addf %248, %265 : vector<8x128xf32>
    %267 = math.tanh %266 : vector<8x128xf32>
    %268 = arith.subf %233, %267 : vector<8x128xf32>
    %269 = arith.mulf %263, %268 : vector<8x128xf32>
    %270 = arith.addf %267, %269 : vector<8x128xf32>
    %271 = arith.truncf %270 : vector<8x128xf32> to vector<8x128xbf16>
    %272 = arith.index_cast %c6_i32 : i32 to index
    %c0_83 = arith.constant 0 : index
    %c0_84 = arith.constant 0 : index
    %273 = vector.load %arg12[%272, %c0_83, %c0_84] : memref<8x8x128xbf16, #tpu.memory_space<vmem>>, vector<1x8x128xbf16>
    %274 = vector.shape_cast %273 : vector<1x8x128xbf16> to vector<8x128xbf16>
    %275 = vector.shape_cast %271 : vector<8x128xbf16> to vector<1x8x128xbf16>
    tpu.vector_store %arg12[%272, %c0_83, %c0_84], %275 {strides = array<i32>} : memref<8x8x128xbf16, #tpu.memory_space<vmem>>, vector<1x8x128xbf16>,
    %c7_i32 = arith.constant 7 : i32
    %276 = arith.index_cast %c7_i32 : i32 to index
    %c0_85 = arith.constant 0 : index
    %c0_86 = arith.constant 0 : index
    %277 = vector.load %arg11[%276, %c0_85, %c0_86] : memref<8x8x384xbf16, #tpu.memory_space<vmem>>, vector<1x8x384xbf16>
    %278 = vector.shape_cast %277 : vector<1x8x384xbf16> to vector<8x384xbf16>
    %279 = arith.extf %278 : vector<8x384xbf16> to vector<8x384xf32>
    %c0_87 = arith.constant 0 : index
    %c0_88 = arith.constant 0 : index
    %c0_89 = arith.constant 0 : index
    %280 = vector.load %arg4[%c0_87, %c0_88, %c0_89] : memref<2x128x384xbf16, #tpu.memory_space<vmem>>, vector<1x128x384xbf16>
    %281 = vector.shape_cast %280 : vector<1x128x384xbf16> to vector<128x384xbf16>
    %cst_90 = arith.constant dense<0.000000e+00> : vector<8x384xf32>
    %282 = tpu.matmul %271, %281, %cst_90 {dimension_numbers = #tpu.dot_dimension_numbers<[1], [0], [0], [1], [0, 0, 1, 1], [], []>} : vector<8x128xbf16>, vector<128x384xbf16>, vector<8x384xf32> -> vector<8x384xf32>
    %283 = vector.extract_strided_slice %279 {offsets = [0, 0], sizes = [8, 128], strides = [1, 1]} : vector<8x384xf32> to vector<8x128xf32>
    %284 = vector.extract_strided_slice %279 {offsets = [0, 128], sizes = [8, 128], strides = [1, 1]} : vector<8x384xf32> to vector<8x128xf32>
    %285 = vector.extract_strided_slice %279 {offsets = [0, 256], sizes = [8, 128], strides = [1, 1]} : vector<8x384xf32> to vector<8x128xf32>
    %286 = vector.extract_strided_slice %282 {offsets = [0, 0], sizes = [8, 128], strides = [1, 1]} : vector<8x384xf32> to vector<8x128xf32>
    %287 = vector.extract_strided_slice %282 {offsets = [0, 128], sizes = [8, 128], strides = [1, 1]} : vector<8x384xf32> to vector<8x128xf32>
    %288 = vector.extract_strided_slice %282 {offsets = [0, 256], sizes = [8, 128], strides = [1, 1]} : vector<8x384xf32> to vector<8x128xf32>
    %289 = arith.addf %283, %286 : vector<8x128xf32>
    %290 = arith.negf %289 : vector<8x128xf32>
    %291 = math.exp %290 : vector<8x128xf32>
    %cst_91 = arith.constant 1.000000e+00 : f32
    %292 = vector.broadcast %cst_91 : f32 to vector<8x128xf32>
    %293 = arith.addf %292, %291 : vector<8x128xf32>
    %294 = arith.divf %292, %293 : vector<8x128xf32>
    %295 = arith.addf %284, %287 : vector<8x128xf32>
    %296 = arith.negf %295 : vector<8x128xf32>
    %297 = math.exp %296 : vector<8x128xf32>
    %cst_92 = arith.constant 1.000000e+00 : f32
    %298 = vector.broadcast %cst_92 : f32 to vector<8x128xf32>
    %299 = arith.addf %298, %297 : vector<8x128xf32>
    %300 = arith.divf %298, %299 : vector<8x128xf32>
    %301 = arith.addf %288, %14 : vector<8x128xf32>
    %302 = arith.mulf %294, %301 : vector<8x128xf32>
    %303 = arith.addf %285, %302 : vector<8x128xf32>
    %304 = math.tanh %303 : vector<8x128xf32>
    %305 = arith.subf %270, %304 : vector<8x128xf32>
    %306 = arith.mulf %300, %305 : vector<8x128xf32>
    %307 = arith.addf %304, %306 : vector<8x128xf32>
    %308 = arith.truncf %307 : vector<8x128xf32> to vector<8x128xbf16>
    %309 = arith.index_cast %c7_i32 : i32 to index
    %c0_93 = arith.constant 0 : index
    %c0_94 = arith.constant 0 : index
    %310 = vector.load %arg12[%309, %c0_93, %c0_94] : memref<8x8x128xbf16, #tpu.memory_space<vmem>>, vector<1x8x128xbf16>
    %311 = vector.shape_cast %310 : vector<1x8x128xbf16> to vector<8x128xbf16>
    %312 = vector.shape_cast %308 : vector<8x128xbf16> to vector<1x8x128xbf16>
    tpu.vector_store %arg12[%309, %c0_93, %c0_94], %312 {strides = array<i32>} : memref<8x8x128xbf16, #tpu.memory_space<vmem>>, vector<1x8x128xbf16>,
    %c8_i32 = arith.constant 8 : i32
    %c0_95 = arith.constant 0 : index
    %c0_96 = arith.constant 0 : index
    %c0_97 = arith.constant 0 : index
    %313 = vector.load %arg10[%c0_95, %c0_96, %c0_97] : memref<2x8x128xf32, #tpu.memory_space<vmem>>, vector<1x8x128xf32>
    %314 = vector.shape_cast %313 : vector<1x8x128xf32> to vector<8x128xf32>
    %315 = vector.shape_cast %307 : vector<8x128xf32> to vector<1x8x128xf32>
    tpu.vector_store %arg10[%c0_95, %c0_96, %c0_97], %315 {strides = array<i32>} : memref<2x8x128xf32, #tpu.memory_space<vmem>>, vector<1x8x128xf32>,
    %c0_98 = arith.constant 0 : index
    %c0_99 = arith.constant 0 : index
    %c0_100 = arith.constant 0 : index
    %316 = vector.load %arg3[%c0_98, %c0_99, %c0_100] : memref<1x128x384xbf16, #tpu.memory_space<vmem>>, vector<1x128x384xbf16>
    %317 = vector.shape_cast %316 : vector<1x128x384xbf16> to vector<128x384xbf16>
    %c1 = arith.constant 1 : index
    %c0_101 = arith.constant 0 : index
    %c0_102 = arith.constant 0 : index
    %318 = vector.load %arg5[%c1, %c0_101, %c0_102] : memref<2x1x384xf32, #tpu.memory_space<vmem>>, vector<1x1x384xf32>
    %319 = vector.shape_cast %318 : vector<1x1x384xf32> to vector<1x384xf32>
    %c0_103 = arith.constant 0 : index
    %c0_104 = arith.constant 0 : index
    %c0_105 = arith.constant 0 : index
    %320 = vector.load %arg12[%c0_103, %c0_104, %c0_105] : memref<8x8x128xbf16, #tpu.memory_space<vmem>>, vector<8x8x128xbf16>
    %321 = vector.shape_cast %320 : vector<8x8x128xbf16> to vector<64x128xbf16>
    %cst_106 = arith.constant dense<0.000000e+00> : vector<64x384xf32>
    %322 = tpu.matmul %321, %317, %cst_106 {dimension_numbers = #tpu.dot_dimension_numbers<[1], [0], [0], [1], [0, 0, 1, 1], [], []>} : vector<64x128xbf16>, vector<128x384xbf16>, vector<64x384xf32> -> vector<64x384xf32>
    %323 = vector.broadcast %319 : vector<1x384xf32> to vector<64x384xf32>
    %324 = arith.addf %322, %323 : vector<64x384xf32>
    %325 = arith.truncf %324 : vector<64x384xf32> to vector<64x384xbf16>
    %326 = vector.shape_cast %325 : vector<64x384xbf16> to vector<8x8x384xbf16>
    %c0_107 = arith.constant 0 : index
    %c0_108 = arith.constant 0 : index
    %c0_109 = arith.constant 0 : index
    %327 = vector.load %arg11[%c0_107, %c0_108, %c0_109] : memref<8x8x384xbf16, #tpu.memory_space<vmem>>, vector<8x8x384xbf16>
    tpu.vector_store %arg11[%c0_107, %c0_108, %c0_109], %326 {strides = array<i32>} : memref<8x8x384xbf16, #tpu.memory_space<vmem>>, vector<8x8x384xbf16>,
    %c1_110 = arith.constant 1 : index
    %c0_111 = arith.constant 0 : index
    %c0_112 = arith.constant 0 : index
    %328 = vector.load %arg6[%c1_110, %c0_111, %c0_112] : memref<2x1x128xf32, #tpu.memory_space<vmem>>, vector<1x1x128xf32>
    %329 = vector.shape_cast %328 : vector<1x1x128xf32> to vector<1x128xf32>
    %330 = vector.shape_cast %329 : vector<1x128xf32> to vector<1x128xf32>
    %331 = vector.broadcast %330 : vector<1x128xf32> to vector<8x128xf32>
    %cst_113 = arith.constant 0.000000e+00 : f32
    %332 = vector.broadcast %cst_113 : f32 to vector<8x128xf32>
    %cst_114 = arith.constant 0.000000e+00 : bf16
    %333 = vector.broadcast %cst_114 : bf16 to vector<8x128xbf16>
    %c0_i32_115 = arith.constant 0 : i32
    %334 = arith.index_cast %c0_i32_115 : i32 to index
    %c0_116 = arith.constant 0 : index
    %c0_117 = arith.constant 0 : index
    %335 = vector.load %arg11[%334, %c0_116, %c0_117] : memref<8x8x384xbf16, #tpu.memory_space<vmem>>, vector<1x8x384xbf16>
    %336 = vector.shape_cast %335 : vector<1x8x384xbf16> to vector<8x384xbf16>
    %337 = arith.extf %336 : vector<8x384xbf16> to vector<8x384xf32>
    %c1_118 = arith.constant 1 : index
    %c0_119 = arith.constant 0 : index
    %c0_120 = arith.constant 0 : index
    %338 = vector.load %arg4[%c1_118, %c0_119, %c0_120] : memref<2x128x384xbf16, #tpu.memory_space<vmem>>, vector<1x128x384xbf16>
    %339 = vector.shape_cast %338 : vector<1x128x384xbf16> to vector<128x384xbf16>
    %cst_121 = arith.constant dense<0.000000e+00> : vector<8x384xf32>
    %340 = tpu.matmul %333, %339, %cst_121 {dimension_numbers = #tpu.dot_dimension_numbers<[1], [0], [0], [1], [0, 0, 1, 1], [], []>} : vector<8x128xbf16>, vector<128x384xbf16>, vector<8x384xf32> -> vector<8x384xf32>
    %341 = vector.extract_strided_slice %337 {offsets = [0, 0], sizes = [8, 128], strides = [1, 1]} : vector<8x384xf32> to vector<8x128xf32>
    %342 = vector.extract_strided_slice %337 {offsets = [0, 128], sizes = [8, 128], strides = [1, 1]} : vector<8x384xf32> to vector<8x128xf32>
    %343 = vector.extract_strided_slice %337 {offsets = [0, 256], sizes = [8, 128], strides = [1, 1]} : vector<8x384xf32> to vector<8x128xf32>
    %344 = vector.extract_strided_slice %340 {offsets = [0, 0], sizes = [8, 128], strides = [1, 1]} : vector<8x384xf32> to vector<8x128xf32>
    %345 = vector.extract_strided_slice %340 {offsets = [0, 128], sizes = [8, 128], strides = [1, 1]} : vector<8x384xf32> to vector<8x128xf32>
    %346 = vector.extract_strided_slice %340 {offsets = [0, 256], sizes = [8, 128], strides = [1, 1]} : vector<8x384xf32> to vector<8x128xf32>
    %347 = arith.addf %341, %344 : vector<8x128xf32>
    %348 = arith.negf %347 : vector<8x128xf32>
    %349 = math.exp %348 : vector<8x128xf32>
    %cst_122 = arith.constant 1.000000e+00 : f32
    %350 = vector.broadcast %cst_122 : f32 to vector<8x128xf32>
    %351 = arith.addf %350, %349 : vector<8x128xf32>
    %352 = arith.divf %350, %351 : vector<8x128xf32>
    %353 = arith.addf %342, %345 : vector<8x128xf32>
    %354 = arith.negf %353 : vector<8x128xf32>
    %355 = math.exp %354 : vector<8x128xf32>
    %cst_123 = arith.constant 1.000000e+00 : f32
    %356 = vector.broadcast %cst_123 : f32 to vector<8x128xf32>
    %357 = arith.addf %356, %355 : vector<8x128xf32>
    %358 = arith.divf %356, %357 : vector<8x128xf32>
    %359 = arith.addf %346, %331 : vector<8x128xf32>
    %360 = arith.mulf %352, %359 : vector<8x128xf32>
    %361 = arith.addf %343, %360 : vector<8x128xf32>
    %362 = math.tanh %361 : vector<8x128xf32>
    %363 = arith.subf %332, %362 : vector<8x128xf32>
    %364 = arith.mulf %358, %363 : vector<8x128xf32>
    %365 = arith.addf %362, %364 : vector<8x128xf32>
    %366 = arith.truncf %365 : vector<8x128xf32> to vector<8x128xbf16>
    %c1_i32_124 = arith.constant 1 : i32
    %367 = arith.index_cast %c1_i32_124 : i32 to index
    %c0_125 = arith.constant 0 : index
    %c0_126 = arith.constant 0 : index
    %368 = vector.load %arg11[%367, %c0_125, %c0_126] : memref<8x8x384xbf16, #tpu.memory_space<vmem>>, vector<1x8x384xbf16>
    %369 = vector.shape_cast %368 : vector<1x8x384xbf16> to vector<8x384xbf16>
    %370 = arith.extf %369 : vector<8x384xbf16> to vector<8x384xf32>
    %c1_127 = arith.constant 1 : index
    %c0_128 = arith.constant 0 : index
    %c0_129 = arith.constant 0 : index
    %371 = vector.load %arg4[%c1_127, %c0_128, %c0_129] : memref<2x128x384xbf16, #tpu.memory_space<vmem>>, vector<1x128x384xbf16>
    %372 = vector.shape_cast %371 : vector<1x128x384xbf16> to vector<128x384xbf16>
    %cst_130 = arith.constant dense<0.000000e+00> : vector<8x384xf32>
    %373 = tpu.matmul %366, %372, %cst_130 {dimension_numbers = #tpu.dot_dimension_numbers<[1], [0], [0], [1], [0, 0, 1, 1], [], []>} : vector<8x128xbf16>, vector<128x384xbf16>, vector<8x384xf32> -> vector<8x384xf32>
    %374 = vector.extract_strided_slice %370 {offsets = [0, 0], sizes = [8, 128], strides = [1, 1]} : vector<8x384xf32> to vector<8x128xf32>
    %375 = vector.extract_strided_slice %370 {offsets = [0, 128], sizes = [8, 128], strides = [1, 1]} : vector<8x384xf32> to vector<8x128xf32>
    %376 = vector.extract_strided_slice %370 {offsets = [0, 256], sizes = [8, 128], strides = [1, 1]} : vector<8x384xf32> to vector<8x128xf32>
    %377 = vector.extract_strided_slice %373 {offsets = [0, 0], sizes = [8, 128], strides = [1, 1]} : vector<8x384xf32> to vector<8x128xf32>
    %378 = vector.extract_strided_slice %373 {offsets = [0, 128], sizes = [8, 128], strides = [1, 1]} : vector<8x384xf32> to vector<8x128xf32>
    %379 = vector.extract_strided_slice %373 {offsets = [0, 256], sizes = [8, 128], strides = [1, 1]} : vector<8x384xf32> to vector<8x128xf32>
    %380 = arith.addf %374, %377 : vector<8x128xf32>
    %381 = arith.negf %380 : vector<8x128xf32>
    %382 = math.exp %381 : vector<8x128xf32>
    %cst_131 = arith.constant 1.000000e+00 : f32
    %383 = vector.broadcast %cst_131 : f32 to vector<8x128xf32>
    %384 = arith.addf %383, %382 : vector<8x128xf32>
    %385 = arith.divf %383, %384 : vector<8x128xf32>
    %386 = arith.addf %375, %378 : vector<8x128xf32>
    %387 = arith.negf %386 : vector<8x128xf32>
    %388 = math.exp %387 : vector<8x128xf32>
    %cst_132 = arith.constant 1.000000e+00 : f32
    %389 = vector.broadcast %cst_132 : f32 to vector<8x128xf32>
    %390 = arith.addf %389, %388 : vector<8x128xf32>
    %391 = arith.divf %389, %390 : vector<8x128xf32>
    %392 = arith.addf %379, %331 : vector<8x128xf32>
    %393 = arith.mulf %385, %392 : vector<8x128xf32>
    %394 = arith.addf %376, %393 : vector<8x128xf32>
    %395 = math.tanh %394 : vector<8x128xf32>
    %396 = arith.subf %365, %395 : vector<8x128xf32>
    %397 = arith.mulf %391, %396 : vector<8x128xf32>
    %398 = arith.addf %395, %397 : vector<8x128xf32>
    %399 = arith.truncf %398 : vector<8x128xf32> to vector<8x128xbf16>
    %c2_i32_133 = arith.constant 2 : i32
    %400 = arith.index_cast %c2_i32_133 : i32 to index
    %c0_134 = arith.constant 0 : index
    %c0_135 = arith.constant 0 : index
    %401 = vector.load %arg11[%400, %c0_134, %c0_135] : memref<8x8x384xbf16, #tpu.memory_space<vmem>>, vector<1x8x384xbf16>
    %402 = vector.shape_cast %401 : vector<1x8x384xbf16> to vector<8x384xbf16>
    %403 = arith.extf %402 : vector<8x384xbf16> to vector<8x384xf32>
    %c1_136 = arith.constant 1 : index
    %c0_137 = arith.constant 0 : index
    %c0_138 = arith.constant 0 : index
    %404 = vector.load %arg4[%c1_136, %c0_137, %c0_138] : memref<2x128x384xbf16, #tpu.memory_space<vmem>>, vector<1x128x384xbf16>
    %405 = vector.shape_cast %404 : vector<1x128x384xbf16> to vector<128x384xbf16>
    %cst_139 = arith.constant dense<0.000000e+00> : vector<8x384xf32>
    %406 = tpu.matmul %399, %405, %cst_139 {dimension_numbers = #tpu.dot_dimension_numbers<[1], [0], [0], [1], [0, 0, 1, 1], [], []>} : vector<8x128xbf16>, vector<128x384xbf16>, vector<8x384xf32> -> vector<8x384xf32>
    %407 = vector.extract_strided_slice %403 {offsets = [0, 0], sizes = [8, 128], strides = [1, 1]} : vector<8x384xf32> to vector<8x128xf32>
    %408 = vector.extract_strided_slice %403 {offsets = [0, 128], sizes = [8, 128], strides = [1, 1]} : vector<8x384xf32> to vector<8x128xf32>
    %409 = vector.extract_strided_slice %403 {offsets = [0, 256], sizes = [8, 128], strides = [1, 1]} : vector<8x384xf32> to vector<8x128xf32>
    %410 = vector.extract_strided_slice %406 {offsets = [0, 0], sizes = [8, 128], strides = [1, 1]} : vector<8x384xf32> to vector<8x128xf32>
    %411 = vector.extract_strided_slice %406 {offsets = [0, 128], sizes = [8, 128], strides = [1, 1]} : vector<8x384xf32> to vector<8x128xf32>
    %412 = vector.extract_strided_slice %406 {offsets = [0, 256], sizes = [8, 128], strides = [1, 1]} : vector<8x384xf32> to vector<8x128xf32>
    %413 = arith.addf %407, %410 : vector<8x128xf32>
    %414 = arith.negf %413 : vector<8x128xf32>
    %415 = math.exp %414 : vector<8x128xf32>
    %cst_140 = arith.constant 1.000000e+00 : f32
    %416 = vector.broadcast %cst_140 : f32 to vector<8x128xf32>
    %417 = arith.addf %416, %415 : vector<8x128xf32>
    %418 = arith.divf %416, %417 : vector<8x128xf32>
    %419 = arith.addf %408, %411 : vector<8x128xf32>
    %420 = arith.negf %419 : vector<8x128xf32>
    %421 = math.exp %420 : vector<8x128xf32>
    %cst_141 = arith.constant 1.000000e+00 : f32
    %422 = vector.broadcast %cst_141 : f32 to vector<8x128xf32>
    %423 = arith.addf %422, %421 : vector<8x128xf32>
    %424 = arith.divf %422, %423 : vector<8x128xf32>
    %425 = arith.addf %412, %331 : vector<8x128xf32>
    %426 = arith.mulf %418, %425 : vector<8x128xf32>
    %427 = arith.addf %409, %426 : vector<8x128xf32>
    %428 = math.tanh %427 : vector<8x128xf32>
    %429 = arith.subf %398, %428 : vector<8x128xf32>
    %430 = arith.mulf %424, %429 : vector<8x128xf32>
    %431 = arith.addf %428, %430 : vector<8x128xf32>
    %432 = arith.truncf %431 : vector<8x128xf32> to vector<8x128xbf16>
    %c3_i32_142 = arith.constant 3 : i32
    %433 = arith.index_cast %c3_i32_142 : i32 to index
    %c0_143 = arith.constant 0 : index
    %c0_144 = arith.constant 0 : index
    %434 = vector.load %arg11[%433, %c0_143, %c0_144] : memref<8x8x384xbf16, #tpu.memory_space<vmem>>, vector<1x8x384xbf16>
    %435 = vector.shape_cast %434 : vector<1x8x384xbf16> to vector<8x384xbf16>
    %436 = arith.extf %435 : vector<8x384xbf16> to vector<8x384xf32>
    %c1_145 = arith.constant 1 : index
    %c0_146 = arith.constant 0 : index
    %c0_147 = arith.constant 0 : index
    %437 = vector.load %arg4[%c1_145, %c0_146, %c0_147] : memref<2x128x384xbf16, #tpu.memory_space<vmem>>, vector<1x128x384xbf16>
    %438 = vector.shape_cast %437 : vector<1x128x384xbf16> to vector<128x384xbf16>
    %cst_148 = arith.constant dense<0.000000e+00> : vector<8x384xf32>
    %439 = tpu.matmul %432, %438, %cst_148 {dimension_numbers = #tpu.dot_dimension_numbers<[1], [0], [0], [1], [0, 0, 1, 1], [], []>} : vector<8x128xbf16>, vector<128x384xbf16>, vector<8x384xf32> -> vector<8x384xf32>
    %440 = vector.extract_strided_slice %436 {offsets = [0, 0], sizes = [8, 128], strides = [1, 1]} : vector<8x384xf32> to vector<8x128xf32>
    %441 = vector.extract_strided_slice %436 {offsets = [0, 128], sizes = [8, 128], strides = [1, 1]} : vector<8x384xf32> to vector<8x128xf32>
    %442 = vector.extract_strided_slice %436 {offsets = [0, 256], sizes = [8, 128], strides = [1, 1]} : vector<8x384xf32> to vector<8x128xf32>
    %443 = vector.extract_strided_slice %439 {offsets = [0, 0], sizes = [8, 128], strides = [1, 1]} : vector<8x384xf32> to vector<8x128xf32>
    %444 = vector.extract_strided_slice %439 {offsets = [0, 128], sizes = [8, 128], strides = [1, 1]} : vector<8x384xf32> to vector<8x128xf32>
    %445 = vector.extract_strided_slice %439 {offsets = [0, 256], sizes = [8, 128], strides = [1, 1]} : vector<8x384xf32> to vector<8x128xf32>
    %446 = arith.addf %440, %443 : vector<8x128xf32>
    %447 = arith.negf %446 : vector<8x128xf32>
    %448 = math.exp %447 : vector<8x128xf32>
    %cst_149 = arith.constant 1.000000e+00 : f32
    %449 = vector.broadcast %cst_149 : f32 to vector<8x128xf32>
    %450 = arith.addf %449, %448 : vector<8x128xf32>
    %451 = arith.divf %449, %450 : vector<8x128xf32>
    %452 = arith.addf %441, %444 : vector<8x128xf32>
    %453 = arith.negf %452 : vector<8x128xf32>
    %454 = math.exp %453 : vector<8x128xf32>
    %cst_150 = arith.constant 1.000000e+00 : f32
    %455 = vector.broadcast %cst_150 : f32 to vector<8x128xf32>
    %456 = arith.addf %455, %454 : vector<8x128xf32>
    %457 = arith.divf %455, %456 : vector<8x128xf32>
    %458 = arith.addf %445, %331 : vector<8x128xf32>
    %459 = arith.mulf %451, %458 : vector<8x128xf32>
    %460 = arith.addf %442, %459 : vector<8x128xf32>
    %461 = math.tanh %460 : vector<8x128xf32>
    %462 = arith.subf %431, %461 : vector<8x128xf32>
    %463 = arith.mulf %457, %462 : vector<8x128xf32>
    %464 = arith.addf %461, %463 : vector<8x128xf32>
    %465 = arith.truncf %464 : vector<8x128xf32> to vector<8x128xbf16>
    %c4_i32_151 = arith.constant 4 : i32
    %466 = arith.index_cast %c4_i32_151 : i32 to index
    %c0_152 = arith.constant 0 : index
    %c0_153 = arith.constant 0 : index
    %467 = vector.load %arg11[%466, %c0_152, %c0_153] : memref<8x8x384xbf16, #tpu.memory_space<vmem>>, vector<1x8x384xbf16>
    %468 = vector.shape_cast %467 : vector<1x8x384xbf16> to vector<8x384xbf16>
    %469 = arith.extf %468 : vector<8x384xbf16> to vector<8x384xf32>
    %c1_154 = arith.constant 1 : index
    %c0_155 = arith.constant 0 : index
    %c0_156 = arith.constant 0 : index
    %470 = vector.load %arg4[%c1_154, %c0_155, %c0_156] : memref<2x128x384xbf16, #tpu.memory_space<vmem>>, vector<1x128x384xbf16>
    %471 = vector.shape_cast %470 : vector<1x128x384xbf16> to vector<128x384xbf16>
    %cst_157 = arith.constant dense<0.000000e+00> : vector<8x384xf32>
    %472 = tpu.matmul %465, %471, %cst_157 {dimension_numbers = #tpu.dot_dimension_numbers<[1], [0], [0], [1], [0, 0, 1, 1], [], []>} : vector<8x128xbf16>, vector<128x384xbf16>, vector<8x384xf32> -> vector<8x384xf32>
    %473 = vector.extract_strided_slice %469 {offsets = [0, 0], sizes = [8, 128], strides = [1, 1]} : vector<8x384xf32> to vector<8x128xf32>
    %474 = vector.extract_strided_slice %469 {offsets = [0, 128], sizes = [8, 128], strides = [1, 1]} : vector<8x384xf32> to vector<8x128xf32>
    %475 = vector.extract_strided_slice %469 {offsets = [0, 256], sizes = [8, 128], strides = [1, 1]} : vector<8x384xf32> to vector<8x128xf32>
    %476 = vector.extract_strided_slice %472 {offsets = [0, 0], sizes = [8, 128], strides = [1, 1]} : vector<8x384xf32> to vector<8x128xf32>
    %477 = vector.extract_strided_slice %472 {offsets = [0, 128], sizes = [8, 128], strides = [1, 1]} : vector<8x384xf32> to vector<8x128xf32>
    %478 = vector.extract_strided_slice %472 {offsets = [0, 256], sizes = [8, 128], strides = [1, 1]} : vector<8x384xf32> to vector<8x128xf32>
    %479 = arith.addf %473, %476 : vector<8x128xf32>
    %480 = arith.negf %479 : vector<8x128xf32>
    %481 = math.exp %480 : vector<8x128xf32>
    %cst_158 = arith.constant 1.000000e+00 : f32
    %482 = vector.broadcast %cst_158 : f32 to vector<8x128xf32>
    %483 = arith.addf %482, %481 : vector<8x128xf32>
    %484 = arith.divf %482, %483 : vector<8x128xf32>
    %485 = arith.addf %474, %477 : vector<8x128xf32>
    %486 = arith.negf %485 : vector<8x128xf32>
    %487 = math.exp %486 : vector<8x128xf32>
    %cst_159 = arith.constant 1.000000e+00 : f32
    %488 = vector.broadcast %cst_159 : f32 to vector<8x128xf32>
    %489 = arith.addf %488, %487 : vector<8x128xf32>
    %490 = arith.divf %488, %489 : vector<8x128xf32>
    %491 = arith.addf %478, %331 : vector<8x128xf32>
    %492 = arith.mulf %484, %491 : vector<8x128xf32>
    %493 = arith.addf %475, %492 : vector<8x128xf32>
    %494 = math.tanh %493 : vector<8x128xf32>
    %495 = arith.subf %464, %494 : vector<8x128xf32>
    %496 = arith.mulf %490, %495 : vector<8x128xf32>
    %497 = arith.addf %494, %496 : vector<8x128xf32>
    %498 = arith.truncf %497 : vector<8x128xf32> to vector<8x128xbf16>
    %c5_i32_160 = arith.constant 5 : i32
    %499 = arith.index_cast %c5_i32_160 : i32 to index
    %c0_161 = arith.constant 0 : index
    %c0_162 = arith.constant 0 : index
    %500 = vector.load %arg11[%499, %c0_161, %c0_162] : memref<8x8x384xbf16, #tpu.memory_space<vmem>>, vector<1x8x384xbf16>
    %501 = vector.shape_cast %500 : vector<1x8x384xbf16> to vector<8x384xbf16>
    %502 = arith.extf %501 : vector<8x384xbf16> to vector<8x384xf32>
    %c1_163 = arith.constant 1 : index
    %c0_164 = arith.constant 0 : index
    %c0_165 = arith.constant 0 : index
    %503 = vector.load %arg4[%c1_163, %c0_164, %c0_165] : memref<2x128x384xbf16, #tpu.memory_space<vmem>>, vector<1x128x384xbf16>
    %504 = vector.shape_cast %503 : vector<1x128x384xbf16> to vector<128x384xbf16>
    %cst_166 = arith.constant dense<0.000000e+00> : vector<8x384xf32>
    %505 = tpu.matmul %498, %504, %cst_166 {dimension_numbers = #tpu.dot_dimension_numbers<[1], [0], [0], [1], [0, 0, 1, 1], [], []>} : vector<8x128xbf16>, vector<128x384xbf16>, vector<8x384xf32> -> vector<8x384xf32>
    %506 = vector.extract_strided_slice %502 {offsets = [0, 0], sizes = [8, 128], strides = [1, 1]} : vector<8x384xf32> to vector<8x128xf32>
    %507 = vector.extract_strided_slice %502 {offsets = [0, 128], sizes = [8, 128], strides = [1, 1]} : vector<8x384xf32> to vector<8x128xf32>
    %508 = vector.extract_strided_slice %502 {offsets = [0, 256], sizes = [8, 128], strides = [1, 1]} : vector<8x384xf32> to vector<8x128xf32>
    %509 = vector.extract_strided_slice %505 {offsets = [0, 0], sizes = [8, 128], strides = [1, 1]} : vector<8x384xf32> to vector<8x128xf32>
    %510 = vector.extract_strided_slice %505 {offsets = [0, 128], sizes = [8, 128], strides = [1, 1]} : vector<8x384xf32> to vector<8x128xf32>
    %511 = vector.extract_strided_slice %505 {offsets = [0, 256], sizes = [8, 128], strides = [1, 1]} : vector<8x384xf32> to vector<8x128xf32>
    %512 = arith.addf %506, %509 : vector<8x128xf32>
    %513 = arith.negf %512 : vector<8x128xf32>
    %514 = math.exp %513 : vector<8x128xf32>
    %cst_167 = arith.constant 1.000000e+00 : f32
    %515 = vector.broadcast %cst_167 : f32 to vector<8x128xf32>
    %516 = arith.addf %515, %514 : vector<8x128xf32>
    %517 = arith.divf %515, %516 : vector<8x128xf32>
    %518 = arith.addf %507, %510 : vector<8x128xf32>
    %519 = arith.negf %518 : vector<8x128xf32>
    %520 = math.exp %519 : vector<8x128xf32>
    %cst_168 = arith.constant 1.000000e+00 : f32
    %521 = vector.broadcast %cst_168 : f32 to vector<8x128xf32>
    %522 = arith.addf %521, %520 : vector<8x128xf32>
    %523 = arith.divf %521, %522 : vector<8x128xf32>
    %524 = arith.addf %511, %331 : vector<8x128xf32>
    %525 = arith.mulf %517, %524 : vector<8x128xf32>
    %526 = arith.addf %508, %525 : vector<8x128xf32>
    %527 = math.tanh %526 : vector<8x128xf32>
    %528 = arith.subf %497, %527 : vector<8x128xf32>
    %529 = arith.mulf %523, %528 : vector<8x128xf32>
    %530 = arith.addf %527, %529 : vector<8x128xf32>
    %531 = arith.truncf %530 : vector<8x128xf32> to vector<8x128xbf16>
    %c6_i32_169 = arith.constant 6 : i32
    %532 = arith.index_cast %c6_i32_169 : i32 to index
    %c0_170 = arith.constant 0 : index
    %c0_171 = arith.constant 0 : index
    %533 = vector.load %arg11[%532, %c0_170, %c0_171] : memref<8x8x384xbf16, #tpu.memory_space<vmem>>, vector<1x8x384xbf16>
    %534 = vector.shape_cast %533 : vector<1x8x384xbf16> to vector<8x384xbf16>
    %535 = arith.extf %534 : vector<8x384xbf16> to vector<8x384xf32>
    %c1_172 = arith.constant 1 : index
    %c0_173 = arith.constant 0 : index
    %c0_174 = arith.constant 0 : index
    %536 = vector.load %arg4[%c1_172, %c0_173, %c0_174] : memref<2x128x384xbf16, #tpu.memory_space<vmem>>, vector<1x128x384xbf16>
    %537 = vector.shape_cast %536 : vector<1x128x384xbf16> to vector<128x384xbf16>
    %cst_175 = arith.constant dense<0.000000e+00> : vector<8x384xf32>
    %538 = tpu.matmul %531, %537, %cst_175 {dimension_numbers = #tpu.dot_dimension_numbers<[1], [0], [0], [1], [0, 0, 1, 1], [], []>} : vector<8x128xbf16>, vector<128x384xbf16>, vector<8x384xf32> -> vector<8x384xf32>
    %539 = vector.extract_strided_slice %535 {offsets = [0, 0], sizes = [8, 128], strides = [1, 1]} : vector<8x384xf32> to vector<8x128xf32>
    %540 = vector.extract_strided_slice %535 {offsets = [0, 128], sizes = [8, 128], strides = [1, 1]} : vector<8x384xf32> to vector<8x128xf32>
    %541 = vector.extract_strided_slice %535 {offsets = [0, 256], sizes = [8, 128], strides = [1, 1]} : vector<8x384xf32> to vector<8x128xf32>
    %542 = vector.extract_strided_slice %538 {offsets = [0, 0], sizes = [8, 128], strides = [1, 1]} : vector<8x384xf32> to vector<8x128xf32>
    %543 = vector.extract_strided_slice %538 {offsets = [0, 128], sizes = [8, 128], strides = [1, 1]} : vector<8x384xf32> to vector<8x128xf32>
    %544 = vector.extract_strided_slice %538 {offsets = [0, 256], sizes = [8, 128], strides = [1, 1]} : vector<8x384xf32> to vector<8x128xf32>
    %545 = arith.addf %539, %542 : vector<8x128xf32>
    %546 = arith.negf %545 : vector<8x128xf32>
    %547 = math.exp %546 : vector<8x128xf32>
    %cst_176 = arith.constant 1.000000e+00 : f32
    %548 = vector.broadcast %cst_176 : f32 to vector<8x128xf32>
    %549 = arith.addf %548, %547 : vector<8x128xf32>
    %550 = arith.divf %548, %549 : vector<8x128xf32>
    %551 = arith.addf %540, %543 : vector<8x128xf32>
    %552 = arith.negf %551 : vector<8x128xf32>
    %553 = math.exp %552 : vector<8x128xf32>
    %cst_177 = arith.constant 1.000000e+00 : f32
    %554 = vector.broadcast %cst_177 : f32 to vector<8x128xf32>
    %555 = arith.addf %554, %553 : vector<8x128xf32>
    %556 = arith.divf %554, %555 : vector<8x128xf32>
    %557 = arith.addf %544, %331 : vector<8x128xf32>
    %558 = arith.mulf %550, %557 : vector<8x128xf32>
    %559 = arith.addf %541, %558 : vector<8x128xf32>
    %560 = math.tanh %559 : vector<8x128xf32>
    %561 = arith.subf %530, %560 : vector<8x128xf32>
    %562 = arith.mulf %556, %561 : vector<8x128xf32>
    %563 = arith.addf %560, %562 : vector<8x128xf32>
    %564 = arith.truncf %563 : vector<8x128xf32> to vector<8x128xbf16>
    %c7_i32_178 = arith.constant 7 : i32
    %565 = arith.index_cast %c7_i32_178 : i32 to index
    %c0_179 = arith.constant 0 : index
    %c0_180 = arith.constant 0 : index
    %566 = vector.load %arg11[%565, %c0_179, %c0_180] : memref<8x8x384xbf16, #tpu.memory_space<vmem>>, vector<1x8x384xbf16>
    %567 = vector.shape_cast %566 : vector<1x8x384xbf16> to vector<8x384xbf16>
    %568 = arith.extf %567 : vector<8x384xbf16> to vector<8x384xf32>
    %c1_181 = arith.constant 1 : index
    %c0_182 = arith.constant 0 : index
    %c0_183 = arith.constant 0 : index
    %569 = vector.load %arg4[%c1_181, %c0_182, %c0_183] : memref<2x128x384xbf16, #tpu.memory_space<vmem>>, vector<1x128x384xbf16>
    %570 = vector.shape_cast %569 : vector<1x128x384xbf16> to vector<128x384xbf16>
    %cst_184 = arith.constant dense<0.000000e+00> : vector<8x384xf32>
    %571 = tpu.matmul %564, %570, %cst_184 {dimension_numbers = #tpu.dot_dimension_numbers<[1], [0], [0], [1], [0, 0, 1, 1], [], []>} : vector<8x128xbf16>, vector<128x384xbf16>, vector<8x384xf32> -> vector<8x384xf32>
    %572 = vector.extract_strided_slice %568 {offsets = [0, 0], sizes = [8, 128], strides = [1, 1]} : vector<8x384xf32> to vector<8x128xf32>
    %573 = vector.extract_strided_slice %568 {offsets = [0, 128], sizes = [8, 128], strides = [1, 1]} : vector<8x384xf32> to vector<8x128xf32>
    %574 = vector.extract_strided_slice %568 {offsets = [0, 256], sizes = [8, 128], strides = [1, 1]} : vector<8x384xf32> to vector<8x128xf32>
    %575 = vector.extract_strided_slice %571 {offsets = [0, 0], sizes = [8, 128], strides = [1, 1]} : vector<8x384xf32> to vector<8x128xf32>
    %576 = vector.extract_strided_slice %571 {offsets = [0, 128], sizes = [8, 128], strides = [1, 1]} : vector<8x384xf32> to vector<8x128xf32>
    %577 = vector.extract_strided_slice %571 {offsets = [0, 256], sizes = [8, 128], strides = [1, 1]} : vector<8x384xf32> to vector<8x128xf32>
    %578 = arith.addf %572, %575 : vector<8x128xf32>
    %579 = arith.negf %578 : vector<8x128xf32>
    %580 = math.exp %579 : vector<8x128xf32>
    %cst_185 = arith.constant 1.000000e+00 : f32
    %581 = vector.broadcast %cst_185 : f32 to vector<8x128xf32>
    %582 = arith.addf %581, %580 : vector<8x128xf32>
    %583 = arith.divf %581, %582 : vector<8x128xf32>
    %584 = arith.addf %573, %576 : vector<8x128xf32>
    %585 = arith.negf %584 : vector<8x128xf32>
    %586 = math.exp %585 : vector<8x128xf32>
    %cst_186 = arith.constant 1.000000e+00 : f32
    %587 = vector.broadcast %cst_186 : f32 to vector<8x128xf32>
    %588 = arith.addf %587, %586 : vector<8x128xf32>
    %589 = arith.divf %587, %588 : vector<8x128xf32>
    %590 = arith.addf %577, %331 : vector<8x128xf32>
    %591 = arith.mulf %583, %590 : vector<8x128xf32>
    %592 = arith.addf %574, %591 : vector<8x128xf32>
    %593 = math.tanh %592 : vector<8x128xf32>
    %594 = arith.subf %563, %593 : vector<8x128xf32>
    %595 = arith.mulf %589, %594 : vector<8x128xf32>
    %596 = arith.addf %593, %595 : vector<8x128xf32>
    %597 = arith.truncf %596 : vector<8x128xf32> to vector<8x128xbf16>
    %c8_i32_187 = arith.constant 8 : i32
    %c1_188 = arith.constant 1 : index
    %c0_189 = arith.constant 0 : index
    %c0_190 = arith.constant 0 : index
    %598 = vector.load %arg10[%c1_188, %c0_189, %c0_190] : memref<2x8x128xf32, #tpu.memory_space<vmem>>, vector<1x8x128xf32>
    %599 = vector.shape_cast %598 : vector<1x8x128xf32> to vector<8x128xf32>
    %600 = vector.shape_cast %596 : vector<8x128xf32> to vector<1x8x128xf32>
    tpu.vector_store %arg10[%c1_188, %c0_189, %c0_190], %600 {strides = array<i32>} : memref<2x8x128xf32, #tpu.memory_space<vmem>>, vector<1x8x128xf32>,
    %c0_191 = arith.constant 0 : index
    %c0_192 = arith.constant 0 : index
    %601 = vector.load %arg7[%c0_191, %c0_192] : memref<128x128xbf16, #tpu.memory_space<vmem>>, vector<128x128xbf16>
    %cst_193 = arith.constant dense<0.000000e+00> : vector<8x128xf32>
    %602 = tpu.matmul %597, %601, %cst_193 {dimension_numbers = #tpu.dot_dimension_numbers<[1], [0], [0], [1], [0, 0, 1, 1], [], []>} : vector<8x128xbf16>, vector<128x128xbf16>, vector<8x128xf32> -> vector<8x128xf32>
    %c0_194 = arith.constant 0 : index
    %c0_195 = arith.constant 0 : index
    %603 = vector.load %arg8[%c0_194, %c0_195] : memref<1x128xf32, #tpu.memory_space<vmem>>, vector<1x128xf32>
    %604 = vector.broadcast %603 : vector<1x128xf32> to vector<8x128xf32>
    %605 = arith.addf %602, %604 : vector<8x128xf32>
    %c0_196 = arith.constant 0 : index
    %c0_197 = arith.constant 0 : index
    %606 = vector.load %arg9[%c0_196, %c0_197] : memref<8x128xf32, #tpu.memory_space<vmem>>, vector<8x128xf32>
    tpu.vector_store %arg9[%c0_196, %c0_197], %605 {strides = array<i32>} : memref<8x128xf32, #tpu.memory_space<vmem>>, vector<8x128xf32>,
    return
  }
  func.func @transform_0(%arg0: i32) -> (i32, i32, i32) {
    %c0_i32 = arith.constant 0 : i32
    %c0_i32_0 = arith.constant 0 : i32
    %c0_i32_1 = arith.constant 0 : i32
    return %c0_i32, %arg0, %c0_i32_0 : i32, i32, i32
  }
  func.func @transform_1(%arg0: i32) -> (i32, i32) {
    %c0_i32 = arith.constant 0 : i32
    %c0_i32_0 = arith.constant 0 : i32
    %c0_i32_1 = arith.constant 0 : i32
    return %c0_i32, %c0_i32_0 : i32, i32
  }
  func.func @transform_2(%arg0: i32) -> (i32, i32, i32) {
    %c0_i32 = arith.constant 0 : i32
    %c0_i32_0 = arith.constant 0 : i32
    %c0_i32_1 = arith.constant 0 : i32
    %c0_i32_2 = arith.constant 0 : i32
    return %c0_i32, %c0_i32_0, %c0_i32_1 : i32, i32, i32
  }
  func.func @transform_3(%arg0: i32) -> (i32, i32, i32) {
    %c0_i32 = arith.constant 0 : i32
    %c0_i32_0 = arith.constant 0 : i32
    %c0_i32_1 = arith.constant 0 : i32
    %c0_i32_2 = arith.constant 0 : i32
    return %c0_i32, %c0_i32_0, %c0_i32_1 : i32, i32, i32
  }
  func.func @transform_4(%arg0: i32) -> (i32, i32, i32) {
    %c0_i32 = arith.constant 0 : i32
    %c0_i32_0 = arith.constant 0 : i32
    %c0_i32_1 = arith.constant 0 : i32
    %c0_i32_2 = arith.constant 0 : i32
    return %c0_i32, %c0_i32_0, %c0_i32_1 : i32, i32, i32
  }
  func.func @transform_5(%arg0: i32) -> (i32, i32, i32) {
    %c0_i32 = arith.constant 0 : i32
    %c0_i32_0 = arith.constant 0 : i32
    %c0_i32_1 = arith.constant 0 : i32
    %c0_i32_2 = arith.constant 0 : i32
    return %c0_i32, %c0_i32_0, %c0_i32_1 : i32, i32, i32
  }
  func.func @transform_6(%arg0: i32) -> (i32, i32) {
    %c0_i32 = arith.constant 0 : i32
    %c0_i32_0 = arith.constant 0 : i32
    %c0_i32_1 = arith.constant 0 : i32
    return %c0_i32, %c0_i32_0 : i32, i32
  }
  func.func @transform_7(%arg0: i32) -> (i32, i32) {
    %c0_i32 = arith.constant 0 : i32
    %c0_i32_0 = arith.constant 0 : i32
    %c0_i32_1 = arith.constant 0 : i32
    return %c0_i32, %c0_i32_0 : i32, i32
  }
  func.func @transform_8(%arg0: i32) -> (i32, i32) {
    %c0_i32 = arith.constant 0 : i32
    %c0_i32_0 = arith.constant 0 : i32
    return %arg0, %c0_i32 : i32, i32
  }
  func.func @transform_9(%arg0: i32) -> (i32, i32, i32) {
    %c0_i32 = arith.constant 0 : i32
    %c0_i32_0 = arith.constant 0 : i32
    %c0_i32_1 = arith.constant 0 : i32
    return %c0_i32, %arg0, %c0_i32_0 : i32, i32, i32
  }
}

</mosaic_0001>

<llo_original>
// kernel: gru_forward.1
$region0: #{gru_forward.1}
  #allocation0 [shape = 'u32[]', space=smem, size = 0x4, offset = 0x4, fixed_abs, tag = 'smem constant byte address 0x4 - core index']
  #allocation1 [shape = 'u32[144,128]{1,0:T(1,128)}', space=vmem, size = 0x12000, scoped, tag = 'internal scratch']
  #allocation2 [shape = 'bf16[8,8,384]{2,1,0:T(8,128)(2,1)}', space=vmem, size = 0xc000, scoped, tag = 'scratch operand']
  #allocation3 [shape = 'bf16[8,8,128]{2,1,0:T(8,128)(2,1)}', space=vmem, size = 0x4000, scoped, tag = 'scratch operand']
  %s0 = inlined_call_operand.vmem [shape: bf16[8,8,128], index: 0, kind: input, shape index: {}]
  %s1 = inlined_call_operand.vmem [shape: bf16[128,384], index: 1, kind: input, shape index: {}]
  %s2 = inlined_call_operand.vmem [shape: bf16[1,128,384], index: 2, kind: input, shape index: {}]
  %s3 = inlined_call_operand.vmem [shape: bf16[2,128,384], index: 3, kind: input, shape index: {}]
  %s4 = inlined_call_operand.vmem [shape: f32[2,1,384], index: 4, kind: input, shape index: {}]
  %s5 = inlined_call_operand.vmem [shape: f32[2,1,128], index: 5, kind: input, shape index: {}]
  %s6 = inlined_call_operand.vmem [shape: bf16[128,128], index: 6, kind: input, shape index: {}]
  %s7 = inlined_call_operand.vmem [shape: f32[1,128], index: 7, kind: input, shape index: {}]
  %s8 = inlined_call_operand.vmem [shape: f32[8,128], index: 8, kind: output, shape index: {0}]
  %s9 = inlined_call_operand.vmem [shape: f32[2,8,128], index: 9, kind: output, shape index: {1}]
  %10 = xla_tuple %s8, %s9
  %s11 = sld [smem:[#allocation0]]
  $region50: #{gru_forward.1} parent=0
    _
  %s13 = ssub.s32 1, %s11
  %s14 = scalar_select 0, %s13, %s11
  // Predicated region
  $region2: #{gru_forward.1} parent=0 // pred_check
    _
  $region3: #{gru_forward.1} parent=0 // pred_check_branch
    %16 = sbr.rel (0) target = $region5
  $region4: #{gru_forward.1} parent=0 // pred_region
    _
  $region5: #{gru_forward.1} parent=0 // pred_fallthru
    _
  // Predicated region
  $region6: #{gru_forward.1} parent=0 // pred_check
    _
  $region7: #{gru_forward.1} parent=0 // pred_check_branch
    %18 = sbr.rel (0) target = $region9
  $region8: #{gru_forward.1} parent=0 // pred_region
    _
  $region9: #{gru_forward.1} parent=0 // pred_fallthru
    _
  // Predicated region
  $region10: #{gru_forward.1} parent=0 // pred_check
    _
  $region11: #{gru_forward.1} parent=0 // pred_check_branch
    %20 = sbr.rel (0) target = $region13
  $region12: #{gru_forward.1} parent=0 // pred_region
    _
  $region13: #{gru_forward.1} parent=0 // pred_fallthru
    _
  // Predicated region
  $region14: #{gru_forward.1} parent=0 // pred_check
    _
  $region15: #{gru_forward.1} parent=0 // pred_check_branch
    %22 = sbr.rel (0) target = $region17
  $region16: #{gru_forward.1} parent=0 // pred_region
    _
  $region17: #{gru_forward.1} parent=0 // pred_fallthru
    _
  // Predicated region
  $region18: #{gru_forward.1} parent=0 // pred_check
    _
  $region19: #{gru_forward.1} parent=0 // pred_check_branch
    %24 = sbr.rel (0) target = $region21
  $region20: #{gru_forward.1} parent=0 // pred_region
    _
  $region21: #{gru_forward.1} parent=0 // pred_fallthru
    _
  // Predicated region
  $region22: #{gru_forward.1} parent=0 // pred_check
    _
  $region23: #{gru_forward.1} parent=0 // pred_check_branch
    %26 = sbr.rel (0) target = $region25
  $region24: #{gru_forward.1} parent=0 // pred_region
    _
  $region25: #{gru_forward.1} parent=0 // pred_fallthru
    _
  // Predicated region
  $region26: #{gru_forward.1} parent=0 // pred_check
    _
  $region27: #{gru_forward.1} parent=0 // pred_check_branch
    %28 = sbr.rel (0) target = $region29
  $region28: #{gru_forward.1} parent=0 // pred_region
    _
  $region29: #{gru_forward.1} parent=0 // pred_fallthru
    _
  // Predicated region
  $region30: #{gru_forward.1} parent=0 // pred_check
    _
  $region31: #{gru_forward.1} parent=0 // pred_check_branch
    %30 = sbr.rel (0) target = $region33
  $region32: #{gru_forward.1} parent=0 // pred_region
    _
  $region33: #{gru_forward.1} parent=0 // pred_fallthru
    _
  %v32 = vld [vmem:[%s1] sm:$0xff]
  %v33 = vld [vmem:[%s1 + $0x8] sm:$0xf]
  %v34 = vld [vmem:[%s1 + $0xc] sm:$0xff]
  %v35 = vld [vmem:[%s1 + $0x14] sm:$0xf]
  %v36 = vld [vmem:[%s1 + $0x18] sm:$0xff]
  %v37 = vld [vmem:[%s1 + $0x20] sm:$0xf]
  %v38 = vld [vmem:[%s1 + $0x24] sm:$0xff]
  %v39 = vld [vmem:[%s1 + $0x2c] sm:$0xf]
  %v40 = vld [vmem:[%s1 + $0x30] sm:$0xff]
  %v41 = vld [vmem:[%s1 + $0x38] sm:$0xf]
  %v42 = vld [vmem:[%s1 + $0x3c] sm:$0xff]
  %v43 = vld [vmem:[%s1 + $0x44] sm:$0xf]
  %v44 = vld [vmem:[%s1 + $0x48] sm:$0xff]
  %v45 = vld [vmem:[%s1 + $0x50] sm:$0xf]
  %v46 = vld [vmem:[%s1 + $0x54] sm:$0xff]
  %v47 = vld [vmem:[%s1 + $0x5c] sm:$0xf]
  %v48 = vld [vmem:[%s1 + $0x60] sm:$0xff]
  %v49 = vld [vmem:[%s1 + $0x68] sm:$0xf]
  %v50 = vld [vmem:[%s1 + $0x6c] sm:$0xff]
  %v51 = vld [vmem:[%s1 + $0x74] sm:$0xf]
  %v52 = vld [vmem:[%s1 + $0x78] sm:$0xff]
  %v53 = vld [vmem:[%s1 + $0x80] sm:$0xf]
  %v54 = vld [vmem:[%s1 + $0x84] sm:$0xff]
  %v55 = vld [vmem:[%s1 + $0x8c] sm:$0xf]
  %v56 = vld [vmem:[%s1 + $0x90] sm:$0xff]
  %v57 = vld [vmem:[%s1 + $0x98] sm:$0xf]
  %v58 = vld [vmem:[%s1 + $0x9c] sm:$0xff]
  %v59 = vld [vmem:[%s1 + $0xa4] sm:$0xf]
  %v60 = vld [vmem:[%s1 + $0xa8] sm:$0xff]
  %v61 = vld [vmem:[%s1 + $0xb0] sm:$0xf]
  %v62 = vld [vmem:[%s1 + $0xb4] sm:$0xff]
  %v63 = vld [vmem:[%s1 + $0xbc] sm:$0xf]
  %v64 = vld [vmem:[%s4] sm:$0x7]
  %v65 = vld [vmem:[%s0] sm:$0xf]
  %v66 = vld [vmem:[%s0 + $0x4] sm:$0xf]
  %v67 = vld [vmem:[%s0 + $0x8] sm:$0xf]
  %v68 = vld [vmem:[%s0 + $0xc] sm:$0xf]
  %v69 = vld [vmem:[%s0 + $0x10] sm:$0xf]
  %v70 = vld [vmem:[%s0 + $0x14] sm:$0xf]
  %v71 = vld [vmem:[%s0 + $0x18] sm:$0xf]
  %v72 = vld [vmem:[%s0 + $0x1c] sm:$0xf]
  %v74 = vlaneseq
  %v75 = vshrl.u32 %v74, 7
  %v76 = vsub.s32 0, %v75
  %v77 = vrot.slane %v64, %v76
  %v78 = vlaneseq
  %v79 = vshrl.u32 %v78, 7
  %v80 = vsub.s32 1, %v79
  %v81 = vrot.slane %v64, %v80
  %v82 = vlaneseq
  %v83 = vshrl.u32 %v82, 7
  %v84 = vsub.s32 2, %v83
  %v85 = vrot.slane %v64, %v84
  %v97 = vunpack.c.l.b16 %v65
  %v98 = vunpack.c.l.b16 %v66
  %v99 = vunpack.c.l.b16 %v67
  %v100 = vunpack.c.l.b16 %v68
  %v101 = vunpack.c.l.b16 %v69
  %v102 = vunpack.c.l.b16 %v70
  %v103 = vunpack.c.l.b16 %v71
  %v104 = vunpack.c.l.b16 %v72
  %v105 = vpack.c.b16 %v98, %v97
  %v106 = vpack.c.b16 %v100, %v99
  %v107 = vpack.c.b16 %v102, %v101
  %v108 = vpack.c.b16 %v104, %v103
  %v145 = vunpack.c.l.b16 %v32
  %v146 = vunpack.c.h.b16 %v32
  %v147 = vunpack.c.l.b16 %v33
  %v148 = vunpack.c.l.b16 %v34
  %v149 = vunpack.c.h.b16 %v34
  %v150 = vunpack.c.l.b16 %v35
  %v151 = vunpack.c.l.b16 %v36
  %v152 = vunpack.c.h.b16 %v36
  %v153 = vunpack.c.l.b16 %v37
  %v154 = vunpack.c.l.b16 %v38
  %v155 = vunpack.c.h.b16 %v38
  %v156 = vunpack.c.l.b16 %v39
  %v157 = vunpack.c.l.b16 %v40
  %v158 = vunpack.c.h.b16 %v40
  %v159 = vunpack.c.l.b16 %v41
  %v160 = vunpack.c.l.b16 %v42
  %v161 = vunpack.c.h.b16 %v42
  %v162 = vunpack.c.l.b16 %v43
  %v163 = vunpack.c.l.b16 %v44
  %v164 = vunpack.c.h.b16 %v44
  %v165 = vunpack.c.l.b16 %v45
  %v166 = vunpack.c.l.b16 %v46
  %v167 = vunpack.c.h.b16 %v46
  %v168 = vunpack.c.l.b16 %v47
  %v169 = vunpack.c.l.b16 %v48
  %v170 = vunpack.c.h.b16 %v48
  %v171 = vunpack.c.l.b16 %v49
  %v172 = vunpack.c.l.b16 %v50
  %v173 = vunpack.c.h.b16 %v50
  %v174 = vunpack.c.l.b16 %v51
  %v175 = vunpack.c.l.b16 %v52
  %v176 = vunpack.c.h.b16 %v52
  %v177 = vunpack.c.l.b16 %v53
  %v178 = vunpack.c.l.b16 %v54
  %v179 = vunpack.c.h.b16 %v54
  %v180 = vunpack.c.l.b16 %v55
  %v181 = vunpack.c.l.b16 %v56
  %v182 = vunpack.c.h.b16 %v56
  %v183 = vunpack.c.l.b16 %v57
  %v184 = vunpack.c.l.b16 %v58
  %v185 = vunpack.c.h.b16 %v58
  %v186 = vunpack.c.l.b16 %v59
  %v187 = vunpack.c.l.b16 %v60
  %v188 = vunpack.c.h.b16 %v60
  %v189 = vunpack.c.l.b16 %v61
  %v190 = vunpack.c.l.b16 %v62
  %v191 = vunpack.c.h.b16 %v62
  %v192 = vunpack.c.l.b16 %v63
  %v193 = vpack.c.b16 %v148, %v145
  %v194 = vpack.c.b16 %v149, %v146
  %v195 = vpack.c.b16 %v150, %v147
  %v196 = vpack.c.b16 %v154, %v151
  %v197 = vpack.c.b16 %v155, %v152
  %v198 = vpack.c.b16 %v156, %v153
  %v199 = vpack.c.b16 %v160, %v157
  %v200 = vpack.c.b16 %v161, %v158
  %v201 = vpack.c.b16 %v162, %v159
  %v202 = vpack.c.b16 %v166, %v163
  %v203 = vpack.c.b16 %v167, %v164
  %v204 = vpack.c.b16 %v168, %v165
  %v205 = vpack.c.b16 %v172, %v169
  %v206 = vpack.c.b16 %v173, %v170
  %v207 = vpack.c.b16 %v174, %v171
  %v208 = vpack.c.b16 %v178, %v175
  %v209 = vpack.c.b16 %v179, %v176
  %v210 = vpack.c.b16 %v180, %v177
  %v211 = vpack.c.b16 %v184, %v181
  %v212 = vpack.c.b16 %v185, %v182
  %v213 = vpack.c.b16 %v186, %v183
  %v214 = vpack.c.b16 %v190, %v187
  %v215 = vpack.c.b16 %v191, %v188
  %v216 = vpack.c.b16 %v192, %v189
  %241 = vmatprep.subr.bf16.mxu0 %v194
  %242 = vmatpush1.bf16.msra.mxu0 %v193
  %243 = vmatprep.subr.bf16.mxu0 %v197
  %244 = vmatpush1.bf16.msra.mxu0 %v196
  %245 = vmatprep.subr.bf16.mxu0 %v200
  %246 = vmatpush1.bf16.msra.mxu0 %v199
  %247 = vmatprep.subr.bf16.mxu0 %v203
  %248 = vmatpush1.bf16.msra.mxu0 %v202
  %249 = vmatprep.subr.bf16.mxu0 %v206
  %250 = vmatpush1.bf16.msra.mxu0 %v205
  %251 = vmatprep.subr.bf16.mxu0 %v209
  %252 = vmatpush1.bf16.msra.mxu0 %v208
  %253 = vmatprep.subr.bf16.mxu0 %v212
  %254 = vmatpush1.bf16.msra.mxu0 %v211
  %255 = vmatprep.subr.bf16.mxu0 %v215
  %256 = vmatpush1.bf16.msra.mxu0 %v214
  %257 = vmatprep.subr.bf16.mxu0 0
  %258 = vmatpush1.bf16.msra.mxu0 0
  %259 = vmatprep.subr.bf16.mxu0 0
  %260 = vmatpush1.bf16.msra.mxu0 0
  %261 = vmatprep.subr.bf16.mxu0 0
  %262 = vmatpush1.bf16.msra.mxu0 0
  %263 = vmatprep.subr.bf16.mxu0 0
  %264 = vmatpush1.bf16.msra.mxu0 0
  %265 = vmatprep.subr.bf16.mxu0 0
  %266 = vmatpush1.bf16.msra.mxu0 0
  %267 = vmatprep.subr.bf16.mxu0 0
  %268 = vmatpush1.bf16.msra.mxu0 0
  %269 = vmatprep.subr.bf16.mxu0 0
  %270 = vmatpush1.bf16.msra.mxu0 0
  %271 = vmatprep.subr.bf16.mxu0 0
  %272 = vmatpush1.bf16.msra.mxu0 0
  %273 = vmatprep.mubr.bf16.mxu0 0
  %274 = vmatmul.mubr.bf16.gmra.mrb[0].mxu0 %v105
  %v275 = vpop.f32.mrb[0].mxu0
  %v276 = vadd.f32 %v77, %v275
  %v277 = vpop.f32.mrb[0].mxu0
  %v278 = vadd.f32 %v81, %v277
  %v279 = vpop.f32.mrb[0].mxu0
  %v280 = vadd.f32 %v77, %v279
  %v281 = vpop.f32.mrb[0].mxu0
  %v282 = vadd.f32 %v81, %v281
  %283 = vmatprep.mubr.bf16.mxu0 0
  %284 = vmatmul.mubr.bf16.gmra.mrb[0].mxu0 %v106
  %v285 = vpop.f32.mrb[0].mxu0
  %v286 = vadd.f32 %v77, %v285
  %v287 = vpop.f32.mrb[0].mxu0
  %v288 = vadd.f32 %v81, %v287
  %v289 = vpop.f32.mrb[0].mxu0
  %v290 = vadd.f32 %v77, %v289
  %v291 = vpop.f32.mrb[0].mxu0
  %v292 = vadd.f32 %v81, %v291
  %293 = vmatprep.mubr.bf16.mxu0 0
  %294 = vmatmul.mubr.bf16.gmra.mrb[0].mxu0 %v107
  %v295 = vpop.f32.mrb[0].mxu0
  %v296 = vadd.f32 %v77, %v295
  %v297 = vpop.f32.mrb[0].mxu0
  %v298 = vadd.f32 %v81, %v297
  %v299 = vpop.f32.mrb[0].mxu0
  %v300 = vadd.f32 %v77, %v299
  %v301 = vpop.f32.mrb[0].mxu0
  %v302 = vadd.f32 %v81, %v301
  %303 = vmatprep.mubr.bf16.mxu0 0
  %304 = vmatmul.mubr.bf16.gmra.mrb[0].mxu0 %v108
  %v305 = vpop.f32.mrb[0].mxu0
  %v306 = vadd.f32 %v77, %v305
  %v307 = vpop.f32.mrb[0].mxu0
  %v308 = vadd.f32 %v81, %v307
  %v309 = vpop.f32.mrb[0].mxu0
  %v310 = vadd.f32 %v77, %v309
  %v311 = vpop.f32.mrb[0].mxu0
  %v312 = vadd.f32 %v81, %v311
  %313 = vdwg.mxu0
  %314 = vmatprep.subr.bf16.mxu0 0
  %315 = vmatpush1.bf16.msra.mxu0 %v195
  %316 = vmatprep.subr.bf16.mxu0 0
  %317 = vmatpush1.bf16.msra.mxu0 %v198
  %318 = vmatprep.subr.bf16.mxu0 0
  %319 = vmatpush1.bf16.msra.mxu0 %v201
  %320 = vmatprep.subr.bf16.mxu0 0
  %321 = vmatpush1.bf16.msra.mxu0 %v204
  %322 = vmatprep.subr.bf16.mxu0 0
  %323 = vmatpush1.bf16.msra.mxu0 %v207
  %324 = vmatprep.subr.bf16.mxu0 0
  %325 = vmatpush1.bf16.msra.mxu0 %v210
  %326 = vmatprep.subr.bf16.mxu0 0
  %327 = vmatpush1.bf16.msra.mxu0 %v213
  %328 = vmatprep.subr.bf16.mxu0 0
  %329 = vmatpush1.bf16.msra.mxu0 %v216
  %330 = vmatprep.subr.bf16.mxu0 0
  %331 = vmatpush1.bf16.msra.mxu0 0
  %332 = vmatprep.subr.bf16.mxu0 0
  %333 = vmatpush1.bf16.msra.mxu0 0
  %334 = vmatprep.subr.bf16.mxu0 0
  %335 = vmatpush1.bf16.msra.mxu0 0
  %336 = vmatprep.subr.bf16.mxu0 0
  %337 = vmatpush1.bf16.msra.mxu0 0
  %338 = vmatprep.subr.bf16.mxu0 0
  %339 = vmatpush1.bf16.msra.mxu0 0
  %340 = vmatprep.subr.bf16.mxu0 0
  %341 = vmatpush1.bf16.msra.mxu0 0
  %342 = vmatprep.subr.bf16.mxu0 0
  %343 = vmatpush1.bf16.msra.mxu0 0
  %344 = vmatprep.subr.bf16.mxu0 0
  %345 = vmatpush1.bf16.msra.mxu0 0
  %346 = vmatprep.mubr.bf16.mxu0 0
  %347 = vmatmul.mubr.bf16.gmra.mrb[0].mxu0 %v105
  %v348 = vpop.f32.mrb[0].mxu0
  %v349 = vadd.f32 %v85, %v348
  %v350 = vpop.f32.mrb[0].mxu0
  %v351 = vpop.f32.mrb[0].mxu0
  %v352 = vadd.f32 %v85, %v351
  %v353 = vpop.f32.mrb[0].mxu0
  %354 = vmatprep.mubr.bf16.mxu0 0
  %355 = vmatmul.mubr.bf16.gmra.mrb[0].mxu0 %v106
  %v356 = vpop.f32.mrb[0].mxu0
  %v357 = vadd.f32 %v85, %v356
  %v358 = vpop.f32.mrb[0].mxu0
  %v359 = vpop.f32.mrb[0].mxu0
  %v360 = vadd.f32 %v85, %v359
  %v361 = vpop.f32.mrb[0].mxu0
  %362 = vmatprep.mubr.bf16.mxu0 0
  %363 = vmatmul.mubr.bf16.gmra.mrb[0].mxu0 %v107
  %v364 = vpop.f32.mrb[0].mxu0
  %v365 = vadd.f32 %v85, %v364
  %v366 = vpop.f32.mrb[0].mxu0
  %v367 = vpop.f32.mrb[0].mxu0
  %v368 = vadd.f32 %v85, %v367
  %v369 = vpop.f32.mrb[0].mxu0
  %370 = vmatprep.mubr.bf16.mxu0 0
  %371 = vmatmul.mubr.bf16.gmra.mrb[0].mxu0 %v108
  %v372 = vpop.f32.mrb[0].mxu0
  %v373 = vadd.f32 %v85, %v372
  %v374 = vpop.f32.mrb[0].mxu0
  %v375 = vpop.f32.mrb[0].mxu0
  %v376 = vadd.f32 %v85, %v375
  %v377 = vpop.f32.mrb[0].mxu0
  %378 = vdwg.mxu0
  %v379 = vpack.c.bf16 %v280, %v276
  %v380 = vpack.c.bf16 %v282, %v278
  %v381 = vpack.c.bf16 %v352, %v349
  %v382 = vpack.c.bf16 %v290, %v286
  %v383 = vpack.c.bf16 %v292, %v288
  %v384 = vpack.c.bf16 %v360, %v357
  %v385 = vpack.c.bf16 %v300, %v296
  %v386 = vpack.c.bf16 %v302, %v298
  %v387 = vpack.c.bf16 %v368, %v365
  %v388 = vpack.c.bf16 %v310, %v306
  %v389 = vpack.c.bf16 %v312, %v308
  %v390 = vpack.c.bf16 %v376, %v373
  %v403 = vunpack.c.l.b16 %v379
  %v404 = vunpack.c.l.b16 %v380
  %v405 = vunpack.c.l.b16 %v381
  %v406 = vunpack.c.h.b16 %v379
  %v407 = vunpack.c.h.b16 %v380
  %v408 = vunpack.c.h.b16 %v381
  %v409 = vunpack.c.l.b16 %v382
  %v410 = vunpack.c.l.b16 %v383
  %v411 = vunpack.c.l.b16 %v384
  %v412 = vunpack.c.h.b16 %v382
  %v413 = vunpack.c.h.b16 %v383
  %v414 = vunpack.c.h.b16 %v384
  %v415 = vunpack.c.l.b16 %v385
  %v416 = vunpack.c.l.b16 %v386
  %v417 = vunpack.c.l.b16 %v387
  %v418 = vunpack.c.h.b16 %v385
  %v419 = vunpack.c.h.b16 %v386
  %v420 = vunpack.c.h.b16 %v387
  %v421 = vunpack.c.l.b16 %v388
  %v422 = vunpack.c.l.b16 %v389
  %v423 = vunpack.c.l.b16 %v390
  %v424 = vunpack.c.h.b16 %v388
  %v425 = vunpack.c.h.b16 %v389
  %v426 = vunpack.c.h.b16 %v390
  %v427 = vpack.c.b16 %v404, %v403
  %v428 = vpack.c.b16 %v405, %v405
  %v429 = vpack.c.b16 %v407, %v406
  %v430 = vpack.c.b16 %v408, %v408
  %v431 = vpack.c.b16 %v410, %v409
  %v432 = vpack.c.b16 %v411, %v411
  %v433 = vpack.c.b16 %v413, %v412
  %v434 = vpack.c.b16 %v414, %v414
  %v435 = vpack.c.b16 %v416, %v415
  %v436 = vpack.c.b16 %v417, %v417
  %v437 = vpack.c.b16 %v419, %v418
  %v438 = vpack.c.b16 %v420, %v420
  %v439 = vpack.c.b16 %v422, %v421
  %v440 = vpack.c.b16 %v423, %v423
  %v441 = vpack.c.b16 %v425, %v424
  %v442 = vpack.c.b16 %v426, %v426
  %459 = vst [vmem:[#allocation2] sm:$0xff] %v427
  %460 = vst [vmem:[#allocation2 + $0x8] sm:$0xf] %v428
  %461 = vst [vmem:[#allocation2 + $0xc] sm:$0xff] %v429
  %462 = vst [vmem:[#allocation2 + $0x14] sm:$0xf] %v430
  %463 = vst [vmem:[#allocation2 + $0x18] sm:$0xff] %v431
  %464 = vst [vmem:[#allocation2 + $0x20] sm:$0xf] %v432
  %465 = vst [vmem:[#allocation2 + $0x24] sm:$0xff] %v433
  %466 = vst [vmem:[#allocation2 + $0x2c] sm:$0xf] %v434
  %467 = vst [vmem:[#allocation2 + $0x30] sm:$0xff] %v435
  %468 = vst [vmem:[#allocation2 + $0x38] sm:$0xf] %v436
  %469 = vst [vmem:[#allocation2 + $0x3c] sm:$0xff] %v437
  %470 = vst [vmem:[#allocation2 + $0x44] sm:$0xf] %v438
  %471 = vst [vmem:[#allocation2 + $0x48] sm:$0xff] %v439
  %472 = vst [vmem:[#allocation2 + $0x50] sm:$0xf] %v440
  %473 = vst [vmem:[#allocation2 + $0x54] sm:$0xff] %v441
  %474 = vst [vmem:[#allocation2 + $0x5c] sm:$0xf] %v442
  %v475 = vld [vmem:[%s5] sm:$0x1]
  %v477 = vlaneseq
  %v478 = vshrl.u32 %v477, 7
  %v479 = vsub.s32 0, %v478
  %v480 = vrot.slane %v475, %v479
  %v482 = vld [vmem:[#allocation2] sm:$0xff]
  %v483 = vld [vmem:[#allocation2 + $0x8] sm:$0xf]
  %v484 = vunpack.c.l.bf16 %v482
  %v485 = vunpack.c.h.bf16 %v482
  %v486 = vunpack.c.l.bf16 %v483
  %v487 = vld [vmem:[%s3] sm:$0xff]
  %v488 = vld [vmem:[%s3 + $0x8] sm:$0xf]
  %v489 = vld [vmem:[%s3 + $0xc] sm:$0xff]
  %v490 = vld [vmem:[%s3 + $0x14] sm:$0xf]
  %v491 = vld [vmem:[%s3 + $0x18] sm:$0xff]
  %v492 = vld [vmem:[%s3 + $0x20] sm:$0xf]
  %v493 = vld [vmem:[%s3 + $0x24] sm:$0xff]
  %v494 = vld [vmem:[%s3 + $0x2c] sm:$0xf]
  %v495 = vld [vmem:[%s3 + $0x30] sm:$0xff]
  %v496 = vld [vmem:[%s3 + $0x38] sm:$0xf]
  %v497 = vld [vmem:[%s3 + $0x3c] sm:$0xff]
  %v498 = vld [vmem:[%s3 + $0x44] sm:$0xf]
  %v499 = vld [vmem:[%s3 + $0x48] sm:$0xff]
  %v500 = vld [vmem:[%s3 + $0x50] sm:$0xf]
  %v501 = vld [vmem:[%s3 + $0x54] sm:$0xff]
  %v502 = vld [vmem:[%s3 + $0x5c] sm:$0xf]
  %v503 = vld [vmem:[%s3 + $0x60] sm:$0xff]
  %v504 = vld [vmem:[%s3 + $0x68] sm:$0xf]
  %v505 = vld [vmem:[%s3 + $0x6c] sm:$0xff]
  %v506 = vld [vmem:[%s3 + $0x74] sm:$0xf]
  %v507 = vld [vmem:[%s3 + $0x78] sm:$0xff]
  %v508 = vld [vmem:[%s3 + $0x80] sm:$0xf]
  %v509 = vld [vmem:[%s3 + $0x84] sm:$0xff]
  %v510 = vld [vmem:[%s3 + $0x8c] sm:$0xf]
  %v511 = vld [vmem:[%s3 + $0x90] sm:$0xff]
  %v512 = vld [vmem:[%s3 + $0x98] sm:$0xf]
  %v513 = vld [vmem:[%s3 + $0x9c] sm:$0xff]
  %v514 = vld [vmem:[%s3 + $0xa4] sm:$0xf]
  %v515 = vld [vmem:[%s3 + $0xa8] sm:$0xff]
  %v516 = vld [vmem:[%s3 + $0xb0] sm:$0xf]
  %v517 = vld [vmem:[%s3 + $0xb4] sm:$0xff]
  %v518 = vld [vmem:[%s3 + $0xbc] sm:$0xf]
  %v551 = vunpack.c.l.b16 %v487
  %v552 = vunpack.c.h.b16 %v487
  %v553 = vunpack.c.l.b16 %v488
  %v554 = vunpack.c.l.b16 %v489
  %v555 = vunpack.c.h.b16 %v489
  %v556 = vunpack.c.l.b16 %v490
  %v557 = vunpack.c.l.b16 %v491
  %v558 = vunpack.c.h.b16 %v491
  %v559 = vunpack.c.l.b16 %v492
  %v560 = vunpack.c.l.b16 %v493
  %v561 = vunpack.c.h.b16 %v493
  %v562 = vunpack.c.l.b16 %v494
  %v563 = vunpack.c.l.b16 %v495
  %v564 = vunpack.c.h.b16 %v495
  %v565 = vunpack.c.l.b16 %v496
  %v566 = vunpack.c.l.b16 %v497
  %v567 = vunpack.c.h.b16 %v497
  %v568 = vunpack.c.l.b16 %v498
  %v569 = vunpack.c.l.b16 %v499
  %v570 = vunpack.c.h.b16 %v499
  %v571 = vunpack.c.l.b16 %v500
  %v572 = vunpack.c.l.b16 %v501
  %v573 = vunpack.c.h.b16 %v501
  %v574 = vunpack.c.l.b16 %v502
  %v575 = vunpack.c.l.b16 %v503
  %v576 = vunpack.c.h.b16 %v503
  %v577 = vunpack.c.l.b16 %v504
  %v578 = vunpack.c.l.b16 %v505
  %v579 = vunpack.c.h.b16 %v505
  %v580 = vunpack.c.l.b16 %v506
  %v581 = vunpack.c.l.b16 %v507
  %v582 = vunpack.c.h.b16 %v507
  %v583 = vunpack.c.l.b16 %v508
  %v584 = vunpack.c.l.b16 %v509
  %v585 = vunpack.c.h.b16 %v509
  %v586 = vunpack.c.l.b16 %v510
  %v587 = vunpack.c.l.b16 %v511
  %v588 = vunpack.c.h.b16 %v511
  %v589 = vunpack.c.l.b16 %v512
  %v590 = vunpack.c.l.b16 %v513
  %v591 = vunpack.c.h.b16 %v513
  %v592 = vunpack.c.l.b16 %v514
  %v593 = vunpack.c.l.b16 %v515
  %v594 = vunpack.c.h.b16 %v515
  %v595 = vunpack.c.l.b16 %v516
  %v596 = vunpack.c.l.b16 %v517
  %v597 = vunpack.c.h.b16 %v517
  %v598 = vunpack.c.l.b16 %v518
  %v599 = vpack.c.b16 %v554, %v551
  %v600 = vpack.c.b16 %v555, %v552
  %v601 = vpack.c.b16 %v556, %v553
  %v602 = vpack.c.b16 %v560, %v557
  %v603 = vpack.c.b16 %v561, %v558
  %v604 = vpack.c.b16 %v562, %v559
  %v605 = vpack.c.b16 %v566, %v563
  %v606 = vpack.c.b16 %v567, %v564
  %v607 = vpack.c.b16 %v568, %v565
  %v608 = vpack.c.b16 %v572, %v569
  %v609 = vpack.c.b16 %v573, %v570
  %v610 = vpack.c.b16 %v574, %v571
  %v611 = vpack.c.b16 %v578, %v575
  %v612 = vpack.c.b16 %v579, %v576
  %v613 = vpack.c.b16 %v580, %v577
  %v614 = vpack.c.b16 %v584, %v581
  %v615 = vpack.c.b16 %v585, %v582
  %v616 = vpack.c.b16 %v586, %v583
  %v617 = vpack.c.b16 %v590, %v587
  %v618 = vpack.c.b16 %v591, %v588
  %v619 = vpack.c.b16 %v592, %v589
  %v620 = vpack.c.b16 %v596, %v593
  %v621 = vpack.c.b16 %v597, %v594
  %v622 = vpack.c.b16 %v598, %v595
  %647 = vmatprep.subr.bf16.mxu0 %v600
  %648 = vmatpush1.bf16.msra.mxu0 %v599
  %649 = vmatprep.subr.bf16.mxu0 %v603
  %650 = vmatpush1.bf16.msra.mxu0 %v602
  %651 = vmatprep.subr.bf16.mxu0 %v606
  %652 = vmatpush1.bf16.msra.mxu0 %v605
  %653 = vmatprep.subr.bf16.mxu0 %v609
  %654 = vmatpush1.bf16.msra.mxu0 %v608
  %655 = vmatprep.subr.bf16.mxu0 %v612
  %656 = vmatpush1.bf16.msra.mxu0 %v611
  %657 = vmatprep.subr.bf16.mxu0 %v615
  %658 = vmatpush1.bf16.msra.mxu0 %v614
  %659 = vmatprep.subr.bf16.mxu0 %v618
  %660 = vmatpush1.bf16.msra.mxu0 %v617
  %661 = vmatprep.subr.bf16.mxu0 %v621
  %662 = vmatpush1.bf16.msra.mxu0 %v620
  %663 = vmatprep.subr.bf16.mxu0 0
  %664 = vmatpush1.bf16.msra.mxu0 0
  %665 = vmatprep.subr.bf16.mxu0 0
  %666 = vmatpush1.bf16.msra.mxu0 0
  %667 = vmatprep.subr.bf16.mxu0 0
  %668 = vmatpush1.bf16.msra.mxu0 0
  %669 = vmatprep.subr.bf16.mxu0 0
  %670 = vmatpush1.bf16.msra.mxu0 0
  %671 = vmatprep.subr.bf16.mxu0 0
  %672 = vmatpush1.bf16.msra.mxu0 0
  %673 = vmatprep.subr.bf16.mxu0 0
  %674 = vmatpush1.bf16.msra.mxu0 0
  %675 = vmatprep.subr.bf16.mxu0 0
  %676 = vmatpush1.bf16.msra.mxu0 0
  %677 = vmatprep.subr.bf16.mxu0 0
  %678 = vmatpush1.bf16.msra.mxu0 0
  %679 = vmatprep.mubr.bf16.mxu0 0
  %680 = vmatmul.mubr.bf16.gmra.mrb[0].mxu0 0
  %v681 = vpop.f32.mrb[0].mxu0
  %v682 = vadd.f32 0.0, %v681
  %v683 = vpop.f32.mrb[0].mxu0
  %v684 = vadd.f32 0.0, %v683
  %v685 = vpop.f32.mrb[0].mxu0
  %v686 = vpop.f32.mrb[0].mxu0
  %687 = vdwg.mxu0
  %688 = vmatprep.subr.bf16.mxu0 0
  %689 = vmatpush1.bf16.msra.mxu0 %v601
  %690 = vmatprep.subr.bf16.mxu0 0
  %691 = vmatpush1.bf16.msra.mxu0 %v604
  %692 = vmatprep.subr.bf16.mxu0 0
  %693 = vmatpush1.bf16.msra.mxu0 %v607
  %694 = vmatprep.subr.bf16.mxu0 0
  %695 = vmatpush1.bf16.msra.mxu0 %v610
  %696 = vmatprep.subr.bf16.mxu0 0
  %697 = vmatpush1.bf16.msra.mxu0 %v613
  %698 = vmatprep.subr.bf16.mxu0 0
  %699 = vmatpush1.bf16.msra.mxu0 %v616
  %700 = vmatprep.subr.bf16.mxu0 0
  %701 = vmatpush1.bf16.msra.mxu0 %v619
  %702 = vmatprep.subr.bf16.mxu0 0
  %703 = vmatpush1.bf16.msra.mxu0 %v622
  %704 = vmatprep.subr.bf16.mxu0 0
  %705 = vmatpush1.bf16.msra.mxu0 0
  %706 = vmatprep.subr.bf16.mxu0 0
  %707 = vmatpush1.bf16.msra.mxu0 0
  %708 = vmatprep.subr.bf16.mxu0 0
  %709 = vmatpush1.bf16.msra.mxu0 0
  %710 = vmatprep.subr.bf16.mxu0 0
  %711 = vmatpush1.bf16.msra.mxu0 0
  %712 = vmatprep.subr.bf16.mxu0 0
  %713 = vmatpush1.bf16.msra.mxu0 0
  %714 = vmatprep.subr.bf16.mxu0 0
  %715 = vmatpush1.bf16.msra.mxu0 0
  %716 = vmatprep.subr.bf16.mxu0 0
  %717 = vmatpush1.bf16.msra.mxu0 0
  %718 = vmatprep.subr.bf16.mxu0 0
  %719 = vmatpush1.bf16.msra.mxu0 0
  %720 = vmatprep.mubr.bf16.mxu0 0
  %721 = vmatmul.mubr.bf16.gmra.mrb[0].mxu0 0
  %v722 = vpop.f32.mrb[0].mxu0
  %v723 = vadd.f32 0.0, %v722
  %v724 = vpop.f32.mrb[0].mxu0
  %v725 = vpop.f32.mrb[0].mxu0
  %v726 = vpop.f32.mrb[0].mxu0
  %727 = vdwg.mxu0
  %v728 = vadd.f32 %v484, %v682
  %v729 = vxor.u32 %v728, 2147483648
  %v730 = vmul.f32 %v729, 1.442695
  %v731 = vpow.pop %v730
  %v732 = vadd.f32 %v731, 1.0
  %v733 = vrcp.pop %v732
  %v734 = vmul.f32 1.0, %v733
  %v735 = vadd.f32 %v485, %v684
  %v736 = vxor.u32 %v735, 2147483648
  %v737 = vmul.f32 %v736, 1.442695
  %v738 = vpow.pop %v737
  %v739 = vadd.f32 %v738, 1.0
  %v740 = vrcp.pop %v739
  %v741 = vmul.f32 1.0, %v740
  %v742 = vadd.f32 %v723, %v480
  %v743 = vmul.f32 %v734, %v742
  %v744 = vadd.f32 %v486, %v743
  %v745 = vtanh.pop %v744
  %v746 = vsub.f32 0.0, %v745
  %v747 = vmul.f32 %v741, %v746
  %v748 = vadd.f32 %v745, %v747
  %v749 = vpack.c.bf16 %v748, %v748
  %750 = vst [vmem:[#allocation3] sm:$0xf] %v749
  %s751 = scalar_lea.vmem [#allocation2], 12
  %v752 = vld [vmem:[%s751] sm:$0xff]
  %v753 = vld [vmem:[%s751 + $0x8] sm:$0xf]
  %v754 = vunpack.c.l.bf16 %v752
  %v755 = vunpack.c.h.bf16 %v752
  %v756 = vunpack.c.l.bf16 %v753
  %v757 = vld [vmem:[%s3] sm:$0xff]
  %v758 = vld [vmem:[%s3 + $0x8] sm:$0xf]
  %v759 = vld [vmem:[%s3 + $0xc] sm:$0xff]
  %v760 = vld [vmem:[%s3 + $0x14] sm:$0xf]
  %v761 = vld [vmem:[%s3 + $0x18] sm:$0xff]
  %v762 = vld [vmem:[%s3 + $0x20] sm:$0xf]
  %v763 = vld [vmem:[%s3 + $0x24] sm:$0xff]
  %v764 = vld [vmem:[%s3 + $0x2c] sm:$0xf]
  %v765 = vld [vmem:[%s3 + $0x30] sm:$0xff]
  %v766 = vld [vmem:[%s3 + $0x38] sm:$0xf]
  %v767 = vld [vmem:[%s3 + $0x3c] sm:$0xff]
  %v768 = vld [vmem:[%s3 + $0x44] sm:$0xf]
  %v769 = vld [vmem:[%s3 + $0x48] sm:$0xff]
  %v770 = vld [vmem:[%s3 + $0x50] sm:$0xf]
  %v771 = vld [vmem:[%s3 + $0x54] sm:$0xff]
  %v772 = vld [vmem:[%s3 + $0x5c] sm:$0xf]
  %v773 = vld [vmem:[%s3 + $0x60] sm:$0xff]
  %v774 = vld [vmem:[%s3 + $0x68] sm:$0xf]
  %v775 = vld [vmem:[%s3 + $0x6c] sm:$0xff]
  %v776 = vld [vmem:[%s3 + $0x74] sm:$0xf]
  %v777 = vld [vmem:[%s3 + $0x78] sm:$0xff]
  %v778 = vld [vmem:[%s3 + $0x80] sm:$0xf]
  %v779 = vld [vmem:[%s3 + $0x84] sm:$0xff]
  %v780 = vld [vmem:[%s3 + $0x8c] sm:$0xf]
  %v781 = vld [vmem:[%s3 + $0x90] sm:$0xff]
  %v782 = vld [vmem:[%s3 + $0x98] sm:$0xf]
  %v783 = vld [vmem:[%s3 + $0x9c] sm:$0xff]
  %v784 = vld [vmem:[%s3 + $0xa4] sm:$0xf]
  %v785 = vld [vmem:[%s3 + $0xa8] sm:$0xff]
  %v786 = vld [vmem:[%s3 + $0xb0] sm:$0xf]
  %v787 = vld [vmem:[%s3 + $0xb4] sm:$0xff]
  %v788 = vld [vmem:[%s3 + $0xbc] sm:$0xf]
  %v821 = vunpack.c.l.b16 %v757
  %v822 = vunpack.c.h.b16 %v757
  %v823 = vunpack.c.l.b16 %v758
  %v824 = vunpack.c.l.b16 %v759
  %v825 = vunpack.c.h.b16 %v759
  %v826 = vunpack.c.l.b16 %v760
  %v827 = vunpack.c.l.b16 %v761
  %v828 = vunpack.c.h.b16 %v761
  %v829 = vunpack.c.l.b16 %v762
  %v830 = vunpack.c.l.b16 %v763
  %v831 = vunpack.c.h.b16 %v763
  %v832 = vunpack.c.l.b16 %v764
  %v833 = vunpack.c.l.b16 %v765
  %v834 = vunpack.c.h.b16 %v765
  %v835 = vunpack.c.l.b16 %v766
  %v836 = vunpack.c.l.b16 %v767
  %v837 = vunpack.c.h.b16 %v767
  %v838 = vunpack.c.l.b16 %v768
  %v839 = vunpack.c.l.b16 %v769
  %v840 = vunpack.c.h.b16 %v769
  %v841 = vunpack.c.l.b16 %v770
  %v842 = vunpack.c.l.b16 %v771
  %v843 = vunpack.c.h.b16 %v771
  %v844 = vunpack.c.l.b16 %v772
  %v845 = vunpack.c.l.b16 %v773
  %v846 = vunpack.c.h.b16 %v773
  %v847 = vunpack.c.l.b16 %v774
  %v848 = vunpack.c.l.b16 %v775
  %v849 = vunpack.c.h.b16 %v775
  %v850 = vunpack.c.l.b16 %v776
  %v851 = vunpack.c.l.b16 %v777
  %v852 = vunpack.c.h.b16 %v777
  %v853 = vunpack.c.l.b16 %v778
  %v854 = vunpack.c.l.b16 %v779
  %v855 = vunpack.c.h.b16 %v779
  %v856 = vunpack.c.l.b16 %v780
  %v857 = vunpack.c.l.b16 %v781
  %v858 = vunpack.c.h.b16 %v781
  %v859 = vunpack.c.l.b16 %v782
  %v860 = vunpack.c.l.b16 %v783
  %v861 = vunpack.c.h.b16 %v783
  %v862 = vunpack.c.l.b16 %v784
  %v863 = vunpack.c.l.b16 %v785
  %v864 = vunpack.c.h.b16 %v785
  %v865 = vunpack.c.l.b16 %v786
  %v866 = vunpack.c.l.b16 %v787
  %v867 = vunpack.c.h.b16 %v787
  %v868 = vunpack.c.l.b16 %v788
  %v869 = vpack.c.b16 %v824, %v821
  %v870 = vpack.c.b16 %v825, %v822
  %v871 = vpack.c.b16 %v826, %v823
  %v872 = vpack.c.b16 %v830, %v827
  %v873 = vpack.c.b16 %v831, %v828
  %v874 = vpack.c.b16 %v832, %v829
  %v875 = vpack.c.b16 %v836, %v833
  %v876 = vpack.c.b16 %v837, %v834
  %v877 = vpack.c.b16 %v838, %v835
  %v878 = vpack.c.b16 %v842, %v839
  %v879 = vpack.c.b16 %v843, %v840
  %v880 = vpack.c.b16 %v844, %v841
  %v881 = vpack.c.b16 %v848, %v845
  %v882 = vpack.c.b16 %v849, %v846
  %v883 = vpack.c.b16 %v850, %v847
  %v884 = vpack.c.b16 %v854, %v851
  %v885 = vpack.c.b16 %v855, %v852
  %v886 = vpack.c.b16 %v856, %v853
  %v887 = vpack.c.b16 %v860, %v857
  %v888 = vpack.c.b16 %v861, %v858
  %v889 = vpack.c.b16 %v862, %v859
  %v890 = vpack.c.b16 %v866, %v863
  %v891 = vpack.c.b16 %v867, %v864
  %v892 = vpack.c.b16 %v868, %v865
  %917 = vmatprep.subr.bf16.mxu0 %v870
  %918 = vmatpush1.bf16.msra.mxu0 %v869
  %919 = vmatprep.subr.bf16.mxu0 %v873
  %920 = vmatpush1.bf16.msra.mxu0 %v872
  %921 = vmatprep.subr.bf16.mxu0 %v876
  %922 = vmatpush1.bf16.msra.mxu0 %v875
  %923 = vmatprep.subr.bf16.mxu0 %v879
  %924 = vmatpush1.bf16.msra.mxu0 %v878
  %925 = vmatprep.subr.bf16.mxu0 %v882
  %926 = vmatpush1.bf16.msra.mxu0 %v881
  %927 = vmatprep.subr.bf16.mxu0 %v885
  %928 = vmatpush1.bf16.msra.mxu0 %v884
  %929 = vmatprep.subr.bf16.mxu0 %v888
  %930 = vmatpush1.bf16.msra.mxu0 %v887
  %931 = vmatprep.subr.bf16.mxu0 %v891
  %932 = vmatpush1.bf16.msra.mxu0 %v890
  %933 = vmatprep.subr.bf16.mxu0 0
  %934 = vmatpush1.bf16.msra.mxu0 0
  %935 = vmatprep.subr.bf16.mxu0 0
  %936 = vmatpush1.bf16.msra.mxu0 0
  %937 = vmatprep.subr.bf16.mxu0 0
  %938 = vmatpush1.bf16.msra.mxu0 0
  %939 = vmatprep.subr.bf16.mxu0 0
  %940 = vmatpush1.bf16.msra.mxu0 0
  %941 = vmatprep.subr.bf16.mxu0 0
  %942 = vmatpush1.bf16.msra.mxu0 0
  %943 = vmatprep.subr.bf16.mxu0 0
  %944 = vmatpush1.bf16.msra.mxu0 0
  %945 = vmatprep.subr.bf16.mxu0 0
  %946 = vmatpush1.bf16.msra.mxu0 0
  %947 = vmatprep.subr.bf16.mxu0 0
  %948 = vmatpush1.bf16.msra.mxu0 0
  %949 = vmatprep.mubr.bf16.mxu0 0
  %950 = vmatmul.mubr.bf16.gmra.mrb[0].mxu0 %v749
  %v951 = vpop.f32.mrb[0].mxu0
  %v952 = vadd.f32 0.0, %v951
  %v953 = vpop.f32.mrb[0].mxu0
  %v954 = vadd.f32 0.0, %v953
  %v955 = vpop.f32.mrb[0].mxu0
  %v956 = vpop.f32.mrb[0].mxu0
  %957 = vdwg.mxu0
  %958 = vmatprep.subr.bf16.mxu0 0
  %959 = vmatpush1.bf16.msra.mxu0 %v871
  %960 = vmatprep.subr.bf16.mxu0 0
  %961 = vmatpush1.bf16.msra.mxu0 %v874
  %962 = vmatprep.subr.bf16.mxu0 0
  %963 = vmatpush1.bf16.msra.mxu0 %v877
  %964 = vmatprep.subr.bf16.mxu0 0
  %965 = vmatpush1.bf16.msra.mxu0 %v880
  %966 = vmatprep.subr.bf16.mxu0 0
  %967 = vmatpush1.bf16.msra.mxu0 %v883
  %968 = vmatprep.subr.bf16.mxu0 0
  %969 = vmatpush1.bf16.msra.mxu0 %v886
  %970 = vmatprep.subr.bf16.mxu0 0
  %971 = vmatpush1.bf16.msra.mxu0 %v889
  %972 = vmatprep.subr.bf16.mxu0 0
  %973 = vmatpush1.bf16.msra.mxu0 %v892
  %974 = vmatprep.subr.bf16.mxu0 0
  %975 = vmatpush1.bf16.msra.mxu0 0
  %976 = vmatprep.subr.bf16.mxu0 0
  %977 = vmatpush1.bf16.msra.mxu0 0
  %978 = vmatprep.subr.bf16.mxu0 0
  %979 = vmatpush1.bf16.msra.mxu0 0
  %980 = vmatprep.subr.bf16.mxu0 0
  %981 = vmatpush1.bf16.msra.mxu0 0
  %982 = vmatprep.subr.bf16.mxu0 0
  %983 = vmatpush1.bf16.msra.mxu0 0
  %984 = vmatprep.subr.bf16.mxu0 0
  %985 = vmatpush1.bf16.msra.mxu0 0
  %986 = vmatprep.subr.bf16.mxu0 0
  %987 = vmatpush1.bf16.msra.mxu0 0
  %988 = vmatprep.subr.bf16.mxu0 0
  %989 = vmatpush1.bf16.msra.mxu0 0
  %990 = vmatprep.mubr.bf16.mxu0 0
  %991 = vmatmul.mubr.bf16.gmra.mrb[0].mxu0 %v749
  %v992 = vpop.f32.mrb[0].mxu0
  %v993 = vadd.f32 0.0, %v992
  %v994 = vpop.f32.mrb[0].mxu0
  %v995 = vpop.f32.mrb[0].mxu0
  %v996 = vpop.f32.mrb[0].mxu0
  %997 = vdwg.mxu0
  %v998 = vadd.f32 %v754, %v952
  %v999 = vxor.u32 %v998, 2147483648
  %v1000 = vmul.f32 %v999, 1.442695
  %v1001 = vpow.pop %v1000
  %v1002 = vadd.f32 %v1001, 1.0
  %v1003 = vrcp.pop %v1002
  %v1004 = vmul.f32 1.0, %v1003
  %v1005 = vadd.f32 %v755, %v954
  %v1006 = vxor.u32 %v1005, 2147483648
  %v1007 = vmul.f32 %v1006, 1.442695
  %v1008 = vpow.pop %v1007
  %v1009 = vadd.f32 %v1008, 1.0
  %v1010 = vrcp.pop %v1009
  %v1011 = vmul.f32 1.0, %v1010
  %v1012 = vadd.f32 %v993, %v480
  %v1013 = vmul.f32 %v1004, %v1012
  %v1014 = vadd.f32 %v756, %v1013
  %v1015 = vtanh.pop %v1014
  %v1016 = vsub.f32 %v748, %v1015
  %v1017 = vmul.f32 %v1011, %v1016
  %v1018 = vadd.f32 %v1015, %v1017
  %v1019 = vpack.c.bf16 %v1018, %v1018
  %s1020 = scalar_lea.vmem [#allocation3], 4
  %1021 = vst [vmem:[%s1020] sm:$0xf] %v1019
  %s1022 = scalar_lea.vmem [#allocation2], 24
  %v1023 = vld [vmem:[%s1022] sm:$0xff]
  %v1024 = vld [vmem:[%s1022 + $0x8] sm:$0xf]
  %v1025 = vunpack.c.l.bf16 %v1023
  %v1026 = vunpack.c.h.bf16 %v1023
  %v1027 = vunpack.c.l.bf16 %v1024
  %v1028 = vld [vmem:[%s3] sm:$0xff]
  %v1029 = vld [vmem:[%s3 + $0x8] sm:$0xf]
  %v1030 = vld [vmem:[%s3 + $0xc] sm:$0xff]
  %v1031 = vld [vmem:[%s3 + $0x14] sm:$0xf]
  %v1032 = vld [vmem:[%s3 + $0x18] sm:$0xff]
  %v1033 = vld [vmem:[%s3 + $0x20] sm:$0xf]
  %v1034 = vld [vmem:[%s3 + $0x24] sm:$0xff]
  %v1035 = vld [vmem:[%s3 + $0x2c] sm:$0xf]
  %v1036 = vld [vmem:[%s3 + $0x30] sm:$0xff]
  %v1037 = vld [vmem:[%s3 + $0x38] sm:$0xf]
  %v1038 = vld [vmem:[%s3 + $0x3c] sm:$0xff]
  %v1039 = vld [vmem:[%s3 + $0x44] sm:$0xf]
  %v1040 = vld [vmem:[%s3 + $0x48] sm:$0xff]
  %v1041 = vld [vmem:[%s3 + $0x50] sm:$0xf]
  %v1042 = vld [vmem:[%s3 + $0x54] sm:$0xff]
  %v1043 = vld [vmem:[%s3 + $0x5c] sm:$0xf]
  %v1044 = vld [vmem:[%s3 + $0x60] sm:$0xff]
  %v1045 = vld [vmem:[%s3 + $0x68] sm:$0xf]
  %v1046 = vld [vmem:[%s3 + $0x6c] sm:$0xff]
  %v1047 = vld [vmem:[%s3 + $0x74] sm:$0xf]
  %v1048 = vld [vmem:[%s3 + $0x78] sm:$0xff]
  %v1049 = vld [vmem:[%s3 + $0x80] sm:$0xf]
  %v1050 = vld [vmem:[%s3 + $0x84] sm:$0xff]
  %v1051 = vld [vmem:[%s3 + $0x8c] sm:$0xf]
  %v1052 = vld [vmem:[%s3 + $0x90] sm:$0xff]
  %v1053 = vld [vmem:[%s3 + $0x98] sm:$0xf]
  %v1054 = vld [vmem:[%s3 + $0x9c] sm:$0xff]
  %v1055 = vld [vmem:[%s3 + $0xa4] sm:$0xf]
  %v1056 = vld [vmem:[%s3 + $0xa8] sm:$0xff]
  %v1057 = vld [vmem:[%s3 + $0xb0] sm:$0xf]
  %v1058 = vld [vmem:[%s3 + $0xb4] sm:$0xff]
  %v1059 = vld [vmem:[%s3 + $0xbc] sm:$0xf]
  %v1092 = vunpack.c.l.b16 %v1028
  %v1093 = vunpack.c.h.b16 %v1028
  %v1094 = vunpack.c.l.b16 %v1029
  %v1095 = vunpack.c.l.b16 %v1030
  %v1096 = vunpack.c.h.b16 %v1030
  %v1097 = vunpack.c.l.b16 %v1031
  %v1098 = vunpack.c.l.b16 %v1032
  %v1099 = vunpack.c.h.b16 %v1032
  %v1100 = vunpack.c.l.b16 %v1033
  %v1101 = vunpack.c.l.b16 %v1034
  %v1102 = vunpack.c.h.b16 %v1034
  %v1103 = vunpack.c.l.b16 %v1035
  %v1104 = vunpack.c.l.b16 %v1036
  %v1105 = vunpack.c.h.b16 %v1036
  %v1106 = vunpack.c.l.b16 %v1037
  %v1107 = vunpack.c.l.b16 %v1038
  %v1108 = vunpack.c.h.b16 %v1038
  %v1109 = vunpack.c.l.b16 %v1039
  %v1110 = vunpack.c.l.b16 %v1040
  %v1111 = vunpack.c.h.b16 %v1040
  %v1112 = vunpack.c.l.b16 %v1041
  %v1113 = vunpack.c.l.b16 %v1042
  %v1114 = vunpack.c.h.b16 %v1042
  %v1115 = vunpack.c.l.b16 %v1043
  %v1116 = vunpack.c.l.b16 %v1044
  %v1117 = vunpack.c.h.b16 %v1044
  %v1118 = vunpack.c.l.b16 %v1045
  %v1119 = vunpack.c.l.b16 %v1046
  %v1120 = vunpack.c.h.b16 %v1046
  %v1121 = vunpack.c.l.b16 %v1047
  %v1122 = vunpack.c.l.b16 %v1048
  %v1123 = vunpack.c.h.b16 %v1048
  %v1124 = vunpack.c.l.b16 %v1049
  %v1125 = vunpack.c.l.b16 %v1050
  %v1126 = vunpack.c.h.b16 %v1050
  %v1127 = vunpack.c.l.b16 %v1051
  %v1128 = vunpack.c.l.b16 %v1052
  %v1129 = vunpack.c.h.b16 %v1052
  %v1130 = vunpack.c.l.b16 %v1053
  %v1131 = vunpack.c.l.b16 %v1054
  %v1132 = vunpack.c.h.b16 %v1054
  %v1133 = vunpack.c.l.b16 %v1055
  %v1134 = vunpack.c.l.b16 %v1056
  %v1135 = vunpack.c.h.b16 %v1056
  %v1136 = vunpack.c.l.b16 %v1057
  %v1137 = vunpack.c.l.b16 %v1058
  %v1138 = vunpack.c.h.b16 %v1058
  %v1139 = vunpack.c.l.b16 %v1059
  %v1140 = vpack.c.b16 %v1095, %v1092
  %v1141 = vpack.c.b16 %v1096, %v1093
  %v1142 = vpack.c.b16 %v1097, %v1094
  %v1143 = vpack.c.b16 %v1101, %v1098
  %v1144 = vpack.c.b16 %v1102, %v1099
  %v1145 = vpack.c.b16 %v1103, %v1100
  %v1146 = vpack.c.b16 %v1107, %v1104
  %v1147 = vpack.c.b16 %v1108, %v1105
  %v1148 = vpack.c.b16 %v1109, %v1106
  %v1149 = vpack.c.b16 %v1113, %v1110
  %v1150 = vpack.c.b16 %v1114, %v1111
  %v1151 = vpack.c.b16 %v1115, %v1112
  %v1152 = vpack.c.b16 %v1119, %v1116
  %v1153 = vpack.c.b16 %v1120, %v1117
  %v1154 = vpack.c.b16 %v1121, %v1118
  %v1155 = vpack.c.b16 %v1125, %v1122
  %v1156 = vpack.c.b16 %v1126, %v1123
  %v1157 = vpack.c.b16 %v1127, %v1124
  %v1158 = vpack.c.b16 %v1131, %v1128
  %v1159 = vpack.c.b16 %v1132, %v1129
  %v1160 = vpack.c.b16 %v1133, %v1130
  %v1161 = vpack.c.b16 %v1137, %v1134
  %v1162 = vpack.c.b16 %v1138, %v1135
  %v1163 = vpack.c.b16 %v1139, %v1136
  %1188 = vmatprep.subr.bf16.mxu0 %v1141
  %1189 = vmatpush1.bf16.msra.mxu0 %v1140
  %1190 = vmatprep.subr.bf16.mxu0 %v1144
  %1191 = vmatpush1.bf16.msra.mxu0 %v1143
  %1192 = vmatprep.subr.bf16.mxu0 %v1147
  %1193 = vmatpush1.bf16.msra.mxu0 %v1146
  %1194 = vmatprep.subr.bf16.mxu0 %v1150
  %1195 = vmatpush1.bf16.msra.mxu0 %v1149
  %1196 = vmatprep.subr.bf16.mxu0 %v1153
  %1197 = vmatpush1.bf16.msra.mxu0 %v1152
  %1198 = vmatprep.subr.bf16.mxu0 %v1156
  %1199 = vmatpush1.bf16.msra.mxu0 %v1155
  %1200 = vmatprep.subr.bf16.mxu0 %v1159
  %1201 = vmatpush1.bf16.msra.mxu0 %v1158
  %1202 = vmatprep.subr.bf16.mxu0 %v1162
  %1203 = vmatpush1.bf16.msra.mxu0 %v1161
  %1204 = vmatprep.subr.bf16.mxu0 0
  %1205 = vmatpush1.bf16.msra.mxu0 0
  %1206 = vmatprep.subr.bf16.mxu0 0
  %1207 = vmatpush1.bf16.msra.mxu0 0
  %1208 = vmatprep.subr.bf16.mxu0 0
  %1209 = vmatpush1.bf16.msra.mxu0 0
  %1210 = vmatprep.subr.bf16.mxu0 0
  %1211 = vmatpush1.bf16.msra.mxu0 0
  %1212 = vmatprep.subr.bf16.mxu0 0
  %1213 = vmatpush1.bf16.msra.mxu0 0
  %1214 = vmatprep.subr.bf16.mxu0 0
  %1215 = vmatpush1.bf16.msra.mxu0 0
  %1216 = vmatprep.subr.bf16.mxu0 0
  %1217 = vmatpush1.bf16.msra.mxu0 0
  %1218 = vmatprep.subr.bf16.mxu0 0
  %1219 = vmatpush1.bf16.msra.mxu0 0
  %1220 = vmatprep.mubr.bf16.mxu0 0
  %1221 = vmatmul.mubr.bf16.gmra.mrb[0].mxu0 %v1019
  %v1222 = vpop.f32.mrb[0].mxu0
  %v1223 = vadd.f32 0.0, %v1222
  %v1224 = vpop.f32.mrb[0].mxu0
  %v1225 = vadd.f32 0.0, %v1224
  %v1226 = vpop.f32.mrb[0].mxu0
  %v1227 = vpop.f32.mrb[0].mxu0
  %1228 = vdwg.mxu0
  %1229 = vmatprep.subr.bf16.mxu0 0
  %1230 = vmatpush1.bf16.msra.mxu0 %v1142
  %1231 = vmatprep.subr.bf16.mxu0 0
  %1232 = vmatpush1.bf16.msra.mxu0 %v1145
  %1233 = vmatprep.subr.bf16.mxu0 0
  %1234 = vmatpush1.bf16.msra.mxu0 %v1148
  %1235 = vmatprep.subr.bf16.mxu0 0
  %1236 = vmatpush1.bf16.msra.mxu0 %v1151
  %1237 = vmatprep.subr.bf16.mxu0 0
  %1238 = vmatpush1.bf16.msra.mxu0 %v1154
  %1239 = vmatprep.subr.bf16.mxu0 0
  %1240 = vmatpush1.bf16.msra.mxu0 %v1157
  %1241 = vmatprep.subr.bf16.mxu0 0
  %1242 = vmatpush1.bf16.msra.mxu0 %v1160
  %1243 = vmatprep.subr.bf16.mxu0 0
  %1244 = vmatpush1.bf16.msra.mxu0 %v1163
  %1245 = vmatprep.subr.bf16.mxu0 0
  %1246 = vmatpush1.bf16.msra.mxu0 0
  %1247 = vmatprep.subr.bf16.mxu0 0
  %1248 = vmatpush1.bf16.msra.mxu0 0
  %1249 = vmatprep.subr.bf16.mxu0 0
  %1250 = vmatpush1.bf16.msra.mxu0 0
  %1251 = vmatprep.subr.bf16.mxu0 0
  %1252 = vmatpush1.bf16.msra.mxu0 0
  %1253 = vmatprep.subr.bf16.mxu0 0
  %1254 = vmatpush1.bf16.msra.mxu0 0
  %1255 = vmatprep.subr.bf16.mxu0 0
  %1256 = vmatpush1.bf16.msra.mxu0 0
  %1257 = vmatprep.subr.bf16.mxu0 0
  %1258 = vmatpush1.bf16.msra.mxu0 0
  %1259 = vmatprep.subr.bf16.mxu0 0
  %1260 = vmatpush1.bf16.msra.mxu0 0
  %1261 = vmatprep.mubr.bf16.mxu0 0
  %1262 = vmatmul.mubr.bf16.gmra.mrb[0].mxu0 %v1019
  %v1263 = vpop.f32.mrb[0].mxu0
  %v1264 = vadd.f32 0.0, %v1263
  %v1265 = vpop.f32.mrb[0].mxu0
  %v1266 = vpop.f32.mrb[0].mxu0
  %v1267 = vpop.f32.mrb[0].mxu0
  %1268 = vdwg.mxu0
  %v1269 = vadd.f32 %v1025, %v1223
  %v1270 = vxor.u32 %v1269, 2147483648
  %v1271 = vmul.f32 %v1270, 1.442695
  %v1272 = vpow.pop %v1271
  %v1273 = vadd.f32 %v1272, 1.0
  %v1274 = vrcp.pop %v1273
  %v1275 = vmul.f32 1.0, %v1274
  %v1276 = vadd.f32 %v1026, %v1225
  %v1277 = vxor.u32 %v1276, 2147483648
  %v1278 = vmul.f32 %v1277, 1.442695
  %v1279 = vpow.pop %v1278
  %v1280 = vadd.f32 %v1279, 1.0
  %v1281 = vrcp.pop %v1280
  %v1282 = vmul.f32 1.0, %v1281
  %v1283 = vadd.f32 %v1264, %v480
  %v1284 = vmul.f32 %v1275, %v1283
  %v1285 = vadd.f32 %v1027, %v1284
  %v1286 = vtanh.pop %v1285
  %v1287 = vsub.f32 %v1018, %v1286
  %v1288 = vmul.f32 %v1282, %v1287
  %v1289 = vadd.f32 %v1286, %v1288
  %v1290 = vpack.c.bf16 %v1289, %v1289
  %s1291 = scalar_lea.vmem [#allocation3], 8
  %1292 = vst [vmem:[%s1291] sm:$0xf] %v1290
  %s1293 = scalar_lea.vmem [#allocation2], 36
  %v1294 = vld [vmem:[%s1293] sm:$0xff]
  %v1295 = vld [vmem:[%s1293 + $0x8] sm:$0xf]
  %v1296 = vunpack.c.l.bf16 %v1294
  %v1297 = vunpack.c.h.bf16 %v1294
  %v1298 = vunpack.c.l.bf16 %v1295
  %v1299 = vld [vmem:[%s3] sm:$0xff]
  %v1300 = vld [vmem:[%s3 + $0x8] sm:$0xf]
  %v1301 = vld [vmem:[%s3 + $0xc] sm:$0xff]
  %v1302 = vld [vmem:[%s3 + $0x14] sm:$0xf]
  %v1303 = vld [vmem:[%s3 + $0x18] sm:$0xff]
  %v1304 = vld [vmem:[%s3 + $0x20] sm:$0xf]
  %v1305 = vld [vmem:[%s3 + $0x24] sm:$0xff]
  %v1306 = vld [vmem:[%s3 + $0x2c] sm:$0xf]
  %v1307 = vld [vmem:[%s3 + $0x30] sm:$0xff]
  %v1308 = vld [vmem:[%s3 + $0x38] sm:$0xf]
  %v1309 = vld [vmem:[%s3 + $0x3c] sm:$0xff]
  %v1310 = vld [vmem:[%s3 + $0x44] sm:$0xf]
  %v1311 = vld [vmem:[%s3 + $0x48] sm:$0xff]
  %v1312 = vld [vmem:[%s3 + $0x50] sm:$0xf]
  %v1313 = vld [vmem:[%s3 + $0x54] sm:$0xff]
  %v1314 = vld [vmem:[%s3 + $0x5c] sm:$0xf]
  %v1315 = vld [vmem:[%s3 + $0x60] sm:$0xff]
  %v1316 = vld [vmem:[%s3 + $0x68] sm:$0xf]
  %v1317 = vld [vmem:[%s3 + $0x6c] sm:$0xff]
  %v1318 = vld [vmem:[%s3 + $0x74] sm:$0xf]
  %v1319 = vld [vmem:[%s3 + $0x78] sm:$0xff]
  %v1320 = vld [vmem:[%s3 + $0x80] sm:$0xf]
  %v1321 = vld [vmem:[%s3 + $0x84] sm:$0xff]
  %v1322 = vld [vmem:[%s3 + $0x8c] sm:$0xf]
  %v1323 = vld [vmem:[%s3 + $0x90] sm:$0xff]
  %v1324 = vld [vmem:[%s3 + $0x98] sm:$0xf]
  %v1325 = vld [vmem:[%s3 + $0x9c] sm:$0xff]
  %v1326 = vld [vmem:[%s3 + $0xa4] sm:$0xf]
  %v1327 = vld [vmem:[%s3 + $0xa8] sm:$0xff]
  %v1328 = vld [vmem:[%s3 + $0xb0] sm:$0xf]
  %v1329 = vld [vmem:[%s3 + $0xb4] sm:$0xff]
  %v1330 = vld [vmem:[%s3 + $0xbc] sm:$0xf]
  %v1363 = vunpack.c.l.b16 %v1299
  %v1364 = vunpack.c.h.b16 %v1299
  %v1365 = vunpack.c.l.b16 %v1300
  %v1366 = vunpack.c.l.b16 %v1301
  %v1367 = vunpack.c.h.b16 %v1301
  %v1368 = vunpack.c.l.b16 %v1302
  %v1369 = vunpack.c.l.b16 %v1303
  %v1370 = vunpack.c.h.b16 %v1303
  %v1371 = vunpack.c.l.b16 %v1304
  %v1372 = vunpack.c.l.b16 %v1305
  %v1373 = vunpack.c.h.b16 %v1305
  %v1374 = vunpack.c.l.b16 %v1306
  %v1375 = vunpack.c.l.b16 %v1307
  %v1376 = vunpack.c.h.b16 %v1307
  %v1377 = vunpack.c.l.b16 %v1308
  %v1378 = vunpack.c.l.b16 %v1309
  %v1379 = vunpack.c.h.b16 %v1309
  %v1380 = vunpack.c.l.b16 %v1310
  %v1381 = vunpack.c.l.b16 %v1311
  %v1382 = vunpack.c.h.b16 %v1311
  %v1383 = vunpack.c.l.b16 %v1312
  %v1384 = vunpack.c.l.b16 %v1313
  %v1385 = vunpack.c.h.b16 %v1313
  %v1386 = vunpack.c.l.b16 %v1314
  %v1387 = vunpack.c.l.b16 %v1315
  %v1388 = vunpack.c.h.b16 %v1315
  %v1389 = vunpack.c.l.b16 %v1316
  %v1390 = vunpack.c.l.b16 %v1317
  %v1391 = vunpack.c.h.b16 %v1317
  %v1392 = vunpack.c.l.b16 %v1318
  %v1393 = vunpack.c.l.b16 %v1319
  %v1394 = vunpack.c.h.b16 %v1319
  %v1395 = vunpack.c.l.b16 %v1320
  %v1396 = vunpack.c.l.b16 %v1321
  %v1397 = vunpack.c.h.b16 %v1321
  %v1398 = vunpack.c.l.b16 %v1322
  %v1399 = vunpack.c.l.b16 %v1323
  %v1400 = vunpack.c.h.b16 %v1323
  %v1401 = vunpack.c.l.b16 %v1324
  %v1402 = vunpack.c.l.b16 %v1325
  %v1403 = vunpack.c.h.b16 %v1325
  %v1404 = vunpack.c.l.b16 %v1326
  %v1405 = vunpack.c.l.b16 %v1327
  %v1406 = vunpack.c.h.b16 %v1327
  %v1407 = vunpack.c.l.b16 %v1328
  %v1408 = vunpack.c.l.b16 %v1329
  %v1409 = vunpack.c.h.b16 %v1329
  %v1410 = vunpack.c.l.b16 %v1330
  %v1411 = vpack.c.b16 %v1366, %v1363
  %v1412 = vpack.c.b16 %v1367, %v1364
  %v1413 = vpack.c.b16 %v1368, %v1365
  %v1414 = vpack.c.b16 %v1372, %v1369
  %v1415 = vpack.c.b16 %v1373, %v1370
  %v1416 = vpack.c.b16 %v1374, %v1371
  %v1417 = vpack.c.b16 %v1378, %v1375
  %v1418 = vpack.c.b16 %v1379, %v1376
  %v1419 = vpack.c.b16 %v1380, %v1377
  %v1420 = vpack.c.b16 %v1384, %v1381
  %v1421 = vpack.c.b16 %v1385, %v1382
  %v1422 = vpack.c.b16 %v1386, %v1383
  %v1423 = vpack.c.b16 %v1390, %v1387
  %v1424 = vpack.c.b16 %v1391, %v1388
  %v1425 = vpack.c.b16 %v1392, %v1389
  %v1426 = vpack.c.b16 %v1396, %v1393
  %v1427 = vpack.c.b16 %v1397, %v1394
  %v1428 = vpack.c.b16 %v1398, %v1395
  %v1429 = vpack.c.b16 %v1402, %v1399
  %v1430 = vpack.c.b16 %v1403, %v1400
  %v1431 = vpack.c.b16 %v1404, %v1401
  %v1432 = vpack.c.b16 %v1408, %v1405
  %v1433 = vpack.c.b16 %v1409, %v1406
  %v1434 = vpack.c.b16 %v1410, %v1407
  %1459 = vmatprep.subr.bf16.mxu0 %v1412
  %1460 = vmatpush1.bf16.msra.mxu0 %v1411
  %1461 = vmatprep.subr.bf16.mxu0 %v1415
  %1462 = vmatpush1.bf16.msra.mxu0 %v1414
  %1463 = vmatprep.subr.bf16.mxu0 %v1418
  %1464 = vmatpush1.bf16.msra.mxu0 %v1417
  %1465 = vmatprep.subr.bf16.mxu0 %v1421
  %1466 = vmatpush1.bf16.msra.mxu0 %v1420
  %1467 = vmatprep.subr.bf16.mxu0 %v1424
  %1468 = vmatpush1.bf16.msra.mxu0 %v1423
  %1469 = vmatprep.subr.bf16.mxu0 %v1427
  %1470 = vmatpush1.bf16.msra.mxu0 %v1426
  %1471 = vmatprep.subr.bf16.mxu0 %v1430
  %1472 = vmatpush1.bf16.msra.mxu0 %v1429
  %1473 = vmatprep.subr.bf16.mxu0 %v1433
  %1474 = vmatpush1.bf16.msra.mxu0 %v1432
  %1475 = vmatprep.subr.bf16.mxu0 0
  %1476 = vmatpush1.bf16.msra.mxu0 0
  %1477 = vmatprep.subr.bf16.mxu0 0
  %1478 = vmatpush1.bf16.msra.mxu0 0
  %1479 = vmatprep.subr.bf16.mxu0 0
  %1480 = vmatpush1.bf16.msra.mxu0 0
  %1481 = vmatprep.subr.bf16.mxu0 0
  %1482 = vmatpush1.bf16.msra.mxu0 0
  %1483 = vmatprep.subr.bf16.mxu0 0
  %1484 = vmatpush1.bf16.msra.mxu0 0
  %1485 = vmatprep.subr.bf16.mxu0 0
  %1486 = vmatpush1.bf16.msra.mxu0 0
  %1487 = vmatprep.subr.bf16.mxu0 0
  %1488 = vmatpush1.bf16.msra.mxu0 0
  %1489 = vmatprep.subr.bf16.mxu0 0
  %1490 = vmatpush1.bf16.msra.mxu0 0
  %1491 = vmatprep.mubr.bf16.mxu0 0
  %1492 = vmatmul.mubr.bf16.gmra.mrb[0].mxu0 %v1290
  %v1493 = vpop.f32.mrb[0].mxu0
  %v1494 = vadd.f32 0.0, %v1493
  %v1495 = vpop.f32.mrb[0].mxu0
  %v1496 = vadd.f32 0.0, %v1495
  %v1497 = vpop.f32.mrb[0].mxu0
  %v1498 = vpop.f32.mrb[0].mxu0
  %1499 = vdwg.mxu0
  %1500 = vmatprep.subr.bf16.mxu0 0
  %1501 = vmatpush1.bf16.msra.mxu0 %v1413
  %1502 = vmatprep.subr.bf16.mxu0 0
  %1503 = vmatpush1.bf16.msra.mxu0 %v1416
  %1504 = vmatprep.subr.bf16.mxu0 0
  %1505 = vmatpush1.bf16.msra.mxu0 %v1419
  %1506 = vmatprep.subr.bf16.mxu0 0
  %1507 = vmatpush1.bf16.msra.mxu0 %v1422
  %1508 = vmatprep.subr.bf16.mxu0 0
  %1509 = vmatpush1.bf16.msra.mxu0 %v1425
  %1510 = vmatprep.subr.bf16.mxu0 0
  %1511 = vmatpush1.bf16.msra.mxu0 %v1428
  %1512 = vmatprep.subr.bf16.mxu0 0
  %1513 = vmatpush1.bf16.msra.mxu0 %v1431
  %1514 = vmatprep.subr.bf16.mxu0 0
  %1515 = vmatpush1.bf16.msra.mxu0 %v1434
  %1516 = vmatprep.subr.bf16.mxu0 0
  %1517 = vmatpush1.bf16.msra.mxu0 0
  %1518 = vmatprep.subr.bf16.mxu0 0
  %1519 = vmatpush1.bf16.msra.mxu0 0
  %1520 = vmatprep.subr.bf16.mxu0 0
  %1521 = vmatpush1.bf16.msra.mxu0 0
  %1522 = vmatprep.subr.bf16.mxu0 0
  %1523 = vmatpush1.bf16.msra.mxu0 0
  %1524 = vmatprep.subr.bf16.mxu0 0
  %1525 = vmatpush1.bf16.msra.mxu0 0
  %1526 = vmatprep.subr.bf16.mxu0 0
  %1527 = vmatpush1.bf16.msra.mxu0 0
  %1528 = vmatprep.subr.bf16.mxu0 0
  %1529 = vmatpush1.bf16.msra.mxu0 0
  %1530 = vmatprep.subr.bf16.mxu0 0
  %1531 = vmatpush1.bf16.msra.mxu0 0
  %1532 = vmatprep.mubr.bf16.mxu0 0
  %1533 = vmatmul.mubr.bf16.gmra.mrb[0].mxu0 %v1290
  %v1534 = vpop.f32.mrb[0].mxu0
  %v1535 = vadd.f32 0.0, %v1534
  %v1536 = vpop.f32.mrb[0].mxu0
  %v1537 = vpop.f32.mrb[0].mxu0
  %v1538 = vpop.f32.mrb[0].mxu0
  %1539 = vdwg.mxu0
  %v1540 = vadd.f32 %v1296, %v1494
  %v1541 = vxor.u32 %v1540, 2147483648
  %v1542 = vmul.f32 %v1541, 1.442695
  %v1543 = vpow.pop %v1542
  %v1544 = vadd.f32 %v1543, 1.0
  %v1545 = vrcp.pop %v1544
  %v1546 = vmul.f32 1.0, %v1545
  %v1547 = vadd.f32 %v1297, %v1496
  %v1548 = vxor.u32 %v1547, 2147483648
  %v1549 = vmul.f32 %v1548, 1.442695
  %v1550 = vpow.pop %v1549
  %v1551 = vadd.f32 %v1550, 1.0
  %v1552 = vrcp.pop %v1551
  %v1553 = vmul.f32 1.0, %v1552
  %v1554 = vadd.f32 %v1535, %v480
  %v1555 = vmul.f32 %v1546, %v1554
  %v1556 = vadd.f32 %v1298, %v1555
  %v1557 = vtanh.pop %v1556
  %v1558 = vsub.f32 %v1289, %v1557
  %v1559 = vmul.f32 %v1553, %v1558
  %v1560 = vadd.f32 %v1557, %v1559
  %v1561 = vpack.c.bf16 %v1560, %v1560
  %s1562 = scalar_lea.vmem [#allocation3], 12
  %1563 = vst [vmem:[%s1562] sm:$0xf] %v1561
  %s1564 = scalar_lea.vmem [#allocation2], 48
  %v1565 = vld [vmem:[%s1564] sm:$0xff]
  %v1566 = vld [vmem:[%s1564 + $0x8] sm:$0xf]
  %v1567 = vunpack.c.l.bf16 %v1565
  %v1568 = vunpack.c.h.bf16 %v1565
  %v1569 = vunpack.c.l.bf16 %v1566
  %v1570 = vld [vmem:[%s3] sm:$0xff]
  %v1571 = vld [vmem:[%s3 + $0x8] sm:$0xf]
  %v1572 = vld [vmem:[%s3 + $0xc] sm:$0xff]
  %v1573 = vld [vmem:[%s3 + $0x14] sm:$0xf]
  %v1574 = vld [vmem:[%s3 + $0x18] sm:$0xff]
  %v1575 = vld [vmem:[%s3 + $0x20] sm:$0xf]
  %v1576 = vld [vmem:[%s3 + $0x24] sm:$0xff]
  %v1577 = vld [vmem:[%s3 + $0x2c] sm:$0xf]
  %v1578 = vld [vmem:[%s3 + $0x30] sm:$0xff]
  %v1579 = vld [vmem:[%s3 + $0x38] sm:$0xf]
  %v1580 = vld [vmem:[%s3 + $0x3c] sm:$0xff]
  %v1581 = vld [vmem:[%s3 + $0x44] sm:$0xf]
  %v1582 = vld [vmem:[%s3 + $0x48] sm:$0xff]
  %v1583 = vld [vmem:[%s3 + $0x50] sm:$0xf]
  %v1584 = vld [vmem:[%s3 + $0x54] sm:$0xff]
  %v1585 = vld [vmem:[%s3 + $0x5c] sm:$0xf]
  %v1586 = vld [vmem:[%s3 + $0x60] sm:$0xff]
  %v1587 = vld [vmem:[%s3 + $0x68] sm:$0xf]
  %v1588 = vld [vmem:[%s3 + $0x6c] sm:$0xff]
  %v1589 = vld [vmem:[%s3 + $0x74] sm:$0xf]
  %v1590 = vld [vmem:[%s3 + $0x78] sm:$0xff]
  %v1591 = vld [vmem:[%s3 + $0x80] sm:$0xf]
  %v1592 = vld [vmem:[%s3 + $0x84] sm:$0xff]
  %v1593 = vld [vmem:[%s3 + $0x8c] sm:$0xf]
  %v1594 = vld [vmem:[%s3 + $0x90] sm:$0xff]
  %v1595 = vld [vmem:[%s3 + $0x98] sm:$0xf]
  %v1596 = vld [vmem:[%s3 + $0x9c] sm:$0xff]
  %v1597 = vld [vmem:[%s3 + $0xa4] sm:$0xf]
  %v1598 = vld [vmem:[%s3 + $0xa8] sm:$0xff]
  %v1599 = vld [vmem:[%s3 + $0xb0] sm:$0xf]
  %v1600 = vld [vmem:[%s3 + $0xb4] sm:$0xff]
  %v1601 = vld [vmem:[%s3 + $0xbc] sm:$0xf]
  %v1634 = vunpack.c.l.b16 %v1570
  %v1635 = vunpack.c.h.b16 %v1570
  %v1636 = vunpack.c.l.b16 %v1571
  %v1637 = vunpack.c.l.b16 %v1572
  %v1638 = vunpack.c.h.b16 %v1572
  %v1639 = vunpack.c.l.b16 %v1573
  %v1640 = vunpack.c.l.b16 %v1574
  %v1641 = vunpack.c.h.b16 %v1574
  %v1642 = vunpack.c.l.b16 %v1575
  %v1643 = vunpack.c.l.b16 %v1576
  %v1644 = vunpack.c.h.b16 %v1576
  %v1645 = vunpack.c.l.b16 %v1577
  %v1646 = vunpack.c.l.b16 %v1578
  %v1647 = vunpack.c.h.b16 %v1578
  %v1648 = vunpack.c.l.b16 %v1579
  %v1649 = vunpack.c.l.b16 %v1580
  %v1650 = vunpack.c.h.b16 %v1580
  %v1651 = vunpack.c.l.b16 %v1581
  %v1652 = vunpack.c.l.b16 %v1582
  %v1653 = vunpack.c.h.b16 %v1582
  %v1654 = vunpack.c.l.b16 %v1583
  %v1655 = vunpack.c.l.b16 %v1584
  %v1656 = vunpack.c.h.b16 %v1584
  %v1657 = vunpack.c.l.b16 %v1585
  %v1658 = vunpack.c.l.b16 %v1586
  %v1659 = vunpack.c.h.b16 %v1586
  %v1660 = vunpack.c.l.b16 %v1587
  %v1661 = vunpack.c.l.b16 %v1588
  %v1662 = vunpack.c.h.b16 %v1588
  %v1663 = vunpack.c.l.b16 %v1589
  %v1664 = vunpack.c.l.b16 %v1590
  %v1665 = vunpack.c.h.b16 %v1590
  %v1666 = vunpack.c.l.b16 %v1591
  %v1667 = vunpack.c.l.b16 %v1592
  %v1668 = vunpack.c.h.b16 %v1592
  %v1669 = vunpack.c.l.b16 %v1593
  %v1670 = vunpack.c.l.b16 %v1594
  %v1671 = vunpack.c.h.b16 %v1594
  %v1672 = vunpack.c.l.b16 %v1595
  %v1673 = vunpack.c.l.b16 %v1596
  %v1674 = vunpack.c.h.b16 %v1596
  %v1675 = vunpack.c.l.b16 %v1597
  %v1676 = vunpack.c.l.b16 %v1598
  %v1677 = vunpack.c.h.b16 %v1598
  %v1678 = vunpack.c.l.b16 %v1599
  %v1679 = vunpack.c.l.b16 %v1600
  %v1680 = vunpack.c.h.b16 %v1600
  %v1681 = vunpack.c.l.b16 %v1601
  %v1682 = vpack.c.b16 %v1637, %v1634
  %v1683 = vpack.c.b16 %v1638, %v1635
  %v1684 = vpack.c.b16 %v1639, %v1636
  %v1685 = vpack.c.b16 %v1643, %v1640
  %v1686 = vpack.c.b16 %v1644, %v1641
  %v1687 = vpack.c.b16 %v1645, %v1642
  %v1688 = vpack.c.b16 %v1649, %v1646
  %v1689 = vpack.c.b16 %v1650, %v1647
  %v1690 = vpack.c.b16 %v1651, %v1648
  %v1691 = vpack.c.b16 %v1655, %v1652
  %v1692 = vpack.c.b16 %v1656, %v1653
  %v1693 = vpack.c.b16 %v1657, %v1654
  %v1694 = vpack.c.b16 %v1661, %v1658
  %v1695 = vpack.c.b16 %v1662, %v1659
  %v1696 = vpack.c.b16 %v1663, %v1660
  %v1697 = vpack.c.b16 %v1667, %v1664
  %v1698 = vpack.c.b16 %v1668, %v1665
  %v1699 = vpack.c.b16 %v1669, %v1666
  %v1700 = vpack.c.b16 %v1673, %v1670
  %v1701 = vpack.c.b16 %v1674, %v1671
  %v1702 = vpack.c.b16 %v1675, %v1672
  %v1703 = vpack.c.b16 %v1679, %v1676
  %v1704 = vpack.c.b16 %v1680, %v1677
  %v1705 = vpack.c.b16 %v1681, %v1678
  %1730 = vmatprep.subr.bf16.mxu0 %v1683
  %1731 = vmatpush1.bf16.msra.mxu0 %v1682
  %1732 = vmatprep.subr.bf16.mxu0 %v1686
  %1733 = vmatpush1.bf16.msra.mxu0 %v1685
  %1734 = vmatprep.subr.bf16.mxu0 %v1689
  %1735 = vmatpush1.bf16.msra.mxu0 %v1688
  %1736 = vmatprep.subr.bf16.mxu0 %v1692
  %1737 = vmatpush1.bf16.msra.mxu0 %v1691
  %1738 = vmatprep.subr.bf16.mxu0 %v1695
  %1739 = vmatpush1.bf16.msra.mxu0 %v1694
  %1740 = vmatprep.subr.bf16.mxu0 %v1698
  %1741 = vmatpush1.bf16.msra.mxu0 %v1697
  %1742 = vmatprep.subr.bf16.mxu0 %v1701
  %1743 = vmatpush1.bf16.msra.mxu0 %v1700
  %1744 = vmatprep.subr.bf16.mxu0 %v1704
  %1745 = vmatpush1.bf16.msra.mxu0 %v1703
  %1746 = vmatprep.subr.bf16.mxu0 0
  %1747 = vmatpush1.bf16.msra.mxu0 0
  %1748 = vmatprep.subr.bf16.mxu0 0
  %1749 = vmatpush1.bf16.msra.mxu0 0
  %1750 = vmatprep.subr.bf16.mxu0 0
  %1751 = vmatpush1.bf16.msra.mxu0 0
  %1752 = vmatprep.subr.bf16.mxu0 0
  %1753 = vmatpush1.bf16.msra.mxu0 0
  %1754 = vmatprep.subr.bf16.mxu0 0
  %1755 = vmatpush1.bf16.msra.mxu0 0
  %1756 = vmatprep.subr.bf16.mxu0 0
  %1757 = vmatpush1.bf16.msra.mxu0 0
  %1758 = vmatprep.subr.bf16.mxu0 0
  %1759 = vmatpush1.bf16.msra.mxu0 0
  %1760 = vmatprep.subr.bf16.mxu0 0
  %1761 = vmatpush1.bf16.msra.mxu0 0
  %1762 = vmatprep.mubr.bf16.mxu0 0
  %1763 = vmatmul.mubr.bf16.gmra.mrb[0].mxu0 %v1561
  %v1764 = vpop.f32.mrb[0].mxu0
  %v1765 = vadd.f32 0.0, %v1764
  %v1766 = vpop.f32.mrb[0].mxu0
  %v1767 = vadd.f32 0.0, %v1766
  %v1768 = vpop.f32.mrb[0].mxu0
  %v1769 = vpop.f32.mrb[0].mxu0
  %1770 = vdwg.mxu0
  %1771 = vmatprep.subr.bf16.mxu0 0
  %1772 = vmatpush1.bf16.msra.mxu0 %v1684
  %1773 = vmatprep.subr.bf16.mxu0 0
  %1774 = vmatpush1.bf16.msra.mxu0 %v1687
  %1775 = vmatprep.subr.bf16.mxu0 0
  %1776 = vmatpush1.bf16.msra.mxu0 %v1690
  %1777 = vmatprep.subr.bf16.mxu0 0
  %1778 = vmatpush1.bf16.msra.mxu0 %v1693
  %1779 = vmatprep.subr.bf16.mxu0 0
  %1780 = vmatpush1.bf16.msra.mxu0 %v1696
  %1781 = vmatprep.subr.bf16.mxu0 0
  %1782 = vmatpush1.bf16.msra.mxu0 %v1699
  %1783 = vmatprep.subr.bf16.mxu0 0
  %1784 = vmatpush1.bf16.msra.mxu0 %v1702
  %1785 = vmatprep.subr.bf16.mxu0 0
  %1786 = vmatpush1.bf16.msra.mxu0 %v1705
  %1787 = vmatprep.subr.bf16.mxu0 0
  %1788 = vmatpush1.bf16.msra.mxu0 0
  %1789 = vmatprep.subr.bf16.mxu0 0
  %1790 = vmatpush1.bf16.msra.mxu0 0
  %1791 = vmatprep.subr.bf16.mxu0 0
  %1792 = vmatpush1.bf16.msra.mxu0 0
  %1793 = vmatprep.subr.bf16.mxu0 0
  %1794 = vmatpush1.bf16.msra.mxu0 0
  %1795 = vmatprep.subr.bf16.mxu0 0
  %1796 = vmatpush1.bf16.msra.mxu0 0
  %1797 = vmatprep.subr.bf16.mxu0 0
  %1798 = vmatpush1.bf16.msra.mxu0 0
  %1799 = vmatprep.subr.bf16.mxu0 0
  %1800 = vmatpush1.bf16.msra.mxu0 0
  %1801 = vmatprep.subr.bf16.mxu0 0
  %1802 = vmatpush1.bf16.msra.mxu0 0
  %1803 = vmatprep.mubr.bf16.mxu0 0
  %1804 = vmatmul.mubr.bf16.gmra.mrb[0].mxu0 %v1561
  %v1805 = vpop.f32.mrb[0].mxu0
  %v1806 = vadd.f32 0.0, %v1805
  %v1807 = vpop.f32.mrb[0].mxu0
  %v1808 = vpop.f32.mrb[0].mxu0
  %v1809 = vpop.f32.mrb[0].mxu0
  %1810 = vdwg.mxu0
  %v1811 = vadd.f32 %v1567, %v1765
  %v1812 = vxor.u32 %v1811, 2147483648
  %v1813 = vmul.f32 %v1812, 1.442695
  %v1814 = vpow.pop %v1813
  %v1815 = vadd.f32 %v1814, 1.0
  %v1816 = vrcp.pop %v1815
  %v1817 = vmul.f32 1.0, %v1816
  %v1818 = vadd.f32 %v1568, %v1767
  %v1819 = vxor.u32 %v1818, 2147483648
  %v1820 = vmul.f32 %v1819, 1.442695
  %v1821 = vpow.pop %v1820
  %v1822 = vadd.f32 %v1821, 1.0
  %v1823 = vrcp.pop %v1822
  %v1824 = vmul.f32 1.0, %v1823
  %v1825 = vadd.f32 %v1806, %v480
  %v1826 = vmul.f32 %v1817, %v1825
  %v1827 = vadd.f32 %v1569, %v1826
  %v1828 = vtanh.pop %v1827
  %v1829 = vsub.f32 %v1560, %v1828
  %v1830 = vmul.f32 %v1824, %v1829
  %v1831 = vadd.f32 %v1828, %v1830
  %v1832 = vpack.c.bf16 %v1831, %v1831
  %s1833 = scalar_lea.vmem [#allocation3], 16
  %1834 = vst [vmem:[%s1833] sm:$0xf] %v1832
  %s1835 = scalar_lea.vmem [#allocation2], 60
  %v1836 = vld [vmem:[%s1835] sm:$0xff]
  %v1837 = vld [vmem:[%s1835 + $0x8] sm:$0xf]
  %v1838 = vunpack.c.l.bf16 %v1836
  %v1839 = vunpack.c.h.bf16 %v1836
  %v1840 = vunpack.c.l.bf16 %v1837
  %v1841 = vld [vmem:[%s3] sm:$0xff]
  %v1842 = vld [vmem:[%s3 + $0x8] sm:$0xf]
  %v1843 = vld [vmem:[%s3 + $0xc] sm:$0xff]
  %v1844 = vld [vmem:[%s3 + $0x14] sm:$0xf]
  %v1845 = vld [vmem:[%s3 + $0x18] sm:$0xff]
  %v1846 = vld [vmem:[%s3 + $0x20] sm:$0xf]
  %v1847 = vld [vmem:[%s3 + $0x24] sm:$0xff]
  %v1848 = vld [vmem:[%s3 + $0x2c] sm:$0xf]
  %v1849 = vld [vmem:[%s3 + $0x30] sm:$0xff]
  %v1850 = vld [vmem:[%s3 + $0x38] sm:$0xf]
  %v1851 = vld [vmem:[%s3 + $0x3c] sm:$0xff]
  %v1852 = vld [vmem:[%s3 + $0x44] sm:$0xf]
  %v1853 = vld [vmem:[%s3 + $0x48] sm:$0xff]
  %v1854 = vld [vmem:[%s3 + $0x50] sm:$0xf]
  %v1855 = vld [vmem:[%s3 + $0x54] sm:$0xff]
  %v1856 = vld [vmem:[%s3 + $0x5c] sm:$0xf]
  %v1857 = vld [vmem:[%s3 + $0x60] sm:$0xff]
  %v1858 = vld [vmem:[%s3 + $0x68] sm:$0xf]
  %v1859 = vld [vmem:[%s3 + $0x6c] sm:$0xff]
  %v1860 = vld [vmem:[%s3 + $0x74] sm:$0xf]
  %v1861 = vld [vmem:[%s3 + $0x78] sm:$0xff]
  %v1862 = vld [vmem:[%s3 + $0x80] sm:$0xf]
  %v1863 = vld [vmem:[%s3 + $0x84] sm:$0xff]
  %v1864 = vld [vmem:[%s3 + $0x8c] sm:$0xf]
  %v1865 = vld [vmem:[%s3 + $0x90] sm:$0xff]
  %v1866 = vld [vmem:[%s3 + $0x98] sm:$0xf]
  %v1867 = vld [vmem:[%s3 + $0x9c] sm:$0xff]
  %v1868 = vld [vmem:[%s3 + $0xa4] sm:$0xf]
  %v1869 = vld [vmem:[%s3 + $0xa8] sm:$0xff]
  %v1870 = vld [vmem:[%s3 + $0xb0] sm:$0xf]
  %v1871 = vld [vmem:[%s3 + $0xb4] sm:$0xff]
  %v1872 = vld [vmem:[%s3 + $0xbc] sm:$0xf]
  %v1905 = vunpack.c.l.b16 %v1841
  %v1906 = vunpack.c.h.b16 %v1841
  %v1907 = vunpack.c.l.b16 %v1842
  %v1908 = vunpack.c.l.b16 %v1843
  %v1909 = vunpack.c.h.b16 %v1843
  %v1910 = vunpack.c.l.b16 %v1844
  %v1911 = vunpack.c.l.b16 %v1845
  %v1912 = vunpack.c.h.b16 %v1845
  %v1913 = vunpack.c.l.b16 %v1846
  %v1914 = vunpack.c.l.b16 %v1847
  %v1915 = vunpack.c.h.b16 %v1847
  %v1916 = vunpack.c.l.b16 %v1848
  %v1917 = vunpack.c.l.b16 %v1849
  %v1918 = vunpack.c.h.b16 %v1849
  %v1919 = vunpack.c.l.b16 %v1850
  %v1920 = vunpack.c.l.b16 %v1851
  %v1921 = vunpack.c.h.b16 %v1851
  %v1922 = vunpack.c.l.b16 %v1852
  %v1923 = vunpack.c.l.b16 %v1853
  %v1924 = vunpack.c.h.b16 %v1853
  %v1925 = vunpack.c.l.b16 %v1854
  %v1926 = vunpack.c.l.b16 %v1855
  %v1927 = vunpack.c.h.b16 %v1855
  %v1928 = vunpack.c.l.b16 %v1856
  %v1929 = vunpack.c.l.b16 %v1857
  %v1930 = vunpack.c.h.b16 %v1857
  %v1931 = vunpack.c.l.b16 %v1858
  %v1932 = vunpack.c.l.b16 %v1859
  %v1933 = vunpack.c.h.b16 %v1859
  %v1934 = vunpack.c.l.b16 %v1860
  %v1935 = vunpack.c.l.b16 %v1861
  %v1936 = vunpack.c.h.b16 %v1861
  %v1937 = vunpack.c.l.b16 %v1862
  %v1938 = vunpack.c.l.b16 %v1863
  %v1939 = vunpack.c.h.b16 %v1863
  %v1940 = vunpack.c.l.b16 %v1864
  %v1941 = vunpack.c.l.b16 %v1865
  %v1942 = vunpack.c.h.b16 %v1865
  %v1943 = vunpack.c.l.b16 %v1866
  %v1944 = vunpack.c.l.b16 %v1867
  %v1945 = vunpack.c.h.b16 %v1867
  %v1946 = vunpack.c.l.b16 %v1868
  %v1947 = vunpack.c.l.b16 %v1869
  %v1948 = vunpack.c.h.b16 %v1869
  %v1949 = vunpack.c.l.b16 %v1870
  %v1950 = vunpack.c.l.b16 %v1871
  %v1951 = vunpack.c.h.b16 %v1871
  %v1952 = vunpack.c.l.b16 %v1872
  %v1953 = vpack.c.b16 %v1908, %v1905
  %v1954 = vpack.c.b16 %v1909, %v1906
  %v1955 = vpack.c.b16 %v1910, %v1907
  %v1956 = vpack.c.b16 %v1914, %v1911
  %v1957 = vpack.c.b16 %v1915, %v1912
  %v1958 = vpack.c.b16 %v1916, %v1913
  %v1959 = vpack.c.b16 %v1920, %v1917
  %v1960 = vpack.c.b16 %v1921, %v1918
  %v1961 = vpack.c.b16 %v1922, %v1919
  %v1962 = vpack.c.b16 %v1926, %v1923
  %v1963 = vpack.c.b16 %v1927, %v1924
  %v1964 = vpack.c.b16 %v1928, %v1925
  %v1965 = vpack.c.b16 %v1932, %v1929
  %v1966 = vpack.c.b16 %v1933, %v1930
  %v1967 = vpack.c.b16 %v1934, %v1931
  %v1968 = vpack.c.b16 %v1938, %v1935
  %v1969 = vpack.c.b16 %v1939, %v1936
  %v1970 = vpack.c.b16 %v1940, %v1937
  %v1971 = vpack.c.b16 %v1944, %v1941
  %v1972 = vpack.c.b16 %v1945, %v1942
  %v1973 = vpack.c.b16 %v1946, %v1943
  %v1974 = vpack.c.b16 %v1950, %v1947
  %v1975 = vpack.c.b16 %v1951, %v1948
  %v1976 = vpack.c.b16 %v1952, %v1949
  %2001 = vmatprep.subr.bf16.mxu0 %v1954
  %2002 = vmatpush1.bf16.msra.mxu0 %v1953
  %2003 = vmatprep.subr.bf16.mxu0 %v1957
  %2004 = vmatpush1.bf16.msra.mxu0 %v1956
  %2005 = vmatprep.subr.bf16.mxu0 %v1960
  %2006 = vmatpush1.bf16.msra.mxu0 %v1959
  %2007 = vmatprep.subr.bf16.mxu0 %v1963
  %2008 = vmatpush1.bf16.msra.mxu0 %v1962
  %2009 = vmatprep.subr.bf16.mxu0 %v1966
  %2010 = vmatpush1.bf16.msra.mxu0 %v1965
  %2011 = vmatprep.subr.bf16.mxu0 %v1969
  %2012 = vmatpush1.bf16.msra.mxu0 %v1968
  %2013 = vmatprep.subr.bf16.mxu0 %v1972
  %2014 = vmatpush1.bf16.msra.mxu0 %v1971
  %2015 = vmatprep.subr.bf16.mxu0 %v1975
  %2016 = vmatpush1.bf16.msra.mxu0 %v1974
  %2017 = vmatprep.subr.bf16.mxu0 0
  %2018 = vmatpush1.bf16.msra.mxu0 0
  %2019 = vmatprep.subr.bf16.mxu0 0
  %2020 = vmatpush1.bf16.msra.mxu0 0
  %2021 = vmatprep.subr.bf16.mxu0 0
  %2022 = vmatpush1.bf16.msra.mxu0 0
  %2023 = vmatprep.subr.bf16.mxu0 0
  %2024 = vmatpush1.bf16.msra.mxu0 0
  %2025 = vmatprep.subr.bf16.mxu0 0
  %2026 = vmatpush1.bf16.msra.mxu0 0
  %2027 = vmatprep.subr.bf16.mxu0 0
  %2028 = vmatpush1.bf16.msra.mxu0 0
  %2029 = vmatprep.subr.bf16.mxu0 0
  %2030 = vmatpush1.bf16.msra.mxu0 0
  %2031 = vmatprep.subr.bf16.mxu0 0
  %2032 = vmatpush1.bf16.msra.mxu0 0
  %2033 = vmatprep.mubr.bf16.mxu0 0
  %2034 = vmatmul.mubr.bf16.gmra.mrb[0].mxu0 %v1832
  %v2035 = vpop.f32.mrb[0].mxu0
  %v2036 = vadd.f32 0.0, %v2035
  %v2037 = vpop.f32.mrb[0].mxu0
  %v2038 = vadd.f32 0.0, %v2037
  %v2039 = vpop.f32.mrb[0].mxu0
  %v2040 = vpop.f32.mrb[0].mxu0
  %2041 = vdwg.mxu0
  %2042 = vmatprep.subr.bf16.mxu0 0
  %2043 = vmatpush1.bf16.msra.mxu0 %v1955
  %2044 = vmatprep.subr.bf16.mxu0 0
  %2045 = vmatpush1.bf16.msra.mxu0 %v1958
  %2046 = vmatprep.subr.bf16.mxu0 0
  %2047 = vmatpush1.bf16.msra.mxu0 %v1961
  %2048 = vmatprep.subr.bf16.mxu0 0
  %2049 = vmatpush1.bf16.msra.mxu0 %v1964
  %2050 = vmatprep.subr.bf16.mxu0 0
  %2051 = vmatpush1.bf16.msra.mxu0 %v1967
  %2052 = vmatprep.subr.bf16.mxu0 0
  %2053 = vmatpush1.bf16.msra.mxu0 %v1970
  %2054 = vmatprep.subr.bf16.mxu0 0
  %2055 = vmatpush1.bf16.msra.mxu0 %v1973
  %2056 = vmatprep.subr.bf16.mxu0 0
  %2057 = vmatpush1.bf16.msra.mxu0 %v1976
  %2058 = vmatprep.subr.bf16.mxu0 0
  %2059 = vmatpush1.bf16.msra.mxu0 0
  %2060 = vmatprep.subr.bf16.mxu0 0
  %2061 = vmatpush1.bf16.msra.mxu0 0
  %2062 = vmatprep.subr.bf16.mxu0 0
  %2063 = vmatpush1.bf16.msra.mxu0 0
  %2064 = vmatprep.subr.bf16.mxu0 0
  %2065 = vmatpush1.bf16.msra.mxu0 0
  %2066 = vmatprep.subr.bf16.mxu0 0
  %2067 = vmatpush1.bf16.msra.mxu0 0
  %2068 = vmatprep.subr.bf16.mxu0 0
  %2069 = vmatpush1.bf16.msra.mxu0 0
  %2070 = vmatprep.subr.bf16.mxu0 0
  %2071 = vmatpush1.bf16.msra.mxu0 0
  %2072 = vmatprep.subr.bf16.mxu0 0
  %2073 = vmatpush1.bf16.msra.mxu0 0
  %2074 = vmatprep.mubr.bf16.mxu0 0
  %2075 = vmatmul.mubr.bf16.gmra.mrb[0].mxu0 %v1832
  %v2076 = vpop.f32.mrb[0].mxu0
  %v2077 = vadd.f32 0.0, %v2076
  %v2078 = vpop.f32.mrb[0].mxu0
  %v2079 = vpop.f32.mrb[0].mxu0
  %v2080 = vpop.f32.mrb[0].mxu0
  %2081 = vdwg.mxu0
  %v2082 = vadd.f32 %v1838, %v2036
  %v2083 = vxor.u32 %v2082, 2147483648
  %v2084 = vmul.f32 %v2083, 1.442695
  %v2085 = vpow.pop %v2084
  %v2086 = vadd.f32 %v2085, 1.0
  %v2087 = vrcp.pop %v2086
  %v2088 = vmul.f32 1.0, %v2087
  %v2089 = vadd.f32 %v1839, %v2038
  %v2090 = vxor.u32 %v2089, 2147483648
  %v2091 = vmul.f32 %v2090, 1.442695
  %v2092 = vpow.pop %v2091
  %v2093 = vadd.f32 %v2092, 1.0
  %v2094 = vrcp.pop %v2093
  %v2095 = vmul.f32 1.0, %v2094
  %v2096 = vadd.f32 %v2077, %v480
  %v2097 = vmul.f32 %v2088, %v2096
  %v2098 = vadd.f32 %v1840, %v2097
  %v2099 = vtanh.pop %v2098
  %v2100 = vsub.f32 %v1831, %v2099
  %v2101 = vmul.f32 %v2095, %v2100
  %v2102 = vadd.f32 %v2099, %v2101
  %v2103 = vpack.c.bf16 %v2102, %v2102
  %s2104 = scalar_lea.vmem [#allocation3], 20
  %2105 = vst [vmem:[%s2104] sm:$0xf] %v2103
  %s2106 = scalar_lea.vmem [#allocation2], 72
  %v2107 = vld [vmem:[%s2106] sm:$0xff]
  %v2108 = vld [vmem:[%s2106 + $0x8] sm:$0xf]
  %v2109 = vunpack.c.l.bf16 %v2107
  %v2110 = vunpack.c.h.bf16 %v2107
  %v2111 = vunpack.c.l.bf16 %v2108
  %v2112 = vld [vmem:[%s3] sm:$0xff]
  %v2113 = vld [vmem:[%s3 + $0x8] sm:$0xf]
  %v2114 = vld [vmem:[%s3 + $0xc] sm:$0xff]
  %v2115 = vld [vmem:[%s3 + $0x14] sm:$0xf]
  %v2116 = vld [vmem:[%s3 + $0x18] sm:$0xff]
  %v2117 = vld [vmem:[%s3 + $0x20] sm:$0xf]
  %v2118 = vld [vmem:[%s3 + $0x24] sm:$0xff]
  %v2119 = vld [vmem:[%s3 + $0x2c] sm:$0xf]
  %v2120 = vld [vmem:[%s3 + $0x30] sm:$0xff]
  %v2121 = vld [vmem:[%s3 + $0x38] sm:$0xf]
  %v2122 = vld [vmem:[%s3 + $0x3c] sm:$0xff]
  %v2123 = vld [vmem:[%s3 + $0x44] sm:$0xf]
  %v2124 = vld [vmem:[%s3 + $0x48] sm:$0xff]
  %v2125 = vld [vmem:[%s3 + $0x50] sm:$0xf]
  %v2126 = vld [vmem:[%s3 + $0x54] sm:$0xff]
  %v2127 = vld [vmem:[%s3 + $0x5c] sm:$0xf]
  %v2128 = vld [vmem:[%s3 + $0x60] sm:$0xff]
  %v2129 = vld [vmem:[%s3 + $0x68] sm:$0xf]
  %v2130 = vld [vmem:[%s3 + $0x6c] sm:$0xff]
  %v2131 = vld [vmem:[%s3 + $0x74] sm:$0xf]
  %v2132 = vld [vmem:[%s3 + $0x78] sm:$0xff]
  %v2133 = vld [vmem:[%s3 + $0x80] sm:$0xf]
  %v2134 = vld [vmem:[%s3 + $0x84] sm:$0xff]
  %v2135 = vld [vmem:[%s3 + $0x8c] sm:$0xf]
  %v2136 = vld [vmem:[%s3 + $0x90] sm:$0xff]
  %v2137 = vld [vmem:[%s3 + $0x98] sm:$0xf]
  %v2138 = vld [vmem:[%s3 + $0x9c] sm:$0xff]
  %v2139 = vld [vmem:[%s3 + $0xa4] sm:$0xf]
  %v2140 = vld [vmem:[%s3 + $0xa8] sm:$0xff]
  %v2141 = vld [vmem:[%s3 + $0xb0] sm:$0xf]
  %v2142 = vld [vmem:[%s3 + $0xb4] sm:$0xff]
  %v2143 = vld [vmem:[%s3 + $0xbc] sm:$0xf]
  %v2176 = vunpack.c.l.b16 %v2112
  %v2177 = vunpack.c.h.b16 %v2112
  %v2178 = vunpack.c.l.b16 %v2113
  %v2179 = vunpack.c.l.b16 %v2114
  %v2180 = vunpack.c.h.b16 %v2114
  %v2181 = vunpack.c.l.b16 %v2115
  %v2182 = vunpack.c.l.b16 %v2116
  %v2183 = vunpack.c.h.b16 %v2116
  %v2184 = vunpack.c.l.b16 %v2117
  %v2185 = vunpack.c.l.b16 %v2118
  %v2186 = vunpack.c.h.b16 %v2118
  %v2187 = vunpack.c.l.b16 %v2119
  %v2188 = vunpack.c.l.b16 %v2120
  %v2189 = vunpack.c.h.b16 %v2120
  %v2190 = vunpack.c.l.b16 %v2121
  %v2191 = vunpack.c.l.b16 %v2122
  %v2192 = vunpack.c.h.b16 %v2122
  %v2193 = vunpack.c.l.b16 %v2123
  %v2194 = vunpack.c.l.b16 %v2124
  %v2195 = vunpack.c.h.b16 %v2124
  %v2196 = vunpack.c.l.b16 %v2125
  %v2197 = vunpack.c.l.b16 %v2126
  %v2198 = vunpack.c.h.b16 %v2126
  %v2199 = vunpack.c.l.b16 %v2127
  %v2200 = vunpack.c.l.b16 %v2128
  %v2201 = vunpack.c.h.b16 %v2128
  %v2202 = vunpack.c.l.b16 %v2129
  %v2203 = vunpack.c.l.b16 %v2130
  %v2204 = vunpack.c.h.b16 %v2130
  %v2205 = vunpack.c.l.b16 %v2131
  %v2206 = vunpack.c.l.b16 %v2132
  %v2207 = vunpack.c.h.b16 %v2132
  %v2208 = vunpack.c.l.b16 %v2133
  %v2209 = vunpack.c.l.b16 %v2134
  %v2210 = vunpack.c.h.b16 %v2134
  %v2211 = vunpack.c.l.b16 %v2135
  %v2212 = vunpack.c.l.b16 %v2136
  %v2213 = vunpack.c.h.b16 %v2136
  %v2214 = vunpack.c.l.b16 %v2137
  %v2215 = vunpack.c.l.b16 %v2138
  %v2216 = vunpack.c.h.b16 %v2138
  %v2217 = vunpack.c.l.b16 %v2139
  %v2218 = vunpack.c.l.b16 %v2140
  %v2219 = vunpack.c.h.b16 %v2140
  %v2220 = vunpack.c.l.b16 %v2141
  %v2221 = vunpack.c.l.b16 %v2142
  %v2222 = vunpack.c.h.b16 %v2142
  %v2223 = vunpack.c.l.b16 %v2143
  %v2224 = vpack.c.b16 %v2179, %v2176
  %v2225 = vpack.c.b16 %v2180, %v2177
  %v2226 = vpack.c.b16 %v2181, %v2178
  %v2227 = vpack.c.b16 %v2185, %v2182
  %v2228 = vpack.c.b16 %v2186, %v2183
  %v2229 = vpack.c.b16 %v2187, %v2184
  %v2230 = vpack.c.b16 %v2191, %v2188
  %v2231 = vpack.c.b16 %v2192, %v2189
  %v2232 = vpack.c.b16 %v2193, %v2190
  %v2233 = vpack.c.b16 %v2197, %v2194
  %v2234 = vpack.c.b16 %v2198, %v2195
  %v2235 = vpack.c.b16 %v2199, %v2196
  %v2236 = vpack.c.b16 %v2203, %v2200
  %v2237 = vpack.c.b16 %v2204, %v2201
  %v2238 = vpack.c.b16 %v2205, %v2202
  %v2239 = vpack.c.b16 %v2209, %v2206
  %v2240 = vpack.c.b16 %v2210, %v2207
  %v2241 = vpack.c.b16 %v2211, %v2208
  %v2242 = vpack.c.b16 %v2215, %v2212
  %v2243 = vpack.c.b16 %v2216, %v2213
  %v2244 = vpack.c.b16 %v2217, %v2214
  %v2245 = vpack.c.b16 %v2221, %v2218
  %v2246 = vpack.c.b16 %v2222, %v2219
  %v2247 = vpack.c.b16 %v2223, %v2220
  %2272 = vmatprep.subr.bf16.mxu0 %v2225
  %2273 = vmatpush1.bf16.msra.mxu0 %v2224
  %2274 = vmatprep.subr.bf16.mxu0 %v2228
  %2275 = vmatpush1.bf16.msra.mxu0 %v2227
  %2276 = vmatprep.subr.bf16.mxu0 %v2231
  %2277 = vmatpush1.bf16.msra.mxu0 %v2230
  %2278 = vmatprep.subr.bf16.mxu0 %v2234
  %2279 = vmatpush1.bf16.msra.mxu0 %v2233
  %2280 = vmatprep.subr.bf16.mxu0 %v2237
  %2281 = vmatpush1.bf16.msra.mxu0 %v2236
  %2282 = vmatprep.subr.bf16.mxu0 %v2240
  %2283 = vmatpush1.bf16.msra.mxu0 %v2239
  %2284 = vmatprep.subr.bf16.mxu0 %v2243
  %2285 = vmatpush1.bf16.msra.mxu0 %v2242
  %2286 = vmatprep.subr.bf16.mxu0 %v2246
  %2287 = vmatpush1.bf16.msra.mxu0 %v2245
  %2288 = vmatprep.subr.bf16.mxu0 0
  %2289 = vmatpush1.bf16.msra.mxu0 0
  %2290 = vmatprep.subr.bf16.mxu0 0
  %2291 = vmatpush1.bf16.msra.mxu0 0
  %2292 = vmatprep.subr.bf16.mxu0 0
  %2293 = vmatpush1.bf16.msra.mxu0 0
  %2294 = vmatprep.subr.bf16.mxu0 0
  %2295 = vmatpush1.bf16.msra.mxu0 0
  %2296 = vmatprep.subr.bf16.mxu0 0
  %2297 = vmatpush1.bf16.msra.mxu0 0
  %2298 = vmatprep.subr.bf16.mxu0 0
  %2299 = vmatpush1.bf16.msra.mxu0 0
  %2300 = vmatprep.subr.bf16.mxu0 0
  %2301 = vmatpush1.bf16.msra.mxu0 0
  %2302 = vmatprep.subr.bf16.mxu0 0
  %2303 = vmatpush1.bf16.msra.mxu0 0
  %2304 = vmatprep.mubr.bf16.mxu0 0
  %2305 = vmatmul.mubr.bf16.gmra.mrb[0].mxu0 %v2103
  %v2306 = vpop.f32.mrb[0].mxu0
  %v2307 = vadd.f32 0.0, %v2306
  %v2308 = vpop.f32.mrb[0].mxu0
  %v2309 = vadd.f32 0.0, %v2308
  %v2310 = vpop.f32.mrb[0].mxu0
  %v2311 = vpop.f32.mrb[0].mxu0
  %2312 = vdwg.mxu0
  %2313 = vmatprep.subr.bf16.mxu0 0
  %2314 = vmatpush1.bf16.msra.mxu0 %v2226
  %2315 = vmatprep.subr.bf16.mxu0 0
  %2316 = vmatpush1.bf16.msra.mxu0 %v2229
  %2317 = vmatprep.subr.bf16.mxu0 0
  %2318 = vmatpush1.bf16.msra.mxu0 %v2232
  %2319 = vmatprep.subr.bf16.mxu0 0
  %2320 = vmatpush1.bf16.msra.mxu0 %v2235
  %2321 = vmatprep.subr.bf16.mxu0 0
  %2322 = vmatpush1.bf16.msra.mxu0 %v2238
  %2323 = vmatprep.subr.bf16.mxu0 0
  %2324 = vmatpush1.bf16.msra.mxu0 %v2241
  %2325 = vmatprep.subr.bf16.mxu0 0
  %2326 = vmatpush1.bf16.msra.mxu0 %v2244
  %2327 = vmatprep.subr.bf16.mxu0 0
  %2328 = vmatpush1.bf16.msra.mxu0 %v2247
  %2329 = vmatprep.subr.bf16.mxu0 0
  %2330 = vmatpush1.bf16.msra.mxu0 0
  %2331 = vmatprep.subr.bf16.mxu0 0
  %2332 = vmatpush1.bf16.msra.mxu0 0
  %2333 = vmatprep.subr.bf16.mxu0 0
  %2334 = vmatpush1.bf16.msra.mxu0 0
  %2335 = vmatprep.subr.bf16.mxu0 0
  %2336 = vmatpush1.bf16.msra.mxu0 0
  %2337 = vmatprep.subr.bf16.mxu0 0
  %2338 = vmatpush1.bf16.msra.mxu0 0
  %2339 = vmatprep.subr.bf16.mxu0 0
  %2340 = vmatpush1.bf16.msra.mxu0 0
  %2341 = vmatprep.subr.bf16.mxu0 0
  %2342 = vmatpush1.bf16.msra.mxu0 0
  %2343 = vmatprep.subr.bf16.mxu0 0
  %2344 = vmatpush1.bf16.msra.mxu0 0
  %2345 = vmatprep.mubr.bf16.mxu0 0
  %2346 = vmatmul.mubr.bf16.gmra.mrb[0].mxu0 %v2103
  %v2347 = vpop.f32.mrb[0].mxu0
  %v2348 = vadd.f32 0.0, %v2347
  %v2349 = vpop.f32.mrb[0].mxu0
  %v2350 = vpop.f32.mrb[0].mxu0
  %v2351 = vpop.f32.mrb[0].mxu0
  %2352 = vdwg.mxu0
  %v2353 = vadd.f32 %v2109, %v2307
  %v2354 = vxor.u32 %v2353, 2147483648
  %v2355 = vmul.f32 %v2354, 1.442695
  %v2356 = vpow.pop %v2355
  %v2357 = vadd.f32 %v2356, 1.0
  %v2358 = vrcp.pop %v2357
  %v2359 = vmul.f32 1.0, %v2358
  %v2360 = vadd.f32 %v2110, %v2309
  %v2361 = vxor.u32 %v2360, 2147483648
  %v2362 = vmul.f32 %v2361, 1.442695
  %v2363 = vpow.pop %v2362
  %v2364 = vadd.f32 %v2363, 1.0
  %v2365 = vrcp.pop %v2364
  %v2366 = vmul.f32 1.0, %v2365
  %v2367 = vadd.f32 %v2348, %v480
  %v2368 = vmul.f32 %v2359, %v2367
  %v2369 = vadd.f32 %v2111, %v2368
  %v2370 = vtanh.pop %v2369
  %v2371 = vsub.f32 %v2102, %v2370
  %v2372 = vmul.f32 %v2366, %v2371
  %v2373 = vadd.f32 %v2370, %v2372
  %v2374 = vpack.c.bf16 %v2373, %v2373
  %s2375 = scalar_lea.vmem [#allocation3], 24
  %2376 = vst [vmem:[%s2375] sm:$0xf] %v2374
  %s2377 = scalar_lea.vmem [#allocation2], 84
  %v2378 = vld [vmem:[%s2377] sm:$0xff]
  %v2379 = vld [vmem:[%s2377 + $0x8] sm:$0xf]
  %v2380 = vunpack.c.l.bf16 %v2378
  %v2381 = vunpack.c.h.bf16 %v2378
  %v2382 = vunpack.c.l.bf16 %v2379
  %v2383 = vld [vmem:[%s3] sm:$0xff]
  %v2384 = vld [vmem:[%s3 + $0x8] sm:$0xf]
  %v2385 = vld [vmem:[%s3 + $0xc] sm:$0xff]
  %v2386 = vld [vmem:[%s3 + $0x14] sm:$0xf]
  %v2387 = vld [vmem:[%s3 + $0x18] sm:$0xff]
  %v2388 = vld [vmem:[%s3 + $0x20] sm:$0xf]
  %v2389 = vld [vmem:[%s3 + $0x24] sm:$0xff]
  %v2390 = vld [vmem:[%s3 + $0x2c] sm:$0xf]
  %v2391 = vld [vmem:[%s3 + $0x30] sm:$0xff]
  %v2392 = vld [vmem:[%s3 + $0x38] sm:$0xf]
  %v2393 = vld [vmem:[%s3 + $0x3c] sm:$0xff]
  %v2394 = vld [vmem:[%s3 + $0x44] sm:$0xf]
  %v2395 = vld [vmem:[%s3 + $0x48] sm:$0xff]
  %v2396 = vld [vmem:[%s3 + $0x50] sm:$0xf]
  %v2397 = vld [vmem:[%s3 + $0x54] sm:$0xff]
  %v2398 = vld [vmem:[%s3 + $0x5c] sm:$0xf]
  %v2399 = vld [vmem:[%s3 + $0x60] sm:$0xff]
  %v2400 = vld [vmem:[%s3 + $0x68] sm:$0xf]
  %v2401 = vld [vmem:[%s3 + $0x6c] sm:$0xff]
  %v2402 = vld [vmem:[%s3 + $0x74] sm:$0xf]
  %v2403 = vld [vmem:[%s3 + $0x78] sm:$0xff]
  %v2404 = vld [vmem:[%s3 + $0x80] sm:$0xf]
  %v2405 = vld [vmem:[%s3 + $0x84] sm:$0xff]
  %v2406 = vld [vmem:[%s3 + $0x8c] sm:$0xf]
  %v2407 = vld [vmem:[%s3 + $0x90] sm:$0xff]
  %v2408 = vld [vmem:[%s3 + $0x98] sm:$0xf]
  %v2409 = vld [vmem:[%s3 + $0x9c] sm:$0xff]
  %v2410 = vld [vmem:[%s3 + $0xa4] sm:$0xf]
  %v2411 = vld [vmem:[%s3 + $0xa8] sm:$0xff]
  %v2412 = vld [vmem:[%s3 + $0xb0] sm:$0xf]
  %v2413 = vld [vmem:[%s3 + $0xb4] sm:$0xff]
  %v2414 = vld [vmem:[%s3 + $0xbc] sm:$0xf]
  %v2447 = vunpack.c.l.b16 %v2383
  %v2448 = vunpack.c.h.b16 %v2383
  %v2449 = vunpack.c.l.b16 %v2384
  %v2450 = vunpack.c.l.b16 %v2385
  %v2451 = vunpack.c.h.b16 %v2385
  %v2452 = vunpack.c.l.b16 %v2386
  %v2453 = vunpack.c.l.b16 %v2387
  %v2454 = vunpack.c.h.b16 %v2387
  %v2455 = vunpack.c.l.b16 %v2388
  %v2456 = vunpack.c.l.b16 %v2389
  %v2457 = vunpack.c.h.b16 %v2389
  %v2458 = vunpack.c.l.b16 %v2390
  %v2459 = vunpack.c.l.b16 %v2391
  %v2460 = vunpack.c.h.b16 %v2391
  %v2461 = vunpack.c.l.b16 %v2392
  %v2462 = vunpack.c.l.b16 %v2393
  %v2463 = vunpack.c.h.b16 %v2393
  %v2464 = vunpack.c.l.b16 %v2394
  %v2465 = vunpack.c.l.b16 %v2395
  %v2466 = vunpack.c.h.b16 %v2395
  %v2467 = vunpack.c.l.b16 %v2396
  %v2468 = vunpack.c.l.b16 %v2397
  %v2469 = vunpack.c.h.b16 %v2397
  %v2470 = vunpack.c.l.b16 %v2398
  %v2471 = vunpack.c.l.b16 %v2399
  %v2472 = vunpack.c.h.b16 %v2399
  %v2473 = vunpack.c.l.b16 %v2400
  %v2474 = vunpack.c.l.b16 %v2401
  %v2475 = vunpack.c.h.b16 %v2401
  %v2476 = vunpack.c.l.b16 %v2402
  %v2477 = vunpack.c.l.b16 %v2403
  %v2478 = vunpack.c.h.b16 %v2403
  %v2479 = vunpack.c.l.b16 %v2404
  %v2480 = vunpack.c.l.b16 %v2405
  %v2481 = vunpack.c.h.b16 %v2405
  %v2482 = vunpack.c.l.b16 %v2406
  %v2483 = vunpack.c.l.b16 %v2407
  %v2484 = vunpack.c.h.b16 %v2407
  %v2485 = vunpack.c.l.b16 %v2408
  %v2486 = vunpack.c.l.b16 %v2409
  %v2487 = vunpack.c.h.b16 %v2409
  %v2488 = vunpack.c.l.b16 %v2410
  %v2489 = vunpack.c.l.b16 %v2411
  %v2490 = vunpack.c.h.b16 %v2411
  %v2491 = vunpack.c.l.b16 %v2412
  %v2492 = vunpack.c.l.b16 %v2413
  %v2493 = vunpack.c.h.b16 %v2413
  %v2494 = vunpack.c.l.b16 %v2414
  %v2495 = vpack.c.b16 %v2450, %v2447
  %v2496 = vpack.c.b16 %v2451, %v2448
  %v2497 = vpack.c.b16 %v2452, %v2449
  %v2498 = vpack.c.b16 %v2456, %v2453
  %v2499 = vpack.c.b16 %v2457, %v2454
  %v2500 = vpack.c.b16 %v2458, %v2455
  %v2501 = vpack.c.b16 %v2462, %v2459
  %v2502 = vpack.c.b16 %v2463, %v2460
  %v2503 = vpack.c.b16 %v2464, %v2461
  %v2504 = vpack.c.b16 %v2468, %v2465
  %v2505 = vpack.c.b16 %v2469, %v2466
  %v2506 = vpack.c.b16 %v2470, %v2467
  %v2507 = vpack.c.b16 %v2474, %v2471
  %v2508 = vpack.c.b16 %v2475, %v2472
  %v2509 = vpack.c.b16 %v2476, %v2473
  %v2510 = vpack.c.b16 %v2480, %v2477
  %v2511 = vpack.c.b16 %v2481, %v2478
  %v2512 = vpack.c.b16 %v2482, %v2479
  %v2513 = vpack.c.b16 %v2486, %v2483
  %v2514 = vpack.c.b16 %v2487, %v2484
  %v2515 = vpack.c.b16 %v2488, %v2485
  %v2516 = vpack.c.b16 %v2492, %v2489
  %v2517 = vpack.c.b16 %v2493, %v2490
  %v2518 = vpack.c.b16 %v2494, %v2491
  %2543 = vmatprep.subr.bf16.mxu0 %v2496
  %2544 = vmatpush1.bf16.msra.mxu0 %v2495
  %2545 = vmatprep.subr.bf16.mxu0 %v2499
  %2546 = vmatpush1.bf16.msra.mxu0 %v2498
  %2547 = vmatprep.subr.bf16.mxu0 %v2502
  %2548 = vmatpush1.bf16.msra.mxu0 %v2501
  %2549 = vmatprep.subr.bf16.mxu0 %v2505
  %2550 = vmatpush1.bf16.msra.mxu0 %v2504
  %2551 = vmatprep.subr.bf16.mxu0 %v2508
  %2552 = vmatpush1.bf16.msra.mxu0 %v2507
  %2553 = vmatprep.subr.bf16.mxu0 %v2511
  %2554 = vmatpush1.bf16.msra.mxu0 %v2510
  %2555 = vmatprep.subr.bf16.mxu0 %v2514
  %2556 = vmatpush1.bf16.msra.mxu0 %v2513
  %2557 = vmatprep.subr.bf16.mxu0 %v2517
  %2558 = vmatpush1.bf16.msra.mxu0 %v2516
  %2559 = vmatprep.subr.bf16.mxu0 0
  %2560 = vmatpush1.bf16.msra.mxu0 0
  %2561 = vmatprep.subr.bf16.mxu0 0
  %2562 = vmatpush1.bf16.msra.mxu0 0
  %2563 = vmatprep.subr.bf16.mxu0 0
  %2564 = vmatpush1.bf16.msra.mxu0 0
  %2565 = vmatprep.subr.bf16.mxu0 0
  %2566 = vmatpush1.bf16.msra.mxu0 0
  %2567 = vmatprep.subr.bf16.mxu0 0
  %2568 = vmatpush1.bf16.msra.mxu0 0
  %2569 = vmatprep.subr.bf16.mxu0 0
  %2570 = vmatpush1.bf16.msra.mxu0 0
  %2571 = vmatprep.subr.bf16.mxu0 0
  %2572 = vmatpush1.bf16.msra.mxu0 0
  %2573 = vmatprep.subr.bf16.mxu0 0
  %2574 = vmatpush1.bf16.msra.mxu0 0
  %2575 = vmatprep.mubr.bf16.mxu0 0
  %2576 = vmatmul.mubr.bf16.gmra.mrb[0].mxu0 %v2374
  %v2577 = vpop.f32.mrb[0].mxu0
  %v2578 = vadd.f32 0.0, %v2577
  %v2579 = vpop.f32.mrb[0].mxu0
  %v2580 = vadd.f32 0.0, %v2579
  %v2581 = vpop.f32.mrb[0].mxu0
  %v2582 = vpop.f32.mrb[0].mxu0
  %2583 = vdwg.mxu0
  %2584 = vmatprep.subr.bf16.mxu0 0
  %2585 = vmatpush1.bf16.msra.mxu0 %v2497
  %2586 = vmatprep.subr.bf16.mxu0 0
  %2587 = vmatpush1.bf16.msra.mxu0 %v2500
  %2588 = vmatprep.subr.bf16.mxu0 0
  %2589 = vmatpush1.bf16.msra.mxu0 %v2503
  %2590 = vmatprep.subr.bf16.mxu0 0
  %2591 = vmatpush1.bf16.msra.mxu0 %v2506
  %2592 = vmatprep.subr.bf16.mxu0 0
  %2593 = vmatpush1.bf16.msra.mxu0 %v2509
  %2594 = vmatprep.subr.bf16.mxu0 0
  %2595 = vmatpush1.bf16.msra.mxu0 %v2512
  %2596 = vmatprep.subr.bf16.mxu0 0
  %2597 = vmatpush1.bf16.msra.mxu0 %v2515
  %2598 = vmatprep.subr.bf16.mxu0 0
  %2599 = vmatpush1.bf16.msra.mxu0 %v2518
  %2600 = vmatprep.subr.bf16.mxu0 0
  %2601 = vmatpush1.bf16.msra.mxu0 0
  %2602 = vmatprep.subr.bf16.mxu0 0
  %2603 = vmatpush1.bf16.msra.mxu0 0
  %2604 = vmatprep.subr.bf16.mxu0 0
  %2605 = vmatpush1.bf16.msra.mxu0 0
  %2606 = vmatprep.subr.bf16.mxu0 0
  %2607 = vmatpush1.bf16.msra.mxu0 0
  %2608 = vmatprep.subr.bf16.mxu0 0
  %2609 = vmatpush1.bf16.msra.mxu0 0
  %2610 = vmatprep.subr.bf16.mxu0 0
  %2611 = vmatpush1.bf16.msra.mxu0 0
  %2612 = vmatprep.subr.bf16.mxu0 0
  %2613 = vmatpush1.bf16.msra.mxu0 0
  %2614 = vmatprep.subr.bf16.mxu0 0
  %2615 = vmatpush1.bf16.msra.mxu0 0
  %2616 = vmatprep.mubr.bf16.mxu0 0
  %2617 = vmatmul.mubr.bf16.gmra.mrb[0].mxu0 %v2374
  %v2618 = vpop.f32.mrb[0].mxu0
  %v2619 = vadd.f32 0.0, %v2618
  %v2620 = vpop.f32.mrb[0].mxu0
  %v2621 = vpop.f32.mrb[0].mxu0
  %v2622 = vpop.f32.mrb[0].mxu0
  %2623 = vdwg.mxu0
  %v2624 = vadd.f32 %v2380, %v2578
  %v2625 = vxor.u32 %v2624, 2147483648
  %v2626 = vmul.f32 %v2625, 1.442695
  %v2627 = vpow.pop %v2626
  %v2628 = vadd.f32 %v2627, 1.0
  %v2629 = vrcp.pop %v2628
  %v2630 = vmul.f32 1.0, %v2629
  %v2631 = vadd.f32 %v2381, %v2580
  %v2632 = vxor.u32 %v2631, 2147483648
  %v2633 = vmul.f32 %v2632, 1.442695
  %v2634 = vpow.pop %v2633
  %v2635 = vadd.f32 %v2634, 1.0
  %v2636 = vrcp.pop %v2635
  %v2637 = vmul.f32 1.0, %v2636
  %v2638 = vadd.f32 %v2619, %v480
  %v2639 = vmul.f32 %v2630, %v2638
  %v2640 = vadd.f32 %v2382, %v2639
  %v2641 = vtanh.pop %v2640
  %v2642 = vsub.f32 %v2373, %v2641
  %v2643 = vmul.f32 %v2637, %v2642
  %v2644 = vadd.f32 %v2641, %v2643
  %v2645 = vpack.c.bf16 %v2644, %v2644
  %s2646 = scalar_lea.vmem [#allocation3], 28
  %2647 = vst [vmem:[%s2646] sm:$0xf] %v2645
  %2648 = vst [vmem:[%s9] sm:$0xff] %v2644
  %v2649 = vld [vmem:[%s2] sm:$0xff]
  %v2650 = vld [vmem:[%s2 + $0x8] sm:$0xf]
  %v2651 = vld [vmem:[%s2 + $0xc] sm:$0xff]
  %v2652 = vld [vmem:[%s2 + $0x14] sm:$0xf]
  %v2653 = vld [vmem:[%s2 + $0x18] sm:$0xff]
  %v2654 = vld [vmem:[%s2 + $0x20] sm:$0xf]
  %v2655 = vld [vmem:[%s2 + $0x24] sm:$0xff]
  %v2656 = vld [vmem:[%s2 + $0x2c] sm:$0xf]
  %v2657 = vld [vmem:[%s2 + $0x30] sm:$0xff]
  %v2658 = vld [vmem:[%s2 + $0x38] sm:$0xf]
  %v2659 = vld [vmem:[%s2 + $0x3c] sm:$0xff]
  %v2660 = vld [vmem:[%s2 + $0x44] sm:$0xf]
  %v2661 = vld [vmem:[%s2 + $0x48] sm:$0xff]
  %v2662 = vld [vmem:[%s2 + $0x50] sm:$0xf]
  %v2663 = vld [vmem:[%s2 + $0x54] sm:$0xff]
  %v2664 = vld [vmem:[%s2 + $0x5c] sm:$0xf]
  %v2665 = vld [vmem:[%s2 + $0x60] sm:$0xff]
  %v2666 = vld [vmem:[%s2 + $0x68] sm:$0xf]
  %v2667 = vld [vmem:[%s2 + $0x6c] sm:$0xff]
  %v2668 = vld [vmem:[%s2 + $0x74] sm:$0xf]
  %v2669 = vld [vmem:[%s2 + $0x78] sm:$0xff]
  %v2670 = vld [vmem:[%s2 + $0x80] sm:$0xf]
  %v2671 = vld [vmem:[%s2 + $0x84] sm:$0xff]
  %v2672 = vld [vmem:[%s2 + $0x8c] sm:$0xf]
  %v2673 = vld [vmem:[%s2 + $0x90] sm:$0xff]
  %v2674 = vld [vmem:[%s2 + $0x98] sm:$0xf]
  %v2675 = vld [vmem:[%s2 + $0x9c] sm:$0xff]
  %v2676 = vld [vmem:[%s2 + $0xa4] sm:$0xf]
  %v2677 = vld [vmem:[%s2 + $0xa8] sm:$0xff]
  %v2678 = vld [vmem:[%s2 + $0xb0] sm:$0xf]
  %v2679 = vld [vmem:[%s2 + $0xb4] sm:$0xff]
  %v2680 = vld [vmem:[%s2 + $0xbc] sm:$0xf]
  %s2681 = scalar_lea.vmem %s4, 3
  %v2682 = vld [vmem:[%s2681] sm:$0x7]
  %v2683 = vld [vmem:[#allocation3] sm:$0xf]
  %v2684 = vld [vmem:[#allocation3 + $0x4] sm:$0xf]
  %v2685 = vld [vmem:[#allocation3 + $0x8] sm:$0xf]
  %v2686 = vld [vmem:[#allocation3 + $0xc] sm:$0xf]
  %v2687 = vld [vmem:[#allocation3 + $0x10] sm:$0xf]
  %v2688 = vld [vmem:[#allocation3 + $0x14] sm:$0xf]
  %v2689 = vld [vmem:[#allocation3 + $0x18] sm:$0xf]
  %v2690 = vld [vmem:[#allocation3 + $0x1c] sm:$0xf]
  %v2692 = vlaneseq
  %v2693 = vshrl.u32 %v2692, 7
  %v2694 = vsub.s32 0, %v2693
  %v2695 = vrot.slane %v2682, %v2694
  %v2696 = vlaneseq
  %v2697 = vshrl.u32 %v2696, 7
  %v2698 = vsub.s32 1, %v2697
  %v2699 = vrot.slane %v2682, %v2698
  %v2700 = vlaneseq
  %v2701 = vshrl.u32 %v2700, 7
  %v2702 = vsub.s32 2, %v2701
  %v2703 = vrot.slane %v2682, %v2702
  %v2715 = vunpack.c.l.b16 %v2683
  %v2716 = vunpack.c.l.b16 %v2684
  %v2717 = vunpack.c.l.b16 %v2685
  %v2718 = vunpack.c.l.b16 %v2686
  %v2719 = vunpack.c.l.b16 %v2687
  %v2720 = vunpack.c.l.b16 %v2688
  %v2721 = vunpack.c.l.b16 %v2689
  %v2722 = vunpack.c.l.b16 %v2690
  %v2723 = vpack.c.b16 %v2716, %v2715
  %v2724 = vpack.c.b16 %v2718, %v2717
  %v2725 = vpack.c.b16 %v2720, %v2719
  %v2726 = vpack.c.b16 %v2722, %v2721
  %v2763 = vunpack.c.l.b16 %v2649
  %v2764 = vunpack.c.h.b16 %v2649
  %v2765 = vunpack.c.l.b16 %v2650
  %v2766 = vunpack.c.l.b16 %v2651
  %v2767 = vunpack.c.h.b16 %v2651
  %v2768 = vunpack.c.l.b16 %v2652
  %v2769 = vunpack.c.l.b16 %v2653
  %v2770 = vunpack.c.h.b16 %v2653
  %v2771 = vunpack.c.l.b16 %v2654
  %v2772 = vunpack.c.l.b16 %v2655
  %v2773 = vunpack.c.h.b16 %v2655
  %v2774 = vunpack.c.l.b16 %v2656
  %v2775 = vunpack.c.l.b16 %v2657
  %v2776 = vunpack.c.h.b16 %v2657
  %v2777 = vunpack.c.l.b16 %v2658
  %v2778 = vunpack.c.l.b16 %v2659
  %v2779 = vunpack.c.h.b16 %v2659
  %v2780 = vunpack.c.l.b16 %v2660
  %v2781 = vunpack.c.l.b16 %v2661
  %v2782 = vunpack.c.h.b16 %v2661
  %v2783 = vunpack.c.l.b16 %v2662
  %v2784 = vunpack.c.l.b16 %v2663
  %v2785 = vunpack.c.h.b16 %v2663
  %v2786 = vunpack.c.l.b16 %v2664
  %v2787 = vunpack.c.l.b16 %v2665
  %v2788 = vunpack.c.h.b16 %v2665
  %v2789 = vunpack.c.l.b16 %v2666
  %v2790 = vunpack.c.l.b16 %v2667
  %v2791 = vunpack.c.h.b16 %v2667
  %v2792 = vunpack.c.l.b16 %v2668
  %v2793 = vunpack.c.l.b16 %v2669
  %v2794 = vunpack.c.h.b16 %v2669
  %v2795 = vunpack.c.l.b16 %v2670
  %v2796 = vunpack.c.l.b16 %v2671
  %v2797 = vunpack.c.h.b16 %v2671
  %v2798 = vunpack.c.l.b16 %v2672
  %v2799 = vunpack.c.l.b16 %v2673
  %v2800 = vunpack.c.h.b16 %v2673
  %v2801 = vunpack.c.l.b16 %v2674
  %v2802 = vunpack.c.l.b16 %v2675
  %v2803 = vunpack.c.h.b16 %v2675
  %v2804 = vunpack.c.l.b16 %v2676
  %v2805 = vunpack.c.l.b16 %v2677
  %v2806 = vunpack.c.h.b16 %v2677
  %v2807 = vunpack.c.l.b16 %v2678
  %v2808 = vunpack.c.l.b16 %v2679
  %v2809 = vunpack.c.h.b16 %v2679
  %v2810 = vunpack.c.l.b16 %v2680
  %v2811 = vpack.c.b16 %v2766, %v2763
  %v2812 = vpack.c.b16 %v2767, %v2764
  %v2813 = vpack.c.b16 %v2768, %v2765
  %v2814 = vpack.c.b16 %v2772, %v2769
  %v2815 = vpack.c.b16 %v2773, %v2770
  %v2816 = vpack.c.b16 %v2774, %v2771
  %v2817 = vpack.c.b16 %v2778, %v2775
  %v2818 = vpack.c.b16 %v2779, %v2776
  %v2819 = vpack.c.b16 %v2780, %v2777
  %v2820 = vpack.c.b16 %v2784, %v2781
  %v2821 = vpack.c.b16 %v2785, %v2782
  %v2822 = vpack.c.b16 %v2786, %v2783
  %v2823 = vpack.c.b16 %v2790, %v2787
  %v2824 = vpack.c.b16 %v2791, %v2788
  %v2825 = vpack.c.b16 %v2792, %v2789
  %v2826 = vpack.c.b16 %v2796, %v2793
  %v2827 = vpack.c.b16 %v2797, %v2794
  %v2828 = vpack.c.b16 %v2798, %v2795
  %v2829 = vpack.c.b16 %v2802, %v2799
  %v2830 = vpack.c.b16 %v2803, %v2800
  %v2831 = vpack.c.b16 %v2804, %v2801
  %v2832 = vpack.c.b16 %v2808, %v2805
  %v2833 = vpack.c.b16 %v2809, %v2806
  %v2834 = vpack.c.b16 %v2810, %v2807
  %2859 = vmatprep.subr.bf16.mxu0 %v2812
  %2860 = vmatpush1.bf16.msra.mxu0 %v2811
  %2861 = vmatprep.subr.bf16.mxu0 %v2815
  %2862 = vmatpush1.bf16.msra.mxu0 %v2814
  %2863 = vmatprep.subr.bf16.mxu0 %v2818
  %2864 = vmatpush1.bf16.msra.mxu0 %v2817
  %2865 = vmatprep.subr.bf16.mxu0 %v2821
  %2866 = vmatpush1.bf16.msra.mxu0 %v2820
  %2867 = vmatprep.subr.bf16.mxu0 %v2824
  %2868 = vmatpush1.bf16.msra.mxu0 %v2823
  %2869 = vmatprep.subr.bf16.mxu0 %v2827
  %2870 = vmatpush1.bf16.msra.mxu0 %v2826
  %2871 = vmatprep.subr.bf16.mxu0 %v2830
  %2872 = vmatpush1.bf16.msra.mxu0 %v2829
  %2873 = vmatprep.subr.bf16.mxu0 %v2833
  %2874 = vmatpush1.bf16.msra.mxu0 %v2832
  %2875 = vmatprep.subr.bf16.mxu0 0
  %2876 = vmatpush1.bf16.msra.mxu0 0
  %2877 = vmatprep.subr.bf16.mxu0 0
  %2878 = vmatpush1.bf16.msra.mxu0 0
  %2879 = vmatprep.subr.bf16.mxu0 0
  %2880 = vmatpush1.bf16.msra.mxu0 0
  %2881 = vmatprep.subr.bf16.mxu0 0
  %2882 = vmatpush1.bf16.msra.mxu0 0
  %2883 = vmatprep.subr.bf16.mxu0 0
  %2884 = vmatpush1.bf16.msra.mxu0 0
  %2885 = vmatprep.subr.bf16.mxu0 0
  %2886 = vmatpush1.bf16.msra.mxu0 0
  %2887 = vmatprep.subr.bf16.mxu0 0
  %2888 = vmatpush1.bf16.msra.mxu0 0
  %2889 = vmatprep.subr.bf16.mxu0 0
  %2890 = vmatpush1.bf16.msra.mxu0 0
  %2891 = vmatprep.mubr.bf16.mxu0 0
  %2892 = vmatmul.mubr.bf16.gmra.mrb[0].mxu0 %v2723
  %v2893 = vpop.f32.mrb[0].mxu0
  %v2894 = vadd.f32 %v2695, %v2893
  %v2895 = vpop.f32.mrb[0].mxu0
  %v2896 = vadd.f32 %v2699, %v2895
  %v2897 = vpop.f32.mrb[0].mxu0
  %v2898 = vadd.f32 %v2695, %v2897
  %v2899 = vpop.f32.mrb[0].mxu0
  %v2900 = vadd.f32 %v2699, %v2899
  %2901 = vmatprep.mubr.bf16.mxu0 0
  %2902 = vmatmul.mubr.bf16.gmra.mrb[0].mxu0 %v2724
  %v2903 = vpop.f32.mrb[0].mxu0
  %v2904 = vadd.f32 %v2695, %v2903
  %v2905 = vpop.f32.mrb[0].mxu0
  %v2906 = vadd.f32 %v2699, %v2905
  %v2907 = vpop.f32.mrb[0].mxu0
  %v2908 = vadd.f32 %v2695, %v2907
  %v2909 = vpop.f32.mrb[0].mxu0
  %v2910 = vadd.f32 %v2699, %v2909
  %2911 = vmatprep.mubr.bf16.mxu0 0
  %2912 = vmatmul.mubr.bf16.gmra.mrb[0].mxu0 %v2725
  %v2913 = vpop.f32.mrb[0].mxu0
  %v2914 = vadd.f32 %v2695, %v2913
  %v2915 = vpop.f32.mrb[0].mxu0
  %v2916 = vadd.f32 %v2699, %v2915
  %v2917 = vpop.f32.mrb[0].mxu0
  %v2918 = vadd.f32 %v2695, %v2917
  %v2919 = vpop.f32.mrb[0].mxu0
  %v2920 = vadd.f32 %v2699, %v2919
  %2921 = vmatprep.mubr.bf16.mxu0 0
  %2922 = vmatmul.mubr.bf16.gmra.mrb[0].mxu0 %v2726
  %v2923 = vpop.f32.mrb[0].mxu0
  %v2924 = vadd.f32 %v2695, %v2923
  %v2925 = vpop.f32.mrb[0].mxu0
  %v2926 = vadd.f32 %v2699, %v2925
  %v2927 = vpop.f32.mrb[0].mxu0
  %v2928 = vadd.f32 %v2695, %v2927
  %v2929 = vpop.f32.mrb[0].mxu0
  %v2930 = vadd.f32 %v2699, %v2929
  %2931 = vdwg.mxu0
  %2932 = vmatprep.subr.bf16.mxu0 0
  %2933 = vmatpush1.bf16.msra.mxu0 %v2813
  %2934 = vmatprep.subr.bf16.mxu0 0
  %2935 = vmatpush1.bf16.msra.mxu0 %v2816
  %2936 = vmatprep.subr.bf16.mxu0 0
  %2937 = vmatpush1.bf16.msra.mxu0 %v2819
  %2938 = vmatprep.subr.bf16.mxu0 0
  %2939 = vmatpush1.bf16.msra.mxu0 %v2822
  %2940 = vmatprep.subr.bf16.mxu0 0
  %2941 = vmatpush1.bf16.msra.mxu0 %v2825
  %2942 = vmatprep.subr.bf16.mxu0 0
  %2943 = vmatpush1.bf16.msra.mxu0 %v2828
  %2944 = vmatprep.subr.bf16.mxu0 0
  %2945 = vmatpush1.bf16.msra.mxu0 %v2831
  %2946 = vmatprep.subr.bf16.mxu0 0
  %2947 = vmatpush1.bf16.msra.mxu0 %v2834
  %2948 = vmatprep.subr.bf16.mxu0 0
  %2949 = vmatpush1.bf16.msra.mxu0 0
  %2950 = vmatprep.subr.bf16.mxu0 0
  %2951 = vmatpush1.bf16.msra.mxu0 0
  %2952 = vmatprep.subr.bf16.mxu0 0
  %2953 = vmatpush1.bf16.msra.mxu0 0
  %2954 = vmatprep.subr.bf16.mxu0 0
  %2955 = vmatpush1.bf16.msra.mxu0 0
  %2956 = vmatprep.subr.bf16.mxu0 0
  %2957 = vmatpush1.bf16.msra.mxu0 0
  %2958 = vmatprep.subr.bf16.mxu0 0
  %2959 = vmatpush1.bf16.msra.mxu0 0
  %2960 = vmatprep.subr.bf16.mxu0 0
  %2961 = vmatpush1.bf16.msra.mxu0 0
  %2962 = vmatprep.subr.bf16.mxu0 0
  %2963 = vmatpush1.bf16.msra.mxu0 0
  %2964 = vmatprep.mubr.bf16.mxu0 0
  %2965 = vmatmul.mubr.bf16.gmra.mrb[0].mxu0 %v2723
  %v2966 = vpop.f32.mrb[0].mxu0
  %v2967 = vadd.f32 %v2703, %v2966
  %v2968 = vpop.f32.mrb[0].mxu0
  %v2969 = vpop.f32.mrb[0].mxu0
  %v2970 = vadd.f32 %v2703, %v2969
  %v2971 = vpop.f32.mrb[0].mxu0
  %2972 = vmatprep.mubr.bf16.mxu0 0
  %2973 = vmatmul.mubr.bf16.gmra.mrb[0].mxu0 %v2724
  %v2974 = vpop.f32.mrb[0].mxu0
  %v2975 = vadd.f32 %v2703, %v2974
  %v2976 = vpop.f32.mrb[0].mxu0
  %v2977 = vpop.f32.mrb[0].mxu0
  %v2978 = vadd.f32 %v2703, %v2977
  %v2979 = vpop.f32.mrb[0].mxu0
  %2980 = vmatprep.mubr.bf16.mxu0 0
  %2981 = vmatmul.mubr.bf16.gmra.mrb[0].mxu0 %v2725
  %v2982 = vpop.f32.mrb[0].mxu0
  %v2983 = vadd.f32 %v2703, %v2982
  %v2984 = vpop.f32.mrb[0].mxu0
  %v2985 = vpop.f32.mrb[0].mxu0
  %v2986 = vadd.f32 %v2703, %v2985
  %v2987 = vpop.f32.mrb[0].mxu0
  %2988 = vmatprep.mubr.bf16.mxu0 0
  %2989 = vmatmul.mubr.bf16.gmra.mrb[0].mxu0 %v2726
  %v2990 = vpop.f32.mrb[0].mxu0
  %v2991 = vadd.f32 %v2703, %v2990
  %v2992 = vpop.f32.mrb[0].mxu0
  %v2993 = vpop.f32.mrb[0].mxu0
  %v2994 = vadd.f32 %v2703, %v2993
  %v2995 = vpop.f32.mrb[0].mxu0
  %2996 = vdwg.mxu0
  %v2997 = vpack.c.bf16 %v2898, %v2894
  %v2998 = vpack.c.bf16 %v2900, %v2896
  %v2999 = vpack.c.bf16 %v2970, %v2967
  %v3000 = vpack.c.bf16 %v2908, %v2904
  %v3001 = vpack.c.bf16 %v2910, %v2906
  %v3002 = vpack.c.bf16 %v2978, %v2975
  %v3003 = vpack.c.bf16 %v2918, %v2914
  %v3004 = vpack.c.bf16 %v2920, %v2916
  %v3005 = vpack.c.bf16 %v2986, %v2983
  %v3006 = vpack.c.bf16 %v2928, %v2924
  %v3007 = vpack.c.bf16 %v2930, %v2926
  %v3008 = vpack.c.bf16 %v2994, %v2991
  %v3021 = vunpack.c.l.b16 %v2997
  %v3022 = vunpack.c.l.b16 %v2998
  %v3023 = vunpack.c.l.b16 %v2999
  %v3024 = vunpack.c.h.b16 %v2997
  %v3025 = vunpack.c.h.b16 %v2998
  %v3026 = vunpack.c.h.b16 %v2999
  %v3027 = vunpack.c.l.b16 %v3000
  %v3028 = vunpack.c.l.b16 %v3001
  %v3029 = vunpack.c.l.b16 %v3002
  %v3030 = vunpack.c.h.b16 %v3000
  %v3031 = vunpack.c.h.b16 %v3001
  %v3032 = vunpack.c.h.b16 %v3002
  %v3033 = vunpack.c.l.b16 %v3003
  %v3034 = vunpack.c.l.b16 %v3004
  %v3035 = vunpack.c.l.b16 %v3005
  %v3036 = vunpack.c.h.b16 %v3003
  %v3037 = vunpack.c.h.b16 %v3004
  %v3038 = vunpack.c.h.b16 %v3005
  %v3039 = vunpack.c.l.b16 %v3006
  %v3040 = vunpack.c.l.b16 %v3007
  %v3041 = vunpack.c.l.b16 %v3008
  %v3042 = vunpack.c.h.b16 %v3006
  %v3043 = vunpack.c.h.b16 %v3007
  %v3044 = vunpack.c.h.b16 %v3008
  %v3045 = vpack.c.b16 %v3022, %v3021
  %v3046 = vpack.c.b16 %v3023, %v3023
  %v3047 = vpack.c.b16 %v3025, %v3024
  %v3048 = vpack.c.b16 %v3026, %v3026
  %v3049 = vpack.c.b16 %v3028, %v3027
  %v3050 = vpack.c.b16 %v3029, %v3029
  %v3051 = vpack.c.b16 %v3031, %v3030
  %v3052 = vpack.c.b16 %v3032, %v3032
  %v3053 = vpack.c.b16 %v3034, %v3033
  %v3054 = vpack.c.b16 %v3035, %v3035
  %v3055 = vpack.c.b16 %v3037, %v3036
  %v3056 = vpack.c.b16 %v3038, %v3038
  %v3057 = vpack.c.b16 %v3040, %v3039
  %v3058 = vpack.c.b16 %v3041, %v3041
  %v3059 = vpack.c.b16 %v3043, %v3042
  %v3060 = vpack.c.b16 %v3044, %v3044
  %3077 = vst [vmem:[#allocation2] sm:$0xff] %v3045
  %3078 = vst [vmem:[#allocation2 + $0x8] sm:$0xf] %v3046
  %3079 = vst [vmem:[#allocation2 + $0xc] sm:$0xff] %v3047
  %3080 = vst [vmem:[#allocation2 + $0x14] sm:$0xf] %v3048
  %3081 = vst [vmem:[#allocation2 + $0x18] sm:$0xff] %v3049
  %3082 = vst [vmem:[#allocation2 + $0x20] sm:$0xf] %v3050
  %3083 = vst [vmem:[#allocation2 + $0x24] sm:$0xff] %v3051
  %3084 = vst [vmem:[#allocation2 + $0x2c] sm:$0xf] %v3052
  %3085 = vst [vmem:[#allocation2 + $0x30] sm:$0xff] %v3053
  %3086 = vst [vmem:[#allocation2 + $0x38] sm:$0xf] %v3054
  %3087 = vst [vmem:[#allocation2 + $0x3c] sm:$0xff] %v3055
  %3088 = vst [vmem:[#allocation2 + $0x44] sm:$0xf] %v3056
  %3089 = vst [vmem:[#allocation2 + $0x48] sm:$0xff] %v3057
  %3090 = vst [vmem:[#allocation2 + $0x50] sm:$0xf] %v3058
  %3091 = vst [vmem:[#allocation2 + $0x54] sm:$0xff] %v3059
  %3092 = vst [vmem:[#allocation2 + $0x5c] sm:$0xf] %v3060
  %s3093 = scalar_lea.vmem %s5, 1
  %v3094 = vld [vmem:[%s3093] sm:$0x1]
  %v3096 = vlaneseq
  %v3097 = vshrl.u32 %v3096, 7
  %v3098 = vsub.s32 0, %v3097
  %v3099 = vrot.slane %v3094, %v3098
  %v3101 = vld [vmem:[#allocation2] sm:$0xff]
  %v3102 = vld [vmem:[#allocation2 + $0x8] sm:$0xf]
  %v3103 = vunpack.c.l.bf16 %v3101
  %v3104 = vunpack.c.h.bf16 %v3101
  %v3105 = vunpack.c.l.bf16 %v3102
  %s3106 = scalar_lea.vmem %s3, 192
  %v3107 = vld [vmem:[%s3106] sm:$0xff]
  %v3108 = vld [vmem:[%s3106 + $0x8] sm:$0xf]
  %v3109 = vld [vmem:[%s3106 + $0xc] sm:$0xff]
  %v3110 = vld [vmem:[%s3106 + $0x14] sm:$0xf]
  %v3111 = vld [vmem:[%s3106 + $0x18] sm:$0xff]
  %v3112 = vld [vmem:[%s3106 + $0x20] sm:$0xf]
  %v3113 = vld [vmem:[%s3106 + $0x24] sm:$0xff]
  %v3114 = vld [vmem:[%s3106 + $0x2c] sm:$0xf]
  %v3115 = vld [vmem:[%s3106 + $0x30] sm:$0xff]
  %v3116 = vld [vmem:[%s3106 + $0x38] sm:$0xf]
  %v3117 = vld [vmem:[%s3106 + $0x3c] sm:$0xff]
  %v3118 = vld [vmem:[%s3106 + $0x44] sm:$0xf]
  %v3119 = vld [vmem:[%s3106 + $0x48] sm:$0xff]
  %v3120 = vld [vmem:[%s3106 + $0x50] sm:$0xf]
  %v3121 = vld [vmem:[%s3106 + $0x54] sm:$0xff]
  %v3122 = vld [vmem:[%s3106 + $0x5c] sm:$0xf]
  %v3123 = vld [vmem:[%s3106 + $0x60] sm:$0xff]
  %v3124 = vld [vmem:[%s3106 + $0x68] sm:$0xf]
  %v3125 = vld [vmem:[%s3106 + $0x6c] sm:$0xff]
  %v3126 = vld [vmem:[%s3106 + $0x74] sm:$0xf]
  %v3127 = vld [vmem:[%s3106 + $0x78] sm:$0xff]
  %v3128 = vld [vmem:[%s3106 + $0x80] sm:$0xf]
  %v3129 = vld [vmem:[%s3106 + $0x84] sm:$0xff]
  %v3130 = vld [vmem:[%s3106 + $0x8c] sm:$0xf]
  %v3131 = vld [vmem:[%s3106 + $0x90] sm:$0xff]
  %v3132 = vld [vmem:[%s3106 + $0x98] sm:$0xf]
  %v3133 = vld [vmem:[%s3106 + $0x9c] sm:$0xff]
  %v3134 = vld [vmem:[%s3106 + $0xa4] sm:$0xf]
  %v3135 = vld [vmem:[%s3106 + $0xa8] sm:$0xff]
  %v3136 = vld [vmem:[%s3106 + $0xb0] sm:$0xf]
  %v3137 = vld [vmem:[%s3106 + $0xb4] sm:$0xff]
  %v3138 = vld [vmem:[%s3106 + $0xbc] sm:$0xf]
  %v3171 = vunpack.c.l.b16 %v3107
  %v3172 = vunpack.c.h.b16 %v3107
  %v3173 = vunpack.c.l.b16 %v3108
  %v3174 = vunpack.c.l.b16 %v3109
  %v3175 = vunpack.c.h.b16 %v3109
  %v3176 = vunpack.c.l.b16 %v3110
  %v3177 = vunpack.c.l.b16 %v3111
  %v3178 = vunpack.c.h.b16 %v3111
  %v3179 = vunpack.c.l.b16 %v3112
  %v3180 = vunpack.c.l.b16 %v3113
  %v3181 = vunpack.c.h.b16 %v3113
  %v3182 = vunpack.c.l.b16 %v3114
  %v3183 = vunpack.c.l.b16 %v3115
  %v3184 = vunpack.c.h.b16 %v3115
  %v3185 = vunpack.c.l.b16 %v3116
  %v3186 = vunpack.c.l.b16 %v3117
  %v3187 = vunpack.c.h.b16 %v3117
  %v3188 = vunpack.c.l.b16 %v3118
  %v3189 = vunpack.c.l.b16 %v3119
  %v3190 = vunpack.c.h.b16 %v3119
  %v3191 = vunpack.c.l.b16 %v3120
  %v3192 = vunpack.c.l.b16 %v3121
  %v3193 = vunpack.c.h.b16 %v3121
  %v3194 = vunpack.c.l.b16 %v3122
  %v3195 = vunpack.c.l.b16 %v3123
  %v3196 = vunpack.c.h.b16 %v3123
  %v3197 = vunpack.c.l.b16 %v3124
  %v3198 = vunpack.c.l.b16 %v3125
  %v3199 = vunpack.c.h.b16 %v3125
  %v3200 = vunpack.c.l.b16 %v3126
  %v3201 = vunpack.c.l.b16 %v3127
  %v3202 = vunpack.c.h.b16 %v3127
  %v3203 = vunpack.c.l.b16 %v3128
  %v3204 = vunpack.c.l.b16 %v3129
  %v3205 = vunpack.c.h.b16 %v3129
  %v3206 = vunpack.c.l.b16 %v3130
  %v3207 = vunpack.c.l.b16 %v3131
  %v3208 = vunpack.c.h.b16 %v3131
  %v3209 = vunpack.c.l.b16 %v3132
  %v3210 = vunpack.c.l.b16 %v3133
  %v3211 = vunpack.c.h.b16 %v3133
  %v3212 = vunpack.c.l.b16 %v3134
  %v3213 = vunpack.c.l.b16 %v3135
  %v3214 = vunpack.c.h.b16 %v3135
  %v3215 = vunpack.c.l.b16 %v3136
  %v3216 = vunpack.c.l.b16 %v3137
  %v3217 = vunpack.c.h.b16 %v3137
  %v3218 = vunpack.c.l.b16 %v3138
  %v3219 = vpack.c.b16 %v3174, %v3171
  %v3220 = vpack.c.b16 %v3175, %v3172
  %v3221 = vpack.c.b16 %v3176, %v3173
  %v3222 = vpack.c.b16 %v3180, %v3177
  %v3223 = vpack.c.b16 %v3181, %v3178
  %v3224 = vpack.c.b16 %v3182, %v3179
  %v3225 = vpack.c.b16 %v3186, %v3183
  %v3226 = vpack.c.b16 %v3187, %v3184
  %v3227 = vpack.c.b16 %v3188, %v3185
  %v3228 = vpack.c.b16 %v3192, %v3189
  %v3229 = vpack.c.b16 %v3193, %v3190
  %v3230 = vpack.c.b16 %v3194, %v3191
  %v3231 = vpack.c.b16 %v3198, %v3195
  %v3232 = vpack.c.b16 %v3199, %v3196
  %v3233 = vpack.c.b16 %v3200, %v3197
  %v3234 = vpack.c.b16 %v3204, %v3201
  %v3235 = vpack.c.b16 %v3205, %v3202
  %v3236 = vpack.c.b16 %v3206, %v3203
  %v3237 = vpack.c.b16 %v3210, %v3207
  %v3238 = vpack.c.b16 %v3211, %v3208
  %v3239 = vpack.c.b16 %v3212, %v3209
  %v3240 = vpack.c.b16 %v3216, %v3213
  %v3241 = vpack.c.b16 %v3217, %v3214
  %v3242 = vpack.c.b16 %v3218, %v3215
  %3267 = vmatprep.subr.bf16.mxu0 %v3220
  %3268 = vmatpush1.bf16.msra.mxu0 %v3219
  %3269 = vmatprep.subr.bf16.mxu0 %v3223
  %3270 = vmatpush1.bf16.msra.mxu0 %v3222
  %3271 = vmatprep.subr.bf16.mxu0 %v3226
  %3272 = vmatpush1.bf16.msra.mxu0 %v3225
  %3273 = vmatprep.subr.bf16.mxu0 %v3229
  %3274 = vmatpush1.bf16.msra.mxu0 %v3228
  %3275 = vmatprep.subr.bf16.mxu0 %v3232
  %3276 = vmatpush1.bf16.msra.mxu0 %v3231
  %3277 = vmatprep.subr.bf16.mxu0 %v3235
  %3278 = vmatpush1.bf16.msra.mxu0 %v3234
  %3279 = vmatprep.subr.bf16.mxu0 %v3238
  %3280 = vmatpush1.bf16.msra.mxu0 %v3237
  %3281 = vmatprep.subr.bf16.mxu0 %v3241
  %3282 = vmatpush1.bf16.msra.mxu0 %v3240
  %3283 = vmatprep.subr.bf16.mxu0 0
  %3284 = vmatpush1.bf16.msra.mxu0 0
  %3285 = vmatprep.subr.bf16.mxu0 0
  %3286 = vmatpush1.bf16.msra.mxu0 0
  %3287 = vmatprep.subr.bf16.mxu0 0
  %3288 = vmatpush1.bf16.msra.mxu0 0
  %3289 = vmatprep.subr.bf16.mxu0 0
  %3290 = vmatpush1.bf16.msra.mxu0 0
  %3291 = vmatprep.subr.bf16.mxu0 0
  %3292 = vmatpush1.bf16.msra.mxu0 0
  %3293 = vmatprep.subr.bf16.mxu0 0
  %3294 = vmatpush1.bf16.msra.mxu0 0
  %3295 = vmatprep.subr.bf16.mxu0 0
  %3296 = vmatpush1.bf16.msra.mxu0 0
  %3297 = vmatprep.subr.bf16.mxu0 0
  %3298 = vmatpush1.bf16.msra.mxu0 0
  %3299 = vmatprep.mubr.bf16.mxu0 0
  %3300 = vmatmul.mubr.bf16.gmra.mrb[0].mxu0 0
  %v3301 = vpop.f32.mrb[0].mxu0
  %v3302 = vadd.f32 0.0, %v3301
  %v3303 = vpop.f32.mrb[0].mxu0
  %v3304 = vadd.f32 0.0, %v3303
  %v3305 = vpop.f32.mrb[0].mxu0
  %v3306 = vpop.f32.mrb[0].mxu0
  %3307 = vdwg.mxu0
  %3308 = vmatprep.subr.bf16.mxu0 0
  %3309 = vmatpush1.bf16.msra.mxu0 %v3221
  %3310 = vmatprep.subr.bf16.mxu0 0
  %3311 = vmatpush1.bf16.msra.mxu0 %v3224
  %3312 = vmatprep.subr.bf16.mxu0 0
  %3313 = vmatpush1.bf16.msra.mxu0 %v3227
  %3314 = vmatprep.subr.bf16.mxu0 0
  %3315 = vmatpush1.bf16.msra.mxu0 %v3230
  %3316 = vmatprep.subr.bf16.mxu0 0
  %3317 = vmatpush1.bf16.msra.mxu0 %v3233
  %3318 = vmatprep.subr.bf16.mxu0 0
  %3319 = vmatpush1.bf16.msra.mxu0 %v3236
  %3320 = vmatprep.subr.bf16.mxu0 0
  %3321 = vmatpush1.bf16.msra.mxu0 %v3239
  %3322 = vmatprep.subr.bf16.mxu0 0
  %3323 = vmatpush1.bf16.msra.mxu0 %v3242
  %3324 = vmatprep.subr.bf16.mxu0 0
  %3325 = vmatpush1.bf16.msra.mxu0 0
  %3326 = vmatprep.subr.bf16.mxu0 0
  %3327 = vmatpush1.bf16.msra.mxu0 0
  %3328 = vmatprep.subr.bf16.mxu0 0
  %3329 = vmatpush1.bf16.msra.mxu0 0
  %3330 = vmatprep.subr.bf16.mxu0 0
  %3331 = vmatpush1.bf16.msra.mxu0 0
  %3332 = vmatprep.subr.bf16.mxu0 0
  %3333 = vmatpush1.bf16.msra.mxu0 0
  %3334 = vmatprep.subr.bf16.mxu0 0
  %3335 = vmatpush1.bf16.msra.mxu0 0
  %3336 = vmatprep.subr.bf16.mxu0 0
  %3337 = vmatpush1.bf16.msra.mxu0 0
  %3338 = vmatprep.subr.bf16.mxu0 0
  %3339 = vmatpush1.bf16.msra.mxu0 0
  %3340 = vmatprep.mubr.bf16.mxu0 0
  %3341 = vmatmul.mubr.bf16.gmra.mrb[0].mxu0 0
  %v3342 = vpop.f32.mrb[0].mxu0
  %v3343 = vadd.f32 0.0, %v3342
  %v3344 = vpop.f32.mrb[0].mxu0
  %v3345 = vpop.f32.mrb[0].mxu0
  %v3346 = vpop.f32.mrb[0].mxu0
  %3347 = vdwg.mxu0
  %v3348 = vadd.f32 %v3103, %v3302
  %v3349 = vxor.u32 %v3348, 2147483648
  %v3350 = vmul.f32 %v3349, 1.442695
  %v3351 = vpow.pop %v3350
  %v3352 = vadd.f32 %v3351, 1.0
  %v3353 = vrcp.pop %v3352
  %v3354 = vmul.f32 1.0, %v3353
  %v3355 = vadd.f32 %v3104, %v3304
  %v3356 = vxor.u32 %v3355, 2147483648
  %v3357 = vmul.f32 %v3356, 1.442695
  %v3358 = vpow.pop %v3357
  %v3359 = vadd.f32 %v3358, 1.0
  %v3360 = vrcp.pop %v3359
  %v3361 = vmul.f32 1.0, %v3360
  %v3362 = vadd.f32 %v3343, %v3099
  %v3363 = vmul.f32 %v3354, %v3362
  %v3364 = vadd.f32 %v3105, %v3363
  %v3365 = vtanh.pop %v3364
  %v3366 = vsub.f32 0.0, %v3365
  %v3367 = vmul.f32 %v3361, %v3366
  %v3368 = vadd.f32 %v3365, %v3367
  %v3369 = vpack.c.bf16 %v3368, %v3368
  %v3370 = vld [vmem:[%s751] sm:$0xff]
  %v3371 = vld [vmem:[%s751 + $0x8] sm:$0xf]
  %v3372 = vunpack.c.l.bf16 %v3370
  %v3373 = vunpack.c.h.bf16 %v3370
  %v3374 = vunpack.c.l.bf16 %v3371
  %3375 = vmatprep.subr.bf16.mxu0 %v3220
  %3376 = vmatpush1.bf16.msra.mxu0 %v3219
  %3377 = vmatprep.subr.bf16.mxu0 %v3223
  %3378 = vmatpush1.bf16.msra.mxu0 %v3222
  %3379 = vmatprep.subr.bf16.mxu0 %v3226
  %3380 = vmatpush1.bf16.msra.mxu0 %v3225
  %3381 = vmatprep.subr.bf16.mxu0 %v3229
  %3382 = vmatpush1.bf16.msra.mxu0 %v3228
  %3383 = vmatprep.subr.bf16.mxu0 %v3232
  %3384 = vmatpush1.bf16.msra.mxu0 %v3231
  %3385 = vmatprep.subr.bf16.mxu0 %v3235
  %3386 = vmatpush1.bf16.msra.mxu0 %v3234
  %3387 = vmatprep.subr.bf16.mxu0 %v3238
  %3388 = vmatpush1.bf16.msra.mxu0 %v3237
  %3389 = vmatprep.subr.bf16.mxu0 %v3241
  %3390 = vmatpush1.bf16.msra.mxu0 %v3240
  %3391 = vmatprep.subr.bf16.mxu0 0
  %3392 = vmatpush1.bf16.msra.mxu0 0
  %3393 = vmatprep.subr.bf16.mxu0 0
  %3394 = vmatpush1.bf16.msra.mxu0 0
  %3395 = vmatprep.subr.bf16.mxu0 0
  %3396 = vmatpush1.bf16.msra.mxu0 0
  %3397 = vmatprep.subr.bf16.mxu0 0
  %3398 = vmatpush1.bf16.msra.mxu0 0
  %3399 = vmatprep.subr.bf16.mxu0 0
  %3400 = vmatpush1.bf16.msra.mxu0 0
  %3401 = vmatprep.subr.bf16.mxu0 0
  %3402 = vmatpush1.bf16.msra.mxu0 0
  %3403 = vmatprep.subr.bf16.mxu0 0
  %3404 = vmatpush1.bf16.msra.mxu0 0
  %3405 = vmatprep.subr.bf16.mxu0 0
  %3406 = vmatpush1.bf16.msra.mxu0 0
  %3407 = vmatprep.mubr.bf16.mxu0 0
  %3408 = vmatmul.mubr.bf16.gmra.mrb[0].mxu0 %v3369
  %v3409 = vpop.f32.mrb[0].mxu0
  %v3410 = vadd.f32 0.0, %v3409
  %v3411 = vpop.f32.mrb[0].mxu0
  %v3412 = vadd.f32 0.0, %v3411
  %v3413 = vpop.f32.mrb[0].mxu0
  %v3414 = vpop.f32.mrb[0].mxu0
  %3415 = vdwg.mxu0
  %3416 = vmatprep.subr.bf16.mxu0 0
  %3417 = vmatpush1.bf16.msra.mxu0 %v3221
  %3418 = vmatprep.subr.bf16.mxu0 0
  %3419 = vmatpush1.bf16.msra.mxu0 %v3224
  %3420 = vmatprep.subr.bf16.mxu0 0
  %3421 = vmatpush1.bf16.msra.mxu0 %v3227
  %3422 = vmatprep.subr.bf16.mxu0 0
  %3423 = vmatpush1.bf16.msra.mxu0 %v3230
  %3424 = vmatprep.subr.bf16.mxu0 0
  %3425 = vmatpush1.bf16.msra.mxu0 %v3233
  %3426 = vmatprep.subr.bf16.mxu0 0
  %3427 = vmatpush1.bf16.msra.mxu0 %v3236
  %3428 = vmatprep.subr.bf16.mxu0 0
  %3429 = vmatpush1.bf16.msra.mxu0 %v3239
  %3430 = vmatprep.subr.bf16.mxu0 0
  %3431 = vmatpush1.bf16.msra.mxu0 %v3242
  %3432 = vmatprep.subr.bf16.mxu0 0
  %3433 = vmatpush1.bf16.msra.mxu0 0
  %3434 = vmatprep.subr.bf16.mxu0 0
  %3435 = vmatpush1.bf16.msra.mxu0 0
  %3436 = vmatprep.subr.bf16.mxu0 0
  %3437 = vmatpush1.bf16.msra.mxu0 0
  %3438 = vmatprep.subr.bf16.mxu0 0
  %3439 = vmatpush1.bf16.msra.mxu0 0
  %3440 = vmatprep.subr.bf16.mxu0 0
  %3441 = vmatpush1.bf16.msra.mxu0 0
  %3442 = vmatprep.subr.bf16.mxu0 0
  %3443 = vmatpush1.bf16.msra.mxu0 0
  %3444 = vmatprep.subr.bf16.mxu0 0
  %3445 = vmatpush1.bf16.msra.mxu0 0
  %3446 = vmatprep.subr.bf16.mxu0 0
  %3447 = vmatpush1.bf16.msra.mxu0 0
  %3448 = vmatprep.mubr.bf16.mxu0 0
  %3449 = vmatmul.mubr.bf16.gmra.mrb[0].mxu0 %v3369
  %v3450 = vpop.f32.mrb[0].mxu0
  %v3451 = vadd.f32 0.0, %v3450
  %v3452 = vpop.f32.mrb[0].mxu0
  %v3453 = vpop.f32.mrb[0].mxu0
  %v3454 = vpop.f32.mrb[0].mxu0
  %3455 = vdwg.mxu0
  %v3456 = vadd.f32 %v3372, %v3410
  %v3457 = vxor.u32 %v3456, 2147483648
  %v3458 = vmul.f32 %v3457, 1.442695
  %v3459 = vpow.pop %v3458
  %v3460 = vadd.f32 %v3459, 1.0
  %v3461 = vrcp.pop %v3460
  %v3462 = vmul.f32 1.0, %v3461
  %v3463 = vadd.f32 %v3373, %v3412
  %v3464 = vxor.u32 %v3463, 2147483648
  %v3465 = vmul.f32 %v3464, 1.442695
  %v3466 = vpow.pop %v3465
  %v3467 = vadd.f32 %v3466, 1.0
  %v3468 = vrcp.pop %v3467
  %v3469 = vmul.f32 1.0, %v3468
  %v3470 = vadd.f32 %v3451, %v3099
  %v3471 = vmul.f32 %v3462, %v3470
  %v3472 = vadd.f32 %v3374, %v3471
  %v3473 = vtanh.pop %v3472
  %v3474 = vsub.f32 %v3368, %v3473
  %v3475 = vmul.f32 %v3469, %v3474
  %v3476 = vadd.f32 %v3473, %v3475
  %v3477 = vpack.c.bf16 %v3476, %v3476
  %v3478 = vld [vmem:[%s1022] sm:$0xff]
  %v3479 = vld [vmem:[%s1022 + $0x8] sm:$0xf]
  %v3480 = vunpack.c.l.bf16 %v3478
  %v3481 = vunpack.c.h.bf16 %v3478
  %v3482 = vunpack.c.l.bf16 %v3479
  %3483 = vmatprep.subr.bf16.mxu0 %v3220
  %3484 = vmatpush1.bf16.msra.mxu0 %v3219
  %3485 = vmatprep.subr.bf16.mxu0 %v3223
  %3486 = vmatpush1.bf16.msra.mxu0 %v3222
  %3487 = vmatprep.subr.bf16.mxu0 %v3226
  %3488 = vmatpush1.bf16.msra.mxu0 %v3225
  %3489 = vmatprep.subr.bf16.mxu0 %v3229
  %3490 = vmatpush1.bf16.msra.mxu0 %v3228
  %3491 = vmatprep.subr.bf16.mxu0 %v3232
  %3492 = vmatpush1.bf16.msra.mxu0 %v3231
  %3493 = vmatprep.subr.bf16.mxu0 %v3235
  %3494 = vmatpush1.bf16.msra.mxu0 %v3234
  %3495 = vmatprep.subr.bf16.mxu0 %v3238
  %3496 = vmatpush1.bf16.msra.mxu0 %v3237
  %3497 = vmatprep.subr.bf16.mxu0 %v3241
  %3498 = vmatpush1.bf16.msra.mxu0 %v3240
  %3499 = vmatprep.subr.bf16.mxu0 0
  %3500 = vmatpush1.bf16.msra.mxu0 0
  %3501 = vmatprep.subr.bf16.mxu0 0
  %3502 = vmatpush1.bf16.msra.mxu0 0
  %3503 = vmatprep.subr.bf16.mxu0 0
  %3504 = vmatpush1.bf16.msra.mxu0 0
  %3505 = vmatprep.subr.bf16.mxu0 0
  %3506 = vmatpush1.bf16.msra.mxu0 0
  %3507 = vmatprep.subr.bf16.mxu0 0
  %3508 = vmatpush1.bf16.msra.mxu0 0
  %3509 = vmatprep.subr.bf16.mxu0 0
  %3510 = vmatpush1.bf16.msra.mxu0 0
  %3511 = vmatprep.subr.bf16.mxu0 0
  %3512 = vmatpush1.bf16.msra.mxu0 0
  %3513 = vmatprep.subr.bf16.mxu0 0
  %3514 = vmatpush1.bf16.msra.mxu0 0
  %3515 = vmatprep.mubr.bf16.mxu0 0
  %3516 = vmatmul.mubr.bf16.gmra.mrb[0].mxu0 %v3477
  %v3517 = vpop.f32.mrb[0].mxu0
  %v3518 = vadd.f32 0.0, %v3517
  %v3519 = vpop.f32.mrb[0].mxu0
  %v3520 = vadd.f32 0.0, %v3519
  %v3521 = vpop.f32.mrb[0].mxu0
  %v3522 = vpop.f32.mrb[0].mxu0
  %3523 = vdwg.mxu0
  %3524 = vmatprep.subr.bf16.mxu0 0
  %3525 = vmatpush1.bf16.msra.mxu0 %v3221
  %3526 = vmatprep.subr.bf16.mxu0 0
  %3527 = vmatpush1.bf16.msra.mxu0 %v3224
  %3528 = vmatprep.subr.bf16.mxu0 0
  %3529 = vmatpush1.bf16.msra.mxu0 %v3227
  %3530 = vmatprep.subr.bf16.mxu0 0
  %3531 = vmatpush1.bf16.msra.mxu0 %v3230
  %3532 = vmatprep.subr.bf16.mxu0 0
  %3533 = vmatpush1.bf16.msra.mxu0 %v3233
  %3534 = vmatprep.subr.bf16.mxu0 0
  %3535 = vmatpush1.bf16.msra.mxu0 %v3236
  %3536 = vmatprep.subr.bf16.mxu0 0
  %3537 = vmatpush1.bf16.msra.mxu0 %v3239
  %3538 = vmatprep.subr.bf16.mxu0 0
  %3539 = vmatpush1.bf16.msra.mxu0 %v3242
  %3540 = vmatprep.subr.bf16.mxu0 0
  %3541 = vmatpush1.bf16.msra.mxu0 0
  %3542 = vmatprep.subr.bf16.mxu0 0
  %3543 = vmatpush1.bf16.msra.mxu0 0
  %3544 = vmatprep.subr.bf16.mxu0 0
  %3545 = vmatpush1.bf16.msra.mxu0 0
  %3546 = vmatprep.subr.bf16.mxu0 0
  %3547 = vmatpush1.bf16.msra.mxu0 0
  %3548 = vmatprep.subr.bf16.mxu0 0
  %3549 = vmatpush1.bf16.msra.mxu0 0
  %3550 = vmatprep.subr.bf16.mxu0 0
  %3551 = vmatpush1.bf16.msra.mxu0 0
  %3552 = vmatprep.subr.bf16.mxu0 0
  %3553 = vmatpush1.bf16.msra.mxu0 0
  %3554 = vmatprep.subr.bf16.mxu0 0
  %3555 = vmatpush1.bf16.msra.mxu0 0
  %3556 = vmatprep.mubr.bf16.mxu0 0
  %3557 = vmatmul.mubr.bf16.gmra.mrb[0].mxu0 %v3477
  %v3558 = vpop.f32.mrb[0].mxu0
  %v3559 = vadd.f32 0.0, %v3558
  %v3560 = vpop.f32.mrb[0].mxu0
  %v3561 = vpop.f32.mrb[0].mxu0
  %v3562 = vpop.f32.mrb[0].mxu0
  %3563 = vdwg.mxu0
  %v3564 = vadd.f32 %v3480, %v3518
  %v3565 = vxor.u32 %v3564, 2147483648
  %v3566 = vmul.f32 %v3565, 1.442695
  %v3567 = vpow.pop %v3566
  %v3568 = vadd.f32 %v3567, 1.0
  %v3569 = vrcp.pop %v3568
  %v3570 = vmul.f32 1.0, %v3569
  %v3571 = vadd.f32 %v3481, %v3520
  %v3572 = vxor.u32 %v3571, 2147483648
  %v3573 = vmul.f32 %v3572, 1.442695
  %v3574 = vpow.pop %v3573
  %v3575 = vadd.f32 %v3574, 1.0
  %v3576 = vrcp.pop %v3575
  %v3577 = vmul.f32 1.0, %v3576
  %v3578 = vadd.f32 %v3559, %v3099
  %v3579 = vmul.f32 %v3570, %v3578
  %v3580 = vadd.f32 %v3482, %v3579
  %v3581 = vtanh.pop %v3580
  %v3582 = vsub.f32 %v3476, %v3581
  %v3583 = vmul.f32 %v3577, %v3582
  %v3584 = vadd.f32 %v3581, %v3583
  %v3585 = vpack.c.bf16 %v3584, %v3584
  %v3586 = vld [vmem:[%s1293] sm:$0xff]
  %v3587 = vld [vmem:[%s1293 + $0x8] sm:$0xf]
  %v3588 = vunpack.c.l.bf16 %v3586
  %v3589 = vunpack.c.h.bf16 %v3586
  %v3590 = vunpack.c.l.bf16 %v3587
  %3591 = vmatprep.subr.bf16.mxu0 %v3220
  %3592 = vmatpush1.bf16.msra.mxu0 %v3219
  %3593 = vmatprep.subr.bf16.mxu0 %v3223
  %3594 = vmatpush1.bf16.msra.mxu0 %v3222
  %3595 = vmatprep.subr.bf16.mxu0 %v3226
  %3596 = vmatpush1.bf16.msra.mxu0 %v3225
  %3597 = vmatprep.subr.bf16.mxu0 %v3229
  %3598 = vmatpush1.bf16.msra.mxu0 %v3228
  %3599 = vmatprep.subr.bf16.mxu0 %v3232
  %3600 = vmatpush1.bf16.msra.mxu0 %v3231
  %3601 = vmatprep.subr.bf16.mxu0 %v3235
  %3602 = vmatpush1.bf16.msra.mxu0 %v3234
  %3603 = vmatprep.subr.bf16.mxu0 %v3238
  %3604 = vmatpush1.bf16.msra.mxu0 %v3237
  %3605 = vmatprep.subr.bf16.mxu0 %v3241
  %3606 = vmatpush1.bf16.msra.mxu0 %v3240
  %3607 = vmatprep.subr.bf16.mxu0 0
  %3608 = vmatpush1.bf16.msra.mxu0 0
  %3609 = vmatprep.subr.bf16.mxu0 0
  %3610 = vmatpush1.bf16.msra.mxu0 0
  %3611 = vmatprep.subr.bf16.mxu0 0
  %3612 = vmatpush1.bf16.msra.mxu0 0
  %3613 = vmatprep.subr.bf16.mxu0 0
  %3614 = vmatpush1.bf16.msra.mxu0 0
  %3615 = vmatprep.subr.bf16.mxu0 0
  %3616 = vmatpush1.bf16.msra.mxu0 0
  %3617 = vmatprep.subr.bf16.mxu0 0
  %3618 = vmatpush1.bf16.msra.mxu0 0
  %3619 = vmatprep.subr.bf16.mxu0 0
  %3620 = vmatpush1.bf16.msra.mxu0 0
  %3621 = vmatprep.subr.bf16.mxu0 0
  %3622 = vmatpush1.bf16.msra.mxu0 0
  %3623 = vmatprep.mubr.bf16.mxu0 0
  %3624 = vmatmul.mubr.bf16.gmra.mrb[0].mxu0 %v3585
  %v3625 = vpop.f32.mrb[0].mxu0
  %v3626 = vadd.f32 0.0, %v3625
  %v3627 = vpop.f32.mrb[0].mxu0
  %v3628 = vadd.f32 0.0, %v3627
  %v3629 = vpop.f32.mrb[0].mxu0
  %v3630 = vpop.f32.mrb[0].mxu0
  %3631 = vdwg.mxu0
  %3632 = vmatprep.subr.bf16.mxu0 0
  %3633 = vmatpush1.bf16.msra.mxu0 %v3221
  %3634 = vmatprep.subr.bf16.mxu0 0
  %3635 = vmatpush1.bf16.msra.mxu0 %v3224
  %3636 = vmatprep.subr.bf16.mxu0 0
  %3637 = vmatpush1.bf16.msra.mxu0 %v3227
  %3638 = vmatprep.subr.bf16.mxu0 0
  %3639 = vmatpush1.bf16.msra.mxu0 %v3230
  %3640 = vmatprep.subr.bf16.mxu0 0
  %3641 = vmatpush1.bf16.msra.mxu0 %v3233
  %3642 = vmatprep.subr.bf16.mxu0 0
  %3643 = vmatpush1.bf16.msra.mxu0 %v3236
  %3644 = vmatprep.subr.bf16.mxu0 0
  %3645 = vmatpush1.bf16.msra.mxu0 %v3239
  %3646 = vmatprep.subr.bf16.mxu0 0
  %3647 = vmatpush1.bf16.msra.mxu0 %v3242
  %3648 = vmatprep.subr.bf16.mxu0 0
  %3649 = vmatpush1.bf16.msra.mxu0 0
  %3650 = vmatprep.subr.bf16.mxu0 0
  %3651 = vmatpush1.bf16.msra.mxu0 0
  %3652 = vmatprep.subr.bf16.mxu0 0
  %3653 = vmatpush1.bf16.msra.mxu0 0
  %3654 = vmatprep.subr.bf16.mxu0 0
  %3655 = vmatpush1.bf16.msra.mxu0 0
  %3656 = vmatprep.subr.bf16.mxu0 0
  %3657 = vmatpush1.bf16.msra.mxu0 0
  %3658 = vmatprep.subr.bf16.mxu0 0
  %3659 = vmatpush1.bf16.msra.mxu0 0
  %3660 = vmatprep.subr.bf16.mxu0 0
  %3661 = vmatpush1.bf16.msra.mxu0 0
  %3662 = vmatprep.subr.bf16.mxu0 0
  %3663 = vmatpush1.bf16.msra.mxu0 0
  %3664 = vmatprep.mubr.bf16.mxu0 0
  %3665 = vmatmul.mubr.bf16.gmra.mrb[0].mxu0 %v3585
  %v3666 = vpop.f32.mrb[0].mxu0
  %v3667 = vadd.f32 0.0, %v3666
  %v3668 = vpop.f32.mrb[0].mxu0
  %v3669 = vpop.f32.mrb[0].mxu0
  %v3670 = vpop.f32.mrb[0].mxu0
  %3671 = vdwg.mxu0
  %v3672 = vadd.f32 %v3588, %v3626
  %v3673 = vxor.u32 %v3672, 2147483648
  %v3674 = vmul.f32 %v3673, 1.442695
  %v3675 = vpow.pop %v3674
  %v3676 = vadd.f32 %v3675, 1.0
  %v3677 = vrcp.pop %v3676
  %v3678 = vmul.f32 1.0, %v3677
  %v3679 = vadd.f32 %v3589, %v3628
  %v3680 = vxor.u32 %v3679, 2147483648
  %v3681 = vmul.f32 %v3680, 1.442695
  %v3682 = vpow.pop %v3681
  %v3683 = vadd.f32 %v3682, 1.0
  %v3684 = vrcp.pop %v3683
  %v3685 = vmul.f32 1.0, %v3684
  %v3686 = vadd.f32 %v3667, %v3099
  %v3687 = vmul.f32 %v3678, %v3686
  %v3688 = vadd.f32 %v3590, %v3687
  %v3689 = vtanh.pop %v3688
  %v3690 = vsub.f32 %v3584, %v3689
  %v3691 = vmul.f32 %v3685, %v3690
  %v3692 = vadd.f32 %v3689, %v3691
  %v3693 = vpack.c.bf16 %v3692, %v3692
  %v3694 = vld [vmem:[%s1564] sm:$0xff]
  %v3695 = vld [vmem:[%s1564 + $0x8] sm:$0xf]
  %v3696 = vunpack.c.l.bf16 %v3694
  %v3697 = vunpack.c.h.bf16 %v3694
  %v3698 = vunpack.c.l.bf16 %v3695
  %3699 = vmatprep.subr.bf16.mxu0 %v3220
  %3700 = vmatpush1.bf16.msra.mxu0 %v3219
  %3701 = vmatprep.subr.bf16.mxu0 %v3223
  %3702 = vmatpush1.bf16.msra.mxu0 %v3222
  %3703 = vmatprep.subr.bf16.mxu0 %v3226
  %3704 = vmatpush1.bf16.msra.mxu0 %v3225
  %3705 = vmatprep.subr.bf16.mxu0 %v3229
  %3706 = vmatpush1.bf16.msra.mxu0 %v3228
  %3707 = vmatprep.subr.bf16.mxu0 %v3232
  %3708 = vmatpush1.bf16.msra.mxu0 %v3231
  %3709 = vmatprep.subr.bf16.mxu0 %v3235
  %3710 = vmatpush1.bf16.msra.mxu0 %v3234
  %3711 = vmatprep.subr.bf16.mxu0 %v3238
  %3712 = vmatpush1.bf16.msra.mxu0 %v3237
  %3713 = vmatprep.subr.bf16.mxu0 %v3241
  %3714 = vmatpush1.bf16.msra.mxu0 %v3240
  %3715 = vmatprep.subr.bf16.mxu0 0
  %3716 = vmatpush1.bf16.msra.mxu0 0
  %3717 = vmatprep.subr.bf16.mxu0 0
  %3718 = vmatpush1.bf16.msra.mxu0 0
  %3719 = vmatprep.subr.bf16.mxu0 0
  %3720 = vmatpush1.bf16.msra.mxu0 0
  %3721 = vmatprep.subr.bf16.mxu0 0
  %3722 = vmatpush1.bf16.msra.mxu0 0
  %3723 = vmatprep.subr.bf16.mxu0 0
  %3724 = vmatpush1.bf16.msra.mxu0 0
  %3725 = vmatprep.subr.bf16.mxu0 0
  %3726 = vmatpush1.bf16.msra.mxu0 0
  %3727 = vmatprep.subr.bf16.mxu0 0
  %3728 = vmatpush1.bf16.msra.mxu0 0
  %3729 = vmatprep.subr.bf16.mxu0 0
  %3730 = vmatpush1.bf16.msra.mxu0 0
  %3731 = vmatprep.mubr.bf16.mxu0 0
  %3732 = vmatmul.mubr.bf16.gmra.mrb[0].mxu0 %v3693
  %v3733 = vpop.f32.mrb[0].mxu0
  %v3734 = vadd.f32 0.0, %v3733
  %v3735 = vpop.f32.mrb[0].mxu0
  %v3736 = vadd.f32 0.0, %v3735
  %v3737 = vpop.f32.mrb[0].mxu0
  %v3738 = vpop.f32.mrb[0].mxu0
  %3739 = vdwg.mxu0
  %3740 = vmatprep.subr.bf16.mxu0 0
  %3741 = vmatpush1.bf16.msra.mxu0 %v3221
  %3742 = vmatprep.subr.bf16.mxu0 0
  %3743 = vmatpush1.bf16.msra.mxu0 %v3224
  %3744 = vmatprep.subr.bf16.mxu0 0
  %3745 = vmatpush1.bf16.msra.mxu0 %v3227
  %3746 = vmatprep.subr.bf16.mxu0 0
  %3747 = vmatpush1.bf16.msra.mxu0 %v3230
  %3748 = vmatprep.subr.bf16.mxu0 0
  %3749 = vmatpush1.bf16.msra.mxu0 %v3233
  %3750 = vmatprep.subr.bf16.mxu0 0
  %3751 = vmatpush1.bf16.msra.mxu0 %v3236
  %3752 = vmatprep.subr.bf16.mxu0 0
  %3753 = vmatpush1.bf16.msra.mxu0 %v3239
  %3754 = vmatprep.subr.bf16.mxu0 0
  %3755 = vmatpush1.bf16.msra.mxu0 %v3242
  %3756 = vmatprep.subr.bf16.mxu0 0
  %3757 = vmatpush1.bf16.msra.mxu0 0
  %3758 = vmatprep.subr.bf16.mxu0 0
  %3759 = vmatpush1.bf16.msra.mxu0 0
  %3760 = vmatprep.subr.bf16.mxu0 0
  %3761 = vmatpush1.bf16.msra.mxu0 0
  %3762 = vmatprep.subr.bf16.mxu0 0
  %3763 = vmatpush1.bf16.msra.mxu0 0
  %3764 = vmatprep.subr.bf16.mxu0 0
  %3765 = vmatpush1.bf16.msra.mxu0 0
  %3766 = vmatprep.subr.bf16.mxu0 0
  %3767 = vmatpush1.bf16.msra.mxu0 0
  %3768 = vmatprep.subr.bf16.mxu0 0
  %3769 = vmatpush1.bf16.msra.mxu0 0
  %3770 = vmatprep.subr.bf16.mxu0 0
  %3771 = vmatpush1.bf16.msra.mxu0 0
  %3772 = vmatprep.mubr.bf16.mxu0 0
  %3773 = vmatmul.mubr.bf16.gmra.mrb[0].mxu0 %v3693
  %v3774 = vpop.f32.mrb[0].mxu0
  %v3775 = vadd.f32 0.0, %v3774
  %v3776 = vpop.f32.mrb[0].mxu0
  %v3777 = vpop.f32.mrb[0].mxu0
  %v3778 = vpop.f32.mrb[0].mxu0
  %3779 = vdwg.mxu0
  %v3780 = vadd.f32 %v3696, %v3734
  %v3781 = vxor.u32 %v3780, 2147483648
  %v3782 = vmul.f32 %v3781, 1.442695
  %v3783 = vpow.pop %v3782
  %v3784 = vadd.f32 %v3783, 1.0
  %v3785 = vrcp.pop %v3784
  %v3786 = vmul.f32 1.0, %v3785
  %v3787 = vadd.f32 %v3697, %v3736
  %v3788 = vxor.u32 %v3787, 2147483648
  %v3789 = vmul.f32 %v3788, 1.442695
  %v3790 = vpow.pop %v3789
  %v3791 = vadd.f32 %v3790, 1.0
  %v3792 = vrcp.pop %v3791
  %v3793 = vmul.f32 1.0, %v3792
  %v3794 = vadd.f32 %v3775, %v3099
  %v3795 = vmul.f32 %v3786, %v3794
  %v3796 = vadd.f32 %v3698, %v3795
  %v3797 = vtanh.pop %v3796
  %v3798 = vsub.f32 %v3692, %v3797
  %v3799 = vmul.f32 %v3793, %v3798
  %v3800 = vadd.f32 %v3797, %v3799
  %v3801 = vpack.c.bf16 %v3800, %v3800
  %v3802 = vld [vmem:[%s1835] sm:$0xff]
  %v3803 = vld [vmem:[%s1835 + $0x8] sm:$0xf]
  %v3804 = vunpack.c.l.bf16 %v3802
  %v3805 = vunpack.c.h.bf16 %v3802
  %v3806 = vunpack.c.l.bf16 %v3803
  %3807 = vmatprep.subr.bf16.mxu0 %v3220
  %3808 = vmatpush1.bf16.msra.mxu0 %v3219
  %3809 = vmatprep.subr.bf16.mxu0 %v3223
  %3810 = vmatpush1.bf16.msra.mxu0 %v3222
  %3811 = vmatprep.subr.bf16.mxu0 %v3226
  %3812 = vmatpush1.bf16.msra.mxu0 %v3225
  %3813 = vmatprep.subr.bf16.mxu0 %v3229
  %3814 = vmatpush1.bf16.msra.mxu0 %v3228
  %3815 = vmatprep.subr.bf16.mxu0 %v3232
  %3816 = vmatpush1.bf16.msra.mxu0 %v3231
  %3817 = vmatprep.subr.bf16.mxu0 %v3235
  %3818 = vmatpush1.bf16.msra.mxu0 %v3234
  %3819 = vmatprep.subr.bf16.mxu0 %v3238
  %3820 = vmatpush1.bf16.msra.mxu0 %v3237
  %3821 = vmatprep.subr.bf16.mxu0 %v3241
  %3822 = vmatpush1.bf16.msra.mxu0 %v3240
  %3823 = vmatprep.subr.bf16.mxu0 0
  %3824 = vmatpush1.bf16.msra.mxu0 0
  %3825 = vmatprep.subr.bf16.mxu0 0
  %3826 = vmatpush1.bf16.msra.mxu0 0
  %3827 = vmatprep.subr.bf16.mxu0 0
  %3828 = vmatpush1.bf16.msra.mxu0 0
  %3829 = vmatprep.subr.bf16.mxu0 0
  %3830 = vmatpush1.bf16.msra.mxu0 0
  %3831 = vmatprep.subr.bf16.mxu0 0
  %3832 = vmatpush1.bf16.msra.mxu0 0
  %3833 = vmatprep.subr.bf16.mxu0 0
  %3834 = vmatpush1.bf16.msra.mxu0 0
  %3835 = vmatprep.subr.bf16.mxu0 0
  %3836 = vmatpush1.bf16.msra.mxu0 0
  %3837 = vmatprep.subr.bf16.mxu0 0
  %3838 = vmatpush1.bf16.msra.mxu0 0
  %3839 = vmatprep.mubr.bf16.mxu0 0
  %3840 = vmatmul.mubr.bf16.gmra.mrb[0].mxu0 %v3801
  %v3841 = vpop.f32.mrb[0].mxu0
  %v3842 = vadd.f32 0.0, %v3841
  %v3843 = vpop.f32.mrb[0].mxu0
  %v3844 = vadd.f32 0.0, %v3843
  %v3845 = vpop.f32.mrb[0].mxu0
  %v3846 = vpop.f32.mrb[0].mxu0
  %3847 = vdwg.mxu0
  %3848 = vmatprep.subr.bf16.mxu0 0
  %3849 = vmatpush1.bf16.msra.mxu0 %v3221
  %3850 = vmatprep.subr.bf16.mxu0 0
  %3851 = vmatpush1.bf16.msra.mxu0 %v3224
  %3852 = vmatprep.subr.bf16.mxu0 0
  %3853 = vmatpush1.bf16.msra.mxu0 %v3227
  %3854 = vmatprep.subr.bf16.mxu0 0
  %3855 = vmatpush1.bf16.msra.mxu0 %v3230
  %3856 = vmatprep.subr.bf16.mxu0 0
  %3857 = vmatpush1.bf16.msra.mxu0 %v3233
  %3858 = vmatprep.subr.bf16.mxu0 0
  %3859 = vmatpush1.bf16.msra.mxu0 %v3236
  %3860 = vmatprep.subr.bf16.mxu0 0
  %3861 = vmatpush1.bf16.msra.mxu0 %v3239
  %3862 = vmatprep.subr.bf16.mxu0 0
  %3863 = vmatpush1.bf16.msra.mxu0 %v3242
  %3864 = vmatprep.subr.bf16.mxu0 0
  %3865 = vmatpush1.bf16.msra.mxu0 0
  %3866 = vmatprep.subr.bf16.mxu0 0
  %3867 = vmatpush1.bf16.msra.mxu0 0
  %3868 = vmatprep.subr.bf16.mxu0 0
  %3869 = vmatpush1.bf16.msra.mxu0 0
  %3870 = vmatprep.subr.bf16.mxu0 0
  %3871 = vmatpush1.bf16.msra.mxu0 0
  %3872 = vmatprep.subr.bf16.mxu0 0
  %3873 = vmatpush1.bf16.msra.mxu0 0
  %3874 = vmatprep.subr.bf16.mxu0 0
  %3875 = vmatpush1.bf16.msra.mxu0 0
  %3876 = vmatprep.subr.bf16.mxu0 0
  %3877 = vmatpush1.bf16.msra.mxu0 0
  %3878 = vmatprep.subr.bf16.mxu0 0
  %3879 = vmatpush1.bf16.msra.mxu0 0
  %3880 = vmatprep.mubr.bf16.mxu0 0
  %3881 = vmatmul.mubr.bf16.gmra.mrb[0].mxu0 %v3801
  %v3882 = vpop.f32.mrb[0].mxu0
  %v3883 = vadd.f32 0.0, %v3882
  %v3884 = vpop.f32.mrb[0].mxu0
  %v3885 = vpop.f32.mrb[0].mxu0
  %v3886 = vpop.f32.mrb[0].mxu0
  %3887 = vdwg.mxu0
  %v3888 = vadd.f32 %v3804, %v3842
  %v3889 = vxor.u32 %v3888, 2147483648
  %v3890 = vmul.f32 %v3889, 1.442695
  %v3891 = vpow.pop %v3890
  %v3892 = vadd.f32 %v3891, 1.0
  %v3893 = vrcp.pop %v3892
  %v3894 = vmul.f32 1.0, %v3893
  %v3895 = vadd.f32 %v3805, %v3844
  %v3896 = vxor.u32 %v3895, 2147483648
  %v3897 = vmul.f32 %v3896, 1.442695
  %v3898 = vpow.pop %v3897
  %v3899 = vadd.f32 %v3898, 1.0
  %v3900 = vrcp.pop %v3899
  %v3901 = vmul.f32 1.0, %v3900
  %v3902 = vadd.f32 %v3883, %v3099
  %v3903 = vmul.f32 %v3894, %v3902
  %v3904 = vadd.f32 %v3806, %v3903
  %v3905 = vtanh.pop %v3904
  %v3906 = vsub.f32 %v3800, %v3905
  %v3907 = vmul.f32 %v3901, %v3906
  %v3908 = vadd.f32 %v3905, %v3907
  %v3909 = vpack.c.bf16 %v3908, %v3908
  %v3910 = vld [vmem:[%s2106] sm:$0xff]
  %v3911 = vld [vmem:[%s2106 + $0x8] sm:$0xf]
  %v3912 = vunpack.c.l.bf16 %v3910
  %v3913 = vunpack.c.h.bf16 %v3910
  %v3914 = vunpack.c.l.bf16 %v3911
  %3915 = vmatprep.subr.bf16.mxu0 %v3220
  %3916 = vmatpush1.bf16.msra.mxu0 %v3219
  %3917 = vmatprep.subr.bf16.mxu0 %v3223
  %3918 = vmatpush1.bf16.msra.mxu0 %v3222
  %3919 = vmatprep.subr.bf16.mxu0 %v3226
  %3920 = vmatpush1.bf16.msra.mxu0 %v3225
  %3921 = vmatprep.subr.bf16.mxu0 %v3229
  %3922 = vmatpush1.bf16.msra.mxu0 %v3228
  %3923 = vmatprep.subr.bf16.mxu0 %v3232
  %3924 = vmatpush1.bf16.msra.mxu0 %v3231
  %3925 = vmatprep.subr.bf16.mxu0 %v3235
  %3926 = vmatpush1.bf16.msra.mxu0 %v3234
  %3927 = vmatprep.subr.bf16.mxu0 %v3238
  %3928 = vmatpush1.bf16.msra.mxu0 %v3237
  %3929 = vmatprep.subr.bf16.mxu0 %v3241
  %3930 = vmatpush1.bf16.msra.mxu0 %v3240
  %3931 = vmatprep.subr.bf16.mxu0 0
  %3932 = vmatpush1.bf16.msra.mxu0 0
  %3933 = vmatprep.subr.bf16.mxu0 0
  %3934 = vmatpush1.bf16.msra.mxu0 0
  %3935 = vmatprep.subr.bf16.mxu0 0
  %3936 = vmatpush1.bf16.msra.mxu0 0
  %3937 = vmatprep.subr.bf16.mxu0 0
  %3938 = vmatpush1.bf16.msra.mxu0 0
  %3939 = vmatprep.subr.bf16.mxu0 0
  %3940 = vmatpush1.bf16.msra.mxu0 0
  %3941 = vmatprep.subr.bf16.mxu0 0
  %3942 = vmatpush1.bf16.msra.mxu0 0
  %3943 = vmatprep.subr.bf16.mxu0 0
  %3944 = vmatpush1.bf16.msra.mxu0 0
  %3945 = vmatprep.subr.bf16.mxu0 0
  %3946 = vmatpush1.bf16.msra.mxu0 0
  %3947 = vmatprep.mubr.bf16.mxu0 0
  %3948 = vmatmul.mubr.bf16.gmra.mrb[0].mxu0 %v3909
  %v3949 = vpop.f32.mrb[0].mxu0
  %v3950 = vadd.f32 0.0, %v3949
  %v3951 = vpop.f32.mrb[0].mxu0
  %v3952 = vadd.f32 0.0, %v3951
  %v3953 = vpop.f32.mrb[0].mxu0
  %v3954 = vpop.f32.mrb[0].mxu0
  %3955 = vdwg.mxu0
  %3956 = vmatprep.subr.bf16.mxu0 0
  %3957 = vmatpush1.bf16.msra.mxu0 %v3221
  %3958 = vmatprep.subr.bf16.mxu0 0
  %3959 = vmatpush1.bf16.msra.mxu0 %v3224
  %3960 = vmatprep.subr.bf16.mxu0 0
  %3961 = vmatpush1.bf16.msra.mxu0 %v3227
  %3962 = vmatprep.subr.bf16.mxu0 0
  %3963 = vmatpush1.bf16.msra.mxu0 %v3230
  %3964 = vmatprep.subr.bf16.mxu0 0
  %3965 = vmatpush1.bf16.msra.mxu0 %v3233
  %3966 = vmatprep.subr.bf16.mxu0 0
  %3967 = vmatpush1.bf16.msra.mxu0 %v3236
  %3968 = vmatprep.subr.bf16.mxu0 0
  %3969 = vmatpush1.bf16.msra.mxu0 %v3239
  %3970 = vmatprep.subr.bf16.mxu0 0
  %3971 = vmatpush1.bf16.msra.mxu0 %v3242
  %3972 = vmatprep.subr.bf16.mxu0 0
  %3973 = vmatpush1.bf16.msra.mxu0 0
  %3974 = vmatprep.subr.bf16.mxu0 0
  %3975 = vmatpush1.bf16.msra.mxu0 0
  %3976 = vmatprep.subr.bf16.mxu0 0
  %3977 = vmatpush1.bf16.msra.mxu0 0
  %3978 = vmatprep.subr.bf16.mxu0 0
  %3979 = vmatpush1.bf16.msra.mxu0 0
  %3980 = vmatprep.subr.bf16.mxu0 0
  %3981 = vmatpush1.bf16.msra.mxu0 0
  %3982 = vmatprep.subr.bf16.mxu0 0
  %3983 = vmatpush1.bf16.msra.mxu0 0
  %3984 = vmatprep.subr.bf16.mxu0 0
  %3985 = vmatpush1.bf16.msra.mxu0 0
  %3986 = vmatprep.subr.bf16.mxu0 0
  %3987 = vmatpush1.bf16.msra.mxu0 0
  %3988 = vmatprep.mubr.bf16.mxu0 0
  %3989 = vmatmul.mubr.bf16.gmra.mrb[0].mxu0 %v3909
  %v3990 = vpop.f32.mrb[0].mxu0
  %v3991 = vadd.f32 0.0, %v3990
  %v3992 = vpop.f32.mrb[0].mxu0
  %v3993 = vpop.f32.mrb[0].mxu0
  %v3994 = vpop.f32.mrb[0].mxu0
  %3995 = vdwg.mxu0
  %v3996 = vadd.f32 %v3912, %v3950
  %v3997 = vxor.u32 %v3996, 2147483648
  %v3998 = vmul.f32 %v3997, 1.442695
  %v3999 = vpow.pop %v3998
  %v4000 = vadd.f32 %v3999, 1.0
  %v4001 = vrcp.pop %v4000
  %v4002 = vmul.f32 1.0, %v4001
  %v4003 = vadd.f32 %v3913, %v3952
  %v4004 = vxor.u32 %v4003, 2147483648
  %v4005 = vmul.f32 %v4004, 1.442695
  %v4006 = vpow.pop %v4005
  %v4007 = vadd.f32 %v4006, 1.0
  %v4008 = vrcp.pop %v4007
  %v4009 = vmul.f32 1.0, %v4008
  %v4010 = vadd.f32 %v3991, %v3099
  %v4011 = vmul.f32 %v4002, %v4010
  %v4012 = vadd.f32 %v3914, %v4011
  %v4013 = vtanh.pop %v4012
  %v4014 = vsub.f32 %v3908, %v4013
  %v4015 = vmul.f32 %v4009, %v4014
  %v4016 = vadd.f32 %v4013, %v4015
  %v4017 = vpack.c.bf16 %v4016, %v4016
  %v4018 = vld [vmem:[%s2377] sm:$0xff]
  %v4019 = vld [vmem:[%s2377 + $0x8] sm:$0xf]
  %v4020 = vunpack.c.l.bf16 %v4018
  %v4021 = vunpack.c.h.bf16 %v4018
  %v4022 = vunpack.c.l.bf16 %v4019
  %4023 = vmatprep.subr.bf16.mxu0 %v3220
  %4024 = vmatpush1.bf16.msra.mxu0 %v3219
  %4025 = vmatprep.subr.bf16.mxu0 %v3223
  %4026 = vmatpush1.bf16.msra.mxu0 %v3222
  %4027 = vmatprep.subr.bf16.mxu0 %v3226
  %4028 = vmatpush1.bf16.msra.mxu0 %v3225
  %4029 = vmatprep.subr.bf16.mxu0 %v3229
  %4030 = vmatpush1.bf16.msra.mxu0 %v3228
  %4031 = vmatprep.subr.bf16.mxu0 %v3232
  %4032 = vmatpush1.bf16.msra.mxu0 %v3231
  %4033 = vmatprep.subr.bf16.mxu0 %v3235
  %4034 = vmatpush1.bf16.msra.mxu0 %v3234
  %4035 = vmatprep.subr.bf16.mxu0 %v3238
  %4036 = vmatpush1.bf16.msra.mxu0 %v3237
  %4037 = vmatprep.subr.bf16.mxu0 %v3241
  %4038 = vmatpush1.bf16.msra.mxu0 %v3240
  %4039 = vmatprep.subr.bf16.mxu0 0
  %4040 = vmatpush1.bf16.msra.mxu0 0
  %4041 = vmatprep.subr.bf16.mxu0 0
  %4042 = vmatpush1.bf16.msra.mxu0 0
  %4043 = vmatprep.subr.bf16.mxu0 0
  %4044 = vmatpush1.bf16.msra.mxu0 0
  %4045 = vmatprep.subr.bf16.mxu0 0
  %4046 = vmatpush1.bf16.msra.mxu0 0
  %4047 = vmatprep.subr.bf16.mxu0 0
  %4048 = vmatpush1.bf16.msra.mxu0 0
  %4049 = vmatprep.subr.bf16.mxu0 0
  %4050 = vmatpush1.bf16.msra.mxu0 0
  %4051 = vmatprep.subr.bf16.mxu0 0
  %4052 = vmatpush1.bf16.msra.mxu0 0
  %4053 = vmatprep.subr.bf16.mxu0 0
  %4054 = vmatpush1.bf16.msra.mxu0 0
  %4055 = vmatprep.mubr.bf16.mxu0 0
  %4056 = vmatmul.mubr.bf16.gmra.mrb[0].mxu0 %v4017
  %v4057 = vpop.f32.mrb[0].mxu0
  %v4058 = vadd.f32 0.0, %v4057
  %v4059 = vpop.f32.mrb[0].mxu0
  %v4060 = vadd.f32 0.0, %v4059
  %v4061 = vpop.f32.mrb[0].mxu0
  %v4062 = vpop.f32.mrb[0].mxu0
  %4063 = vdwg.mxu0
  %4064 = vmatprep.subr.bf16.mxu0 0
  %4065 = vmatpush1.bf16.msra.mxu0 %v3221
  %4066 = vmatprep.subr.bf16.mxu0 0
  %4067 = vmatpush1.bf16.msra.mxu0 %v3224
  %4068 = vmatprep.subr.bf16.mxu0 0
  %4069 = vmatpush1.bf16.msra.mxu0 %v3227
  %4070 = vmatprep.subr.bf16.mxu0 0
  %4071 = vmatpush1.bf16.msra.mxu0 %v3230
  %4072 = vmatprep.subr.bf16.mxu0 0
  %4073 = vmatpush1.bf16.msra.mxu0 %v3233
  %4074 = vmatprep.subr.bf16.mxu0 0
  %4075 = vmatpush1.bf16.msra.mxu0 %v3236
  %4076 = vmatprep.subr.bf16.mxu0 0
  %4077 = vmatpush1.bf16.msra.mxu0 %v3239
  %4078 = vmatprep.subr.bf16.mxu0 0
  %4079 = vmatpush1.bf16.msra.mxu0 %v3242
  %4080 = vmatprep.subr.bf16.mxu0 0
  %4081 = vmatpush1.bf16.msra.mxu0 0
  %4082 = vmatprep.subr.bf16.mxu0 0
  %4083 = vmatpush1.bf16.msra.mxu0 0
  %4084 = vmatprep.subr.bf16.mxu0 0
  %4085 = vmatpush1.bf16.msra.mxu0 0
  %4086 = vmatprep.subr.bf16.mxu0 0
  %4087 = vmatpush1.bf16.msra.mxu0 0
  %4088 = vmatprep.subr.bf16.mxu0 0
  %4089 = vmatpush1.bf16.msra.mxu0 0
  %4090 = vmatprep.subr.bf16.mxu0 0
  %4091 = vmatpush1.bf16.msra.mxu0 0
  %4092 = vmatprep.subr.bf16.mxu0 0
  %4093 = vmatpush1.bf16.msra.mxu0 0
  %4094 = vmatprep.subr.bf16.mxu0 0
  %4095 = vmatpush1.bf16.msra.mxu0 0
  %4096 = vmatprep.mubr.bf16.mxu0 0
  %4097 = vmatmul.mubr.bf16.gmra.mrb[0].mxu0 %v4017
  %v4098 = vpop.f32.mrb[0].mxu0
  %v4099 = vadd.f32 0.0, %v4098
  %v4100 = vpop.f32.mrb[0].mxu0
  %v4101 = vpop.f32.mrb[0].mxu0
  %v4102 = vpop.f32.mrb[0].mxu0
  %4103 = vdwg.mxu0
  %v4104 = vadd.f32 %v4020, %v4058
  %v4105 = vxor.u32 %v4104, 2147483648
  %v4106 = vmul.f32 %v4105, 1.442695
  %v4107 = vpow.pop %v4106
  %v4108 = vadd.f32 %v4107, 1.0
  %v4109 = vrcp.pop %v4108
  %v4110 = vmul.f32 1.0, %v4109
  %v4111 = vadd.f32 %v4021, %v4060
  %v4112 = vxor.u32 %v4111, 2147483648
  %v4113 = vmul.f32 %v4112, 1.442695
  %v4114 = vpow.pop %v4113
  %v4115 = vadd.f32 %v4114, 1.0
  %v4116 = vrcp.pop %v4115
  %v4117 = vmul.f32 1.0, %v4116
  %v4118 = vadd.f32 %v4099, %v3099
  %v4119 = vmul.f32 %v4110, %v4118
  %v4120 = vadd.f32 %v4022, %v4119
  %v4121 = vtanh.pop %v4120
  %v4122 = vsub.f32 %v4016, %v4121
  %v4123 = vmul.f32 %v4117, %v4122
  %v4124 = vadd.f32 %v4121, %v4123
  %v4125 = vpack.c.bf16 %v4124, %v4124
  %s4126 = scalar_lea.vmem %s9, 8
  %4127 = vst [vmem:[%s4126] sm:$0xff] %v4124
  %v4128 = vld [vmem:[%s6] sm:$0xf]
  %v4129 = vld [vmem:[%s6 + $0x4] sm:$0xf]
  %v4130 = vld [vmem:[%s6 + $0x8] sm:$0xf]
  %v4131 = vld [vmem:[%s6 + $0xc] sm:$0xf]
  %v4132 = vld [vmem:[%s6 + $0x10] sm:$0xf]
  %v4133 = vld [vmem:[%s6 + $0x14] sm:$0xf]
  %v4134 = vld [vmem:[%s6 + $0x18] sm:$0xf]
  %v4135 = vld [vmem:[%s6 + $0x1c] sm:$0xf]
  %v4136 = vld [vmem:[%s6 + $0x20] sm:$0xf]
  %v4137 = vld [vmem:[%s6 + $0x24] sm:$0xf]
  %v4138 = vld [vmem:[%s6 + $0x28] sm:$0xf]
  %v4139 = vld [vmem:[%s6 + $0x2c] sm:$0xf]
  %v4140 = vld [vmem:[%s6 + $0x30] sm:$0xf]
  %v4141 = vld [vmem:[%s6 + $0x34] sm:$0xf]
  %v4142 = vld [vmem:[%s6 + $0x38] sm:$0xf]
  %v4143 = vld [vmem:[%s6 + $0x3c] sm:$0xf]
  %v4144 = vld [vmem:[%s7] sm:$0x1]
  %v4146 = vlaneseq
  %v4147 = vshrl.u32 %v4146, 7
  %v4148 = vsub.s32 0, %v4147
  %v4149 = vrot.slane %v4144, %v4148
  %v4167 = vunpack.c.l.b16 %v4128
  %v4168 = vunpack.c.l.b16 %v4129
  %v4169 = vunpack.c.l.b16 %v4130
  %v4170 = vunpack.c.l.b16 %v4131
  %v4171 = vunpack.c.l.b16 %v4132
  %v4172 = vunpack.c.l.b16 %v4133
  %v4173 = vunpack.c.l.b16 %v4134
  %v4174 = vunpack.c.l.b16 %v4135
  %v4175 = vunpack.c.l.b16 %v4136
  %v4176 = vunpack.c.l.b16 %v4137
  %v4177 = vunpack.c.l.b16 %v4138
  %v4178 = vunpack.c.l.b16 %v4139
  %v4179 = vunpack.c.l.b16 %v4140
  %v4180 = vunpack.c.l.b16 %v4141
  %v4181 = vunpack.c.l.b16 %v4142
  %v4182 = vunpack.c.l.b16 %v4143
  %v4183 = vpack.c.b16 %v4168, %v4167
  %v4184 = vpack.c.b16 %v4170, %v4169
  %v4185 = vpack.c.b16 %v4172, %v4171
  %v4186 = vpack.c.b16 %v4174, %v4173
  %v4187 = vpack.c.b16 %v4176, %v4175
  %v4188 = vpack.c.b16 %v4178, %v4177
  %v4189 = vpack.c.b16 %v4180, %v4179
  %v4190 = vpack.c.b16 %v4182, %v4181
  %4199 = vmatprep.subr.bf16.mxu0 0
  %4200 = vmatpush1.bf16.msra.mxu0 %v4183
  %4201 = vmatprep.subr.bf16.mxu0 0
  %4202 = vmatpush1.bf16.msra.mxu0 %v4184
  %4203 = vmatprep.subr.bf16.mxu0 0
  %4204 = vmatpush1.bf16.msra.mxu0 %v4185
  %4205 = vmatprep.subr.bf16.mxu0 0
  %4206 = vmatpush1.bf16.msra.mxu0 %v4186
  %4207 = vmatprep.subr.bf16.mxu0 0
  %4208 = vmatpush1.bf16.msra.mxu0 %v4187
  %4209 = vmatprep.subr.bf16.mxu0 0
  %4210 = vmatpush1.bf16.msra.mxu0 %v4188
  %4211 = vmatprep.subr.bf16.mxu0 0
  %4212 = vmatpush1.bf16.msra.mxu0 %v4189
  %4213 = vmatprep.subr.bf16.mxu0 0
  %4214 = vmatpush1.bf16.msra.mxu0 %v4190
  %4215 = vmatprep.subr.bf16.mxu0 0
  %4216 = vmatpush1.bf16.msra.mxu0 0
  %4217 = vmatprep.subr.bf16.mxu0 0
  %4218 = vmatpush1.bf16.msra.mxu0 0
  %4219 = vmatprep.subr.bf16.mxu0 0
  %4220 = vmatpush1.bf16.msra.mxu0 0
  %4221 = vmatprep.subr.bf16.mxu0 0
  %4222 = vmatpush1.bf16.msra.mxu0 0
  %4223 = vmatprep.subr.bf16.mxu0 0
  %4224 = vmatpush1.bf16.msra.mxu0 0
  %4225 = vmatprep.subr.bf16.mxu0 0
  %4226 = vmatpush1.bf16.msra.mxu0 0
  %4227 = vmatprep.subr.bf16.mxu0 0
  %4228 = vmatpush1.bf16.msra.mxu0 0
  %4229 = vmatprep.subr.bf16.mxu0 0
  %4230 = vmatpush1.bf16.msra.mxu0 0
  %4231 = vmatprep.mubr.bf16.mxu0 0
  %4232 = vmatmul.mubr.bf16.gmra.mrb[0].mxu0 %v4125
  %v4233 = vpop.f32.mrb[0].mxu0
  %v4234 = vadd.f32 %v4149, %v4233
  %v4235 = vpop.f32.mrb[0].mxu0
  %v4236 = vpop.f32.mrb[0].mxu0
  %v4237 = vpop.f32.mrb[0].mxu0
  %4238 = vdwg.mxu0
  %4239 = vst [vmem:[%s8] sm:$0xff] %v4234
  // Predicated region
  $region34: #{gru_forward.1} parent=0 // pred_check
    _
  $region35: #{gru_forward.1} parent=0 // pred_check_branch
    %4241 = sbr.rel (0) target = $region37
  $region36: #{gru_forward.1} parent=0 // pred_region
    _
  $region37: #{gru_forward.1} parent=0 // pred_fallthru
    _
  // Predicated region
  $region38: #{gru_forward.1} parent=0 // pred_check
    _
  $region39: #{gru_forward.1} parent=0 // pred_check_branch
    %4243 = sbr.rel (0) target = $region41
  $region40: #{gru_forward.1} parent=0 // pred_region
    _
  $region41: #{gru_forward.1} parent=0 // pred_fallthru
    _
  // Predicated region
  $region42: #{gru_forward.1} parent=0 // pred_check
    _
  $region43: #{gru_forward.1} parent=0 // pred_check_branch
    %4245 = sbr.rel (0) target = $region45
  $region44: #{gru_forward.1} parent=0 // pred_region
    _
  $region45: #{gru_forward.1} parent=0 // pred_fallthru
    _
  // Predicated region
  $region46: #{gru_forward.1} parent=0 // pred_check
    _
  $region47: #{gru_forward.1} parent=0 // pred_check_branch
    %4247 = sbr.rel (0) target = $region49
  $region48: #{gru_forward.1} parent=0 // pred_region
    _
  $region49: #{gru_forward.1} parent=0 // pred_fallthru
    _

</llo_original>
